<compile_context>
chip_gen: v7x
topology: tpu7x:2x2x1
jax: 0.10.0
libtpu: 0.0.40
codegen_flags: <defaults>
</compile_context>

<pallas_src>
import functools

import jax
import jax.numpy as jnp
import numpy as np
from jax import lax
from jax.experimental import pallas as pl
from jax.experimental.pallas import tpu as pltpu


def _histpool_kernel(x_ref, coeff_ref, out_ref, *, num_bins, num_rows, row_len):
    # x_ref:     VMEM (num_rows, row_len) f32  -- dense sublane/lane slab
    # coeff_ref: SMEM (num_bins,) f32
    # out_ref:   VMEM (1, num_rows) f32        -- lane-major output
    R, L, NB = num_rows, row_len, num_bins
    F = R * L

    x = x_ref[...]                                   # (R, L)
    x_min = jnp.min(x)
    x_max = jnp.max(x)
    span = x_max - x_min
    x_tanh = jnp.tanh(x)                             # (R, L)  EUP, hoisted

    # ---------------- bin-invariant prefix structure (hoisted) ----------------
    # Within-row inclusive prefix on the MXU:
    #   p_inc[r, l] = sum_{l' <= l} tanh[r, l'] = (x_tanh @ triu_L)[r, l]
    li = lax.broadcasted_iota(jnp.int32, (L, L), 0)
    lj = lax.broadcasted_iota(jnp.int32, (L, L), 1)
    triu_L = (li <= lj).astype(jnp.float32)          # (L, L)
    # TODO(synk): on v5e (4x128x128 MXU) two explicit 128-wide column blocks
    # pack marginally better; the single matmul is correct everywhere.
    p_inc = jnp.dot(x_tanh, triu_L, preferred_element_type=jnp.float32)   # (R, L)

    # Cross-row exclusive prefix of the row totals, broadcast over lanes:
    #   rowpref[r, :] = sum_{r' < r} row_tot[r']
    ri = lax.broadcasted_iota(jnp.int32, (R, R), 0)  # output row r
    rj = lax.broadcasted_iota(jnp.int32, (R, R), 1)  # source row r'
    tri_strict = (rj < ri).astype(jnp.float32)       # (R, R): r' <  r
    tri_incl = (rj <= ri).astype(jnp.float32)        # (R, R): r' <= r
    eye_R = (ri == rj).astype(jnp.float32)           # (R, R) for the final store
    row_tot_b = jnp.broadcast_to(p_inc[:, L - 1:L], (R, L))               # (R, L)
    rowpref = jnp.dot(tri_strict, row_tot_b, preferred_element_type=jnp.float32)

    # g_exc[r, l] = G(r*L + l) = sum of tanh_flat over flat positions < r*L + l
    g_exc = rowpref + p_inc - x_tanh                  # (R, L)
    total_sum = jnp.sum(x_tanh)                       # == G(F)

    # Bin-invariant index helpers (int32 positions).
    row_start = rj * L                                # (R, R): start of row r'
    lane_iota = lax.broadcasted_iota(jnp.int32, (R, L), 1)                # (R, L)

    nb = jnp.float32(NB)

    def g_at(off):
        """Evaluate G at per-row flat offsets off: (R, 1) int32 in [0, F]."""
        # Source row q holds flat positions [q*L, (q+1)*L).
        oh_row_b = (row_start <= off) & (off < row_start + L)            # (R, R)
        oh_row = oh_row_b.astype(jnp.float32)
        q_l = jnp.sum(jnp.where(oh_row_b, row_start, 0), axis=1,
                      keepdims=True)                                     # (R, 1) = q*L
        s = off - q_l                                                    # (R, 1) lane idx
        # Row-select on the MXU, then a lane one-hot + reduce (VPU/XLU).
        rowsel = jnp.dot(oh_row, g_exc, preferred_element_type=jnp.float32)  # (R, L)
        oh_lane = (lane_iota == s).astype(jnp.float32)                   # (R, L)
        gv = jnp.sum(rowsel * oh_lane, axis=1, keepdims=True)            # (R, 1)
        # off == F (every element lands in one bin) matches no (row, lane).
        return jnp.where(off >= F, total_sum, gv)

    def bin_body(b, z):
        bf = b.astype(jnp.float32)
        # TODO(synk): torch builds tau with float64 np.linspace; edges here are
        # float32, so exact-boundary ties can differ (measure zero).
        lo = x_min + span * (bf / nb)
        hi = jnp.where(b == NB - 1, jnp.float32(jnp.inf),
                       x_min + span * ((bf + 1.0) / nb))
        in_bin = ((x >= lo) & (x < hi)).astype(jnp.float32)              # (R, L)

        # masked_scatter_ fill offsets at the row boundaries: inclusive row
        # prefix of the per-row in-bin counts via an f32 MXU matmul (exact:
        # 0/1 operands, f32 accumulate), then cast to int32 positions.
        counts = jnp.sum(in_bin, axis=1, keepdims=True)                  # (R, 1)
        colpref = jnp.dot(tri_incl, in_bin, preferred_element_type=jnp.float32)
        off_hi = jnp.sum(colpref, axis=1, keepdims=True).astype(jnp.int32)   # (R, 1)
        off_lo = off_hi - counts.astype(jnp.int32)                       # (R, 1)

        hist_b = g_at(off_hi) - g_at(off_lo)                             # (R, 1)
        return z + coeff_ref[b] * hist_b

    z = lax.fori_loop(0, NB, bin_body, jnp.zeros((R, 1), jnp.float32),
                      unroll=True)

    # Lane-major store: out[0, r] = z[r] via an eye-masked sublane reduce
    # (no in-kernel transpose/reshape needed).
    out_ref[...] = jnp.sum(jnp.broadcast_to(z, (R, R)) * eye_R, axis=0,
                           keepdims=True)


def hist_pool(x, coeff, num_bins):
    """JAX/Pallas equivalent of HistPool.forward for NCHW float32 input."""
    N, C, H, W = x.shape
    num_rows = N * C
    row_len = H * W

    # Dense 2D slab: N*C rows on sublanes, H*W on lanes.  Row-major order of
    # the torch view(-1, C, H*W) is preserved, so the flat scatter order is
    # identical to torch's.
    x2 = x.astype(jnp.float32).reshape(num_rows, row_len)
    coeff = coeff.astype(jnp.float32)

    kernel = functools.partial(_histpool_kernel, num_bins=num_bins,
                               num_rows=num_rows, row_len=row_len)

    # Whole-array VMEM blocks (no grid): total VMEM use is ~1.5 MiB at these
    # sizes, well under the default scoped limit on every TPU generation.
    z = pl.pallas_call(
        kernel,
        out_shape=jax.ShapeDtypeStruct((1, num_rows), jnp.float32),
        in_specs=[
            pl.BlockSpec(memory_space=pltpu.MemorySpace.VMEM),   # x
            pl.BlockSpec(memory_space=pltpu.MemorySpace.SMEM),   # coeff
        ],
        out_specs=pl.BlockSpec(memory_space=pltpu.MemorySpace.VMEM),
    )(x2, coeff)

    return z.reshape(N, C)


def hist_pool_reference(x, coeff, num_bins):
    """Pure-JAX reference reproducing torch masked_scatter_ semantics."""
    N, C, H, W = x.shape
    R, L = N * C, H * W
    xv = x.astype(jnp.float32).reshape(R, L)
    x_min = jnp.min(xv)
    x_max = jnp.max(xv)
    span = x_max - x_min
    x_tanh_flat = jnp.tanh(xv).reshape(-1)
    nb = jnp.float32(num_bins)
    z = jnp.zeros((R,), jnp.float32)
    for b in range(num_bins):
        bf = jnp.asarray(b, dtype=jnp.float32)
        lo = x_min + span * (bf / nb)
        if b < num_bins - 1:
            hi = x_min + span * ((bf + 1.0) / nb)
            mask = (xv >= lo) & (xv < hi)
        else:
            mask = xv >= lo
        mflat = mask.reshape(-1)
        rank = jnp.cumsum(mflat.astype(jnp.int32)) - 1
        scattered = jnp.where(mflat, x_tanh_flat[rank], 0.0).reshape(R, L)
        z = z + coeff[b] * jnp.sum(scattered, axis=1)
    return z.reshape(N, C)


if __name__ == "__main__":
    num_bins = 8
    key = jax.random.PRNGKey(0)
    kx, kc = jax.random.split(key)

    x = jax.random.normal(kx, (2, 4, 16, 16), dtype=jnp.float32)
    # deterministic stand-in for torch.rand(num_bins)
    coeff = jax.random.uniform(kc, (num_bins,), dtype=jnp.float32)

    z = jax.block_until_ready(hist_pool(x, coeff, num_bins))
    z_ref = jax.block_until_ready(hist_pool_reference(x, coeff, num_bins))
    np.testing.assert_allclose(np.asarray(z), np.asarray(z_ref),
                               rtol=1e-3, atol=2e-3)

    print("KERNEL_OK")
</pallas_src>

<mosaic_0001>
module attributes {stable_mosaic.version = 11 : i64} {
  func.func @_histpool_kernel(%arg0: memref<8x256xf32, #tpu.memory_space<vmem>>, %arg1: memref<8xf32, #tpu.memory_space<smem>>, %arg2: memref<1x8xf32, #tpu.memory_space<vmem>>) attributes {dimension_semantics = [], scalar_prefetch = 0 : i64, scratch_operands = 0 : i64, tpu.core_type = #tpu.core_type<tc>} {
    %c0 = arith.constant 0 : index
    %c0_0 = arith.constant 0 : index
    %0 = vector.load %arg0[%c0, %c0_0] : memref<8x256xf32, #tpu.memory_space<vmem>>, vector<8x256xf32>
    %1 = vector.shape_cast %0 : vector<8x256xf32> to vector<1x8x256xf32>
    %cst = arith.constant dense<0x7F800000> : vector<1xf32>
    %2 = vector.multi_reduction <minimumf>, %1, %cst [1, 2] : vector<1x8x256xf32> to vector<1xf32>
    %3 = vector.shape_cast %2 : vector<1xf32> to vector<1x1x1xf32>
    %4 = vector.extract %3[0, 0, 0] : f32 from vector<1x1x1xf32>
    %5 = vector.shape_cast %0 : vector<8x256xf32> to vector<1x8x256xf32>
    %cst_1 = arith.constant dense<0xFF800000> : vector<1xf32>
    %6 = vector.multi_reduction <maximumf>, %5, %cst_1 [1, 2] : vector<1x8x256xf32> to vector<1xf32>
    %7 = vector.shape_cast %6 : vector<1xf32> to vector<1x1x1xf32>
    %8 = vector.extract %7[0, 0, 0] : f32 from vector<1x1x1xf32>
    %9 = arith.subf %8, %4 : f32
    %10 = math.tanh %0 : vector<8x256xf32>
    %11 = tpu.iota {dimensions = array<i32: 0>} : vector<256x256xi32>
    %12 = tpu.iota {dimensions = array<i32: 1>} : vector<256x256xi32>
    %13 = arith.cmpi sle, %11, %12 : vector<256x256xi32>
    %14 = arith.extui %13 : vector<256x256xi1> to vector<256x256xi32>
    %15 = arith.sitofp %14 : vector<256x256xi32> to vector<256x256xf32>
    %cst_2 = arith.constant dense<0.000000e+00> : vector<8x256xf32>
    %16 = tpu.matmul %10, %15, %cst_2 {dimension_numbers = #tpu.dot_dimension_numbers<[1], [0], [0], [1], [0, 0, 1, 1], [], []>} : vector<8x256xf32>, vector<256x256xf32>, vector<8x256xf32> -> vector<8x256xf32>
    %17 = tpu.iota {dimensions = array<i32: 0>} : vector<8x8xi32>
    %18 = tpu.iota {dimensions = array<i32: 1>} : vector<8x8xi32>
    %19 = arith.cmpi slt, %18, %17 : vector<8x8xi32>
    %20 = arith.extui %19 : vector<8x8xi1> to vector<8x8xi32>
    %21 = arith.sitofp %20 : vector<8x8xi32> to vector<8x8xf32>
    %22 = arith.cmpi sle, %18, %17 : vector<8x8xi32>
    %23 = arith.extui %22 : vector<8x8xi1> to vector<8x8xi32>
    %24 = arith.sitofp %23 : vector<8x8xi32> to vector<8x8xf32>
    %25 = arith.cmpi eq, %17, %18 : vector<8x8xi32>
    %26 = arith.extui %25 : vector<8x8xi1> to vector<8x8xi32>
    %27 = arith.sitofp %26 : vector<8x8xi32> to vector<8x8xf32>
    %28 = vector.extract_strided_slice %16 {offsets = [0, 255], sizes = [8, 1], strides = [1, 1]} : vector<8x256xf32> to vector<8x1xf32>
    %29 = vector.shape_cast %28 : vector<8x1xf32> to vector<8x1xf32>
    %30 = vector.broadcast %29 : vector<8x1xf32> to vector<8x256xf32>
    %cst_3 = arith.constant dense<0.000000e+00> : vector<8x256xf32>
    %31 = tpu.matmul %21, %30, %cst_3 {dimension_numbers = #tpu.dot_dimension_numbers<[1], [0], [0], [1], [0, 0, 1, 1], [], []>} : vector<8x8xf32>, vector<8x256xf32>, vector<8x256xf32> -> vector<8x256xf32>
    %32 = arith.addf %31, %16 : vector<8x256xf32>
    %33 = arith.subf %32, %10 : vector<8x256xf32>
    %34 = vector.shape_cast %10 : vector<8x256xf32> to vector<1x8x256xf32>
    %cst_4 = arith.constant dense<0.000000e+00> : vector<1xf32>
    %35 = vector.multi_reduction <add>, %34, %cst_4 [1, 2] : vector<1x8x256xf32> to vector<1xf32>
    %36 = vector.shape_cast %35 : vector<1xf32> to vector<1x1x1xf32>
    %37 = vector.extract %36[0, 0, 0] : f32 from vector<1x1x1xf32>
    %c256_i32 = arith.constant 256 : i32
    %38 = vector.broadcast %c256_i32 : i32 to vector<8x8xi32>
    %39 = arith.muli %18, %38 : vector<8x8xi32>
    %40 = tpu.iota {dimensions = array<i32: 1>} : vector<8x256xi32>
    %cst_5 = arith.constant 0.000000e+00 : f32
    %41 = vector.broadcast %cst_5 : f32 to vector<8x1xf32>
    %cst_6 = arith.constant 8.000000e+00 : f32
    %c0_i32 = arith.constant 0 : i32
    %42 = arith.sitofp %c0_i32 : i32 to f32
    %43 = arith.divf %42, %cst_6 : f32
    %44 = arith.mulf %9, %43 : f32
    %45 = arith.addf %4, %44 : f32
    %c7_i32 = arith.constant 7 : i32
    %46 = arith.cmpi eq, %c0_i32, %c7_i32 : i32
    %cst_7 = arith.constant 1.000000e+00 : f32
    %47 = arith.addf %42, %cst_7 : f32
    %48 = arith.divf %47, %cst_6 : f32
    %49 = arith.mulf %9, %48 : f32
    %50 = arith.addf %4, %49 : f32
    %cst_8 = arith.constant 0x7F800000 : f32
    %51 = arith.select %46, %cst_8, %50 : f32
    %52 = vector.broadcast %45 : f32 to vector<8x256xf32>
    %53 = arith.cmpf oge, %0, %52 : vector<8x256xf32>
    %54 = vector.broadcast %51 : f32 to vector<8x256xf32>
    %55 = arith.cmpf olt, %0, %54 : vector<8x256xf32>
    %56 = arith.andi %53, %55 : vector<8x256xi1>
    %57 = arith.extui %56 : vector<8x256xi1> to vector<8x256xi32>
    %58 = arith.sitofp %57 : vector<8x256xi32> to vector<8x256xf32>
    %cst_9 = arith.constant dense<0.000000e+00> : vector<8xf32>
    %59 = vector.multi_reduction <add>, %58, %cst_9 [1] : vector<8x256xf32> to vector<8xf32>
    %60 = vector.shape_cast %59 : vector<8xf32> to vector<8x1xf32>
    %cst_10 = arith.constant dense<0.000000e+00> : vector<8x256xf32>
    %61 = tpu.matmul %24, %58, %cst_10 {dimension_numbers = #tpu.dot_dimension_numbers<[1], [0], [0], [1], [0, 0, 1, 1], [], []>} : vector<8x8xf32>, vector<8x256xf32>, vector<8x256xf32> -> vector<8x256xf32>
    %cst_11 = arith.constant dense<0.000000e+00> : vector<8xf32>
    %62 = vector.multi_reduction <add>, %61, %cst_11 [1] : vector<8x256xf32> to vector<8xf32>
    %63 = vector.shape_cast %62 : vector<8xf32> to vector<8x1xf32>
    %64 = arith.fptosi %63 : vector<8x1xf32> to vector<8x1xi32>
    %65 = arith.fptosi %60 : vector<8x1xf32> to vector<8x1xi32>
    %66 = arith.subi %64, %65 : vector<8x1xi32>
    %67 = vector.broadcast %64 : vector<8x1xi32> to vector<8x8xi32>
    %68 = arith.cmpi sle, %39, %67 : vector<8x8xi32>
    %c256_i32_12 = arith.constant 256 : i32
    %69 = vector.broadcast %c256_i32_12 : i32 to vector<8x8xi32>
    %70 = arith.addi %39, %69 : vector<8x8xi32>
    %71 = vector.broadcast %64 : vector<8x1xi32> to vector<8x8xi32>
    %72 = arith.cmpi slt, %71, %70 : vector<8x8xi32>
    %73 = arith.andi %68, %72 : vector<8x8xi1>
    %74 = arith.extui %73 : vector<8x8xi1> to vector<8x8xi32>
    %75 = arith.sitofp %74 : vector<8x8xi32> to vector<8x8xf32>
    %c0_i32_13 = arith.constant 0 : i32
    %76 = vector.broadcast %c0_i32_13 : i32 to vector<8x8xi32>
    %77 = arith.select %73, %39, %76 : vector<8x8xi1>, vector<8x8xi32>
    %cst_14 = arith.constant dense<0> : vector<8xi32>
    %78 = vector.multi_reduction <add>, %77, %cst_14 [1] : vector<8x8xi32> to vector<8xi32>
    %79 = vector.shape_cast %78 : vector<8xi32> to vector<8x1xi32>
    %80 = arith.subi %64, %79 : vector<8x1xi32>
    %cst_15 = arith.constant dense<0.000000e+00> : vector<8x256xf32>
    %81 = tpu.matmul %75, %33, %cst_15 {dimension_numbers = #tpu.dot_dimension_numbers<[1], [0], [0], [1], [0, 0, 1, 1], [], []>} : vector<8x8xf32>, vector<8x256xf32>, vector<8x256xf32> -> vector<8x256xf32>
    %82 = vector.broadcast %80 : vector<8x1xi32> to vector<8x256xi32>
    %83 = arith.cmpi eq, %40, %82 : vector<8x256xi32>
    %84 = arith.extui %83 : vector<8x256xi1> to vector<8x256xi32>
    %85 = arith.sitofp %84 : vector<8x256xi32> to vector<8x256xf32>
    %86 = arith.mulf %81, %85 : vector<8x256xf32>
    %cst_16 = arith.constant dense<0.000000e+00> : vector<8xf32>
    %87 = vector.multi_reduction <add>, %86, %cst_16 [1] : vector<8x256xf32> to vector<8xf32>
    %88 = vector.shape_cast %87 : vector<8xf32> to vector<8x1xf32>
    %c2048_i32 = arith.constant 2048 : i32
    %89 = vector.broadcast %c2048_i32 : i32 to vector<8x1xi32>
    %90 = arith.cmpi sge, %64, %89 : vector<8x1xi32>
    %91 = vector.broadcast %37 : f32 to vector<8x1xf32>
    %92 = arith.select %90, %91, %88 : vector<8x1xi1>, vector<8x1xf32>
    %93 = vector.broadcast %66 : vector<8x1xi32> to vector<8x8xi32>
    %94 = arith.cmpi sle, %39, %93 : vector<8x8xi32>
    %c256_i32_17 = arith.constant 256 : i32
    %95 = vector.broadcast %c256_i32_17 : i32 to vector<8x8xi32>
    %96 = arith.addi %39, %95 : vector<8x8xi32>
    %97 = vector.broadcast %66 : vector<8x1xi32> to vector<8x8xi32>
    %98 = arith.cmpi slt, %97, %96 : vector<8x8xi32>
    %99 = arith.andi %94, %98 : vector<8x8xi1>
    %100 = arith.extui %99 : vector<8x8xi1> to vector<8x8xi32>
    %101 = arith.sitofp %100 : vector<8x8xi32> to vector<8x8xf32>
    %c0_i32_18 = arith.constant 0 : i32
    %102 = vector.broadcast %c0_i32_18 : i32 to vector<8x8xi32>
    %103 = arith.select %99, %39, %102 : vector<8x8xi1>, vector<8x8xi32>
    %cst_19 = arith.constant dense<0> : vector<8xi32>
    %104 = vector.multi_reduction <add>, %103, %cst_19 [1] : vector<8x8xi32> to vector<8xi32>
    %105 = vector.shape_cast %104 : vector<8xi32> to vector<8x1xi32>
    %106 = arith.subi %66, %105 : vector<8x1xi32>
    %cst_20 = arith.constant dense<0.000000e+00> : vector<8x256xf32>
    %107 = tpu.matmul %101, %33, %cst_20 {dimension_numbers = #tpu.dot_dimension_numbers<[1], [0], [0], [1], [0, 0, 1, 1], [], []>} : vector<8x8xf32>, vector<8x256xf32>, vector<8x256xf32> -> vector<8x256xf32>
    %108 = vector.broadcast %106 : vector<8x1xi32> to vector<8x256xi32>
    %109 = arith.cmpi eq, %40, %108 : vector<8x256xi32>
    %110 = arith.extui %109 : vector<8x256xi1> to vector<8x256xi32>
    %111 = arith.sitofp %110 : vector<8x256xi32> to vector<8x256xf32>
    %112 = arith.mulf %107, %111 : vector<8x256xf32>
    %cst_21 = arith.constant dense<0.000000e+00> : vector<8xf32>
    %113 = vector.multi_reduction <add>, %112, %cst_21 [1] : vector<8x256xf32> to vector<8xf32>
    %114 = vector.shape_cast %113 : vector<8xf32> to vector<8x1xf32>
    %c2048_i32_22 = arith.constant 2048 : i32
    %115 = vector.broadcast %c2048_i32_22 : i32 to vector<8x1xi32>
    %116 = arith.cmpi sge, %66, %115 : vector<8x1xi32>
    %117 = vector.broadcast %37 : f32 to vector<8x1xf32>
    %118 = arith.select %116, %117, %114 : vector<8x1xi1>, vector<8x1xf32>
    %119 = arith.subf %92, %118 : vector<8x1xf32>
    %120 = arith.index_cast %c0_i32 : i32 to index
    %121 = memref.load %arg1[%120] : memref<8xf32, #tpu.memory_space<smem>>
    %122 = vector.broadcast %121 : f32 to vector<8x1xf32>
    %123 = arith.mulf %122, %119 : vector<8x1xf32>
    %124 = arith.addf %41, %123 : vector<8x1xf32>
    %c1_i32 = arith.constant 1 : i32
    %125 = arith.sitofp %c1_i32 : i32 to f32
    %126 = arith.divf %125, %cst_6 : f32
    %127 = arith.mulf %9, %126 : f32
    %128 = arith.addf %4, %127 : f32
    %c7_i32_23 = arith.constant 7 : i32
    %129 = arith.cmpi eq, %c1_i32, %c7_i32_23 : i32
    %cst_24 = arith.constant 1.000000e+00 : f32
    %130 = arith.addf %125, %cst_24 : f32
    %131 = arith.divf %130, %cst_6 : f32
    %132 = arith.mulf %9, %131 : f32
    %133 = arith.addf %4, %132 : f32
    %cst_25 = arith.constant 0x7F800000 : f32
    %134 = arith.select %129, %cst_25, %133 : f32
    %135 = vector.broadcast %128 : f32 to vector<8x256xf32>
    %136 = arith.cmpf oge, %0, %135 : vector<8x256xf32>
    %137 = vector.broadcast %134 : f32 to vector<8x256xf32>
    %138 = arith.cmpf olt, %0, %137 : vector<8x256xf32>
    %139 = arith.andi %136, %138 : vector<8x256xi1>
    %140 = arith.extui %139 : vector<8x256xi1> to vector<8x256xi32>
    %141 = arith.sitofp %140 : vector<8x256xi32> to vector<8x256xf32>
    %cst_26 = arith.constant dense<0.000000e+00> : vector<8xf32>
    %142 = vector.multi_reduction <add>, %141, %cst_26 [1] : vector<8x256xf32> to vector<8xf32>
    %143 = vector.shape_cast %142 : vector<8xf32> to vector<8x1xf32>
    %cst_27 = arith.constant dense<0.000000e+00> : vector<8x256xf32>
    %144 = tpu.matmul %24, %141, %cst_27 {dimension_numbers = #tpu.dot_dimension_numbers<[1], [0], [0], [1], [0, 0, 1, 1], [], []>} : vector<8x8xf32>, vector<8x256xf32>, vector<8x256xf32> -> vector<8x256xf32>
    %cst_28 = arith.constant dense<0.000000e+00> : vector<8xf32>
    %145 = vector.multi_reduction <add>, %144, %cst_28 [1] : vector<8x256xf32> to vector<8xf32>
    %146 = vector.shape_cast %145 : vector<8xf32> to vector<8x1xf32>
    %147 = arith.fptosi %146 : vector<8x1xf32> to vector<8x1xi32>
    %148 = arith.fptosi %143 : vector<8x1xf32> to vector<8x1xi32>
    %149 = arith.subi %147, %148 : vector<8x1xi32>
    %150 = vector.broadcast %147 : vector<8x1xi32> to vector<8x8xi32>
    %151 = arith.cmpi sle, %39, %150 : vector<8x8xi32>
    %c256_i32_29 = arith.constant 256 : i32
    %152 = vector.broadcast %c256_i32_29 : i32 to vector<8x8xi32>
    %153 = arith.addi %39, %152 : vector<8x8xi32>
    %154 = vector.broadcast %147 : vector<8x1xi32> to vector<8x8xi32>
    %155 = arith.cmpi slt, %154, %153 : vector<8x8xi32>
    %156 = arith.andi %151, %155 : vector<8x8xi1>
    %157 = arith.extui %156 : vector<8x8xi1> to vector<8x8xi32>
    %158 = arith.sitofp %157 : vector<8x8xi32> to vector<8x8xf32>
    %c0_i32_30 = arith.constant 0 : i32
    %159 = vector.broadcast %c0_i32_30 : i32 to vector<8x8xi32>
    %160 = arith.select %156, %39, %159 : vector<8x8xi1>, vector<8x8xi32>
    %cst_31 = arith.constant dense<0> : vector<8xi32>
    %161 = vector.multi_reduction <add>, %160, %cst_31 [1] : vector<8x8xi32> to vector<8xi32>
    %162 = vector.shape_cast %161 : vector<8xi32> to vector<8x1xi32>
    %163 = arith.subi %147, %162 : vector<8x1xi32>
    %cst_32 = arith.constant dense<0.000000e+00> : vector<8x256xf32>
    %164 = tpu.matmul %158, %33, %cst_32 {dimension_numbers = #tpu.dot_dimension_numbers<[1], [0], [0], [1], [0, 0, 1, 1], [], []>} : vector<8x8xf32>, vector<8x256xf32>, vector<8x256xf32> -> vector<8x256xf32>
    %165 = vector.broadcast %163 : vector<8x1xi32> to vector<8x256xi32>
    %166 = arith.cmpi eq, %40, %165 : vector<8x256xi32>
    %167 = arith.extui %166 : vector<8x256xi1> to vector<8x256xi32>
    %168 = arith.sitofp %167 : vector<8x256xi32> to vector<8x256xf32>
    %169 = arith.mulf %164, %168 : vector<8x256xf32>
    %cst_33 = arith.constant dense<0.000000e+00> : vector<8xf32>
    %170 = vector.multi_reduction <add>, %169, %cst_33 [1] : vector<8x256xf32> to vector<8xf32>
    %171 = vector.shape_cast %170 : vector<8xf32> to vector<8x1xf32>
    %c2048_i32_34 = arith.constant 2048 : i32
    %172 = vector.broadcast %c2048_i32_34 : i32 to vector<8x1xi32>
    %173 = arith.cmpi sge, %147, %172 : vector<8x1xi32>
    %174 = vector.broadcast %37 : f32 to vector<8x1xf32>
    %175 = arith.select %173, %174, %171 : vector<8x1xi1>, vector<8x1xf32>
    %176 = vector.broadcast %149 : vector<8x1xi32> to vector<8x8xi32>
    %177 = arith.cmpi sle, %39, %176 : vector<8x8xi32>
    %c256_i32_35 = arith.constant 256 : i32
    %178 = vector.broadcast %c256_i32_35 : i32 to vector<8x8xi32>
    %179 = arith.addi %39, %178 : vector<8x8xi32>
    %180 = vector.broadcast %149 : vector<8x1xi32> to vector<8x8xi32>
    %181 = arith.cmpi slt, %180, %179 : vector<8x8xi32>
    %182 = arith.andi %177, %181 : vector<8x8xi1>
    %183 = arith.extui %182 : vector<8x8xi1> to vector<8x8xi32>
    %184 = arith.sitofp %183 : vector<8x8xi32> to vector<8x8xf32>
    %c0_i32_36 = arith.constant 0 : i32
    %185 = vector.broadcast %c0_i32_36 : i32 to vector<8x8xi32>
    %186 = arith.select %182, %39, %185 : vector<8x8xi1>, vector<8x8xi32>
    %cst_37 = arith.constant dense<0> : vector<8xi32>
    %187 = vector.multi_reduction <add>, %186, %cst_37 [1] : vector<8x8xi32> to vector<8xi32>
    %188 = vector.shape_cast %187 : vector<8xi32> to vector<8x1xi32>
    %189 = arith.subi %149, %188 : vector<8x1xi32>
    %cst_38 = arith.constant dense<0.000000e+00> : vector<8x256xf32>
    %190 = tpu.matmul %184, %33, %cst_38 {dimension_numbers = #tpu.dot_dimension_numbers<[1], [0], [0], [1], [0, 0, 1, 1], [], []>} : vector<8x8xf32>, vector<8x256xf32>, vector<8x256xf32> -> vector<8x256xf32>
    %191 = vector.broadcast %189 : vector<8x1xi32> to vector<8x256xi32>
    %192 = arith.cmpi eq, %40, %191 : vector<8x256xi32>
    %193 = arith.extui %192 : vector<8x256xi1> to vector<8x256xi32>
    %194 = arith.sitofp %193 : vector<8x256xi32> to vector<8x256xf32>
    %195 = arith.mulf %190, %194 : vector<8x256xf32>
    %cst_39 = arith.constant dense<0.000000e+00> : vector<8xf32>
    %196 = vector.multi_reduction <add>, %195, %cst_39 [1] : vector<8x256xf32> to vector<8xf32>
    %197 = vector.shape_cast %196 : vector<8xf32> to vector<8x1xf32>
    %c2048_i32_40 = arith.constant 2048 : i32
    %198 = vector.broadcast %c2048_i32_40 : i32 to vector<8x1xi32>
    %199 = arith.cmpi sge, %149, %198 : vector<8x1xi32>
    %200 = vector.broadcast %37 : f32 to vector<8x1xf32>
    %201 = arith.select %199, %200, %197 : vector<8x1xi1>, vector<8x1xf32>
    %202 = arith.subf %175, %201 : vector<8x1xf32>
    %203 = arith.index_cast %c1_i32 : i32 to index
    %204 = memref.load %arg1[%203] : memref<8xf32, #tpu.memory_space<smem>>
    %205 = vector.broadcast %204 : f32 to vector<8x1xf32>
    %206 = arith.mulf %205, %202 : vector<8x1xf32>
    %207 = arith.addf %124, %206 : vector<8x1xf32>
    %c2_i32 = arith.constant 2 : i32
    %208 = arith.sitofp %c2_i32 : i32 to f32
    %209 = arith.divf %208, %cst_6 : f32
    %210 = arith.mulf %9, %209 : f32
    %211 = arith.addf %4, %210 : f32
    %c7_i32_41 = arith.constant 7 : i32
    %212 = arith.cmpi eq, %c2_i32, %c7_i32_41 : i32
    %cst_42 = arith.constant 1.000000e+00 : f32
    %213 = arith.addf %208, %cst_42 : f32
    %214 = arith.divf %213, %cst_6 : f32
    %215 = arith.mulf %9, %214 : f32
    %216 = arith.addf %4, %215 : f32
    %cst_43 = arith.constant 0x7F800000 : f32
    %217 = arith.select %212, %cst_43, %216 : f32
    %218 = vector.broadcast %211 : f32 to vector<8x256xf32>
    %219 = arith.cmpf oge, %0, %218 : vector<8x256xf32>
    %220 = vector.broadcast %217 : f32 to vector<8x256xf32>
    %221 = arith.cmpf olt, %0, %220 : vector<8x256xf32>
    %222 = arith.andi %219, %221 : vector<8x256xi1>
    %223 = arith.extui %222 : vector<8x256xi1> to vector<8x256xi32>
    %224 = arith.sitofp %223 : vector<8x256xi32> to vector<8x256xf32>
    %cst_44 = arith.constant dense<0.000000e+00> : vector<8xf32>
    %225 = vector.multi_reduction <add>, %224, %cst_44 [1] : vector<8x256xf32> to vector<8xf32>
    %226 = vector.shape_cast %225 : vector<8xf32> to vector<8x1xf32>
    %cst_45 = arith.constant dense<0.000000e+00> : vector<8x256xf32>
    %227 = tpu.matmul %24, %224, %cst_45 {dimension_numbers = #tpu.dot_dimension_numbers<[1], [0], [0], [1], [0, 0, 1, 1], [], []>} : vector<8x8xf32>, vector<8x256xf32>, vector<8x256xf32> -> vector<8x256xf32>
    %cst_46 = arith.constant dense<0.000000e+00> : vector<8xf32>
    %228 = vector.multi_reduction <add>, %227, %cst_46 [1] : vector<8x256xf32> to vector<8xf32>
    %229 = vector.shape_cast %228 : vector<8xf32> to vector<8x1xf32>
    %230 = arith.fptosi %229 : vector<8x1xf32> to vector<8x1xi32>
    %231 = arith.fptosi %226 : vector<8x1xf32> to vector<8x1xi32>
    %232 = arith.subi %230, %231 : vector<8x1xi32>
    %233 = vector.broadcast %230 : vector<8x1xi32> to vector<8x8xi32>
    %234 = arith.cmpi sle, %39, %233 : vector<8x8xi32>
    %c256_i32_47 = arith.constant 256 : i32
    %235 = vector.broadcast %c256_i32_47 : i32 to vector<8x8xi32>
    %236 = arith.addi %39, %235 : vector<8x8xi32>
    %237 = vector.broadcast %230 : vector<8x1xi32> to vector<8x8xi32>
    %238 = arith.cmpi slt, %237, %236 : vector<8x8xi32>
    %239 = arith.andi %234, %238 : vector<8x8xi1>
    %240 = arith.extui %239 : vector<8x8xi1> to vector<8x8xi32>
    %241 = arith.sitofp %240 : vector<8x8xi32> to vector<8x8xf32>
    %c0_i32_48 = arith.constant 0 : i32
    %242 = vector.broadcast %c0_i32_48 : i32 to vector<8x8xi32>
    %243 = arith.select %239, %39, %242 : vector<8x8xi1>, vector<8x8xi32>
    %cst_49 = arith.constant dense<0> : vector<8xi32>
    %244 = vector.multi_reduction <add>, %243, %cst_49 [1] : vector<8x8xi32> to vector<8xi32>
    %245 = vector.shape_cast %244 : vector<8xi32> to vector<8x1xi32>
    %246 = arith.subi %230, %245 : vector<8x1xi32>
    %cst_50 = arith.constant dense<0.000000e+00> : vector<8x256xf32>
    %247 = tpu.matmul %241, %33, %cst_50 {dimension_numbers = #tpu.dot_dimension_numbers<[1], [0], [0], [1], [0, 0, 1, 1], [], []>} : vector<8x8xf32>, vector<8x256xf32>, vector<8x256xf32> -> vector<8x256xf32>
    %248 = vector.broadcast %246 : vector<8x1xi32> to vector<8x256xi32>
    %249 = arith.cmpi eq, %40, %248 : vector<8x256xi32>
    %250 = arith.extui %249 : vector<8x256xi1> to vector<8x256xi32>
    %251 = arith.sitofp %250 : vector<8x256xi32> to vector<8x256xf32>
    %252 = arith.mulf %247, %251 : vector<8x256xf32>
    %cst_51 = arith.constant dense<0.000000e+00> : vector<8xf32>
    %253 = vector.multi_reduction <add>, %252, %cst_51 [1] : vector<8x256xf32> to vector<8xf32>
    %254 = vector.shape_cast %253 : vector<8xf32> to vector<8x1xf32>
    %c2048_i32_52 = arith.constant 2048 : i32
    %255 = vector.broadcast %c2048_i32_52 : i32 to vector<8x1xi32>
    %256 = arith.cmpi sge, %230, %255 : vector<8x1xi32>
    %257 = vector.broadcast %37 : f32 to vector<8x1xf32>
    %258 = arith.select %256, %257, %254 : vector<8x1xi1>, vector<8x1xf32>
    %259 = vector.broadcast %232 : vector<8x1xi32> to vector<8x8xi32>
    %260 = arith.cmpi sle, %39, %259 : vector<8x8xi32>
    %c256_i32_53 = arith.constant 256 : i32
    %261 = vector.broadcast %c256_i32_53 : i32 to vector<8x8xi32>
    %262 = arith.addi %39, %261 : vector<8x8xi32>
    %263 = vector.broadcast %232 : vector<8x1xi32> to vector<8x8xi32>
    %264 = arith.cmpi slt, %263, %262 : vector<8x8xi32>
    %265 = arith.andi %260, %264 : vector<8x8xi1>
    %266 = arith.extui %265 : vector<8x8xi1> to vector<8x8xi32>
    %267 = arith.sitofp %266 : vector<8x8xi32> to vector<8x8xf32>
    %c0_i32_54 = arith.constant 0 : i32
    %268 = vector.broadcast %c0_i32_54 : i32 to vector<8x8xi32>
    %269 = arith.select %265, %39, %268 : vector<8x8xi1>, vector<8x8xi32>
    %cst_55 = arith.constant dense<0> : vector<8xi32>
    %270 = vector.multi_reduction <add>, %269, %cst_55 [1] : vector<8x8xi32> to vector<8xi32>
    %271 = vector.shape_cast %270 : vector<8xi32> to vector<8x1xi32>
    %272 = arith.subi %232, %271 : vector<8x1xi32>
    %cst_56 = arith.constant dense<0.000000e+00> : vector<8x256xf32>
    %273 = tpu.matmul %267, %33, %cst_56 {dimension_numbers = #tpu.dot_dimension_numbers<[1], [0], [0], [1], [0, 0, 1, 1], [], []>} : vector<8x8xf32>, vector<8x256xf32>, vector<8x256xf32> -> vector<8x256xf32>
    %274 = vector.broadcast %272 : vector<8x1xi32> to vector<8x256xi32>
    %275 = arith.cmpi eq, %40, %274 : vector<8x256xi32>
    %276 = arith.extui %275 : vector<8x256xi1> to vector<8x256xi32>
    %277 = arith.sitofp %276 : vector<8x256xi32> to vector<8x256xf32>
    %278 = arith.mulf %273, %277 : vector<8x256xf32>
    %cst_57 = arith.constant dense<0.000000e+00> : vector<8xf32>
    %279 = vector.multi_reduction <add>, %278, %cst_57 [1] : vector<8x256xf32> to vector<8xf32>
    %280 = vector.shape_cast %279 : vector<8xf32> to vector<8x1xf32>
    %c2048_i32_58 = arith.constant 2048 : i32
    %281 = vector.broadcast %c2048_i32_58 : i32 to vector<8x1xi32>
    %282 = arith.cmpi sge, %232, %281 : vector<8x1xi32>
    %283 = vector.broadcast %37 : f32 to vector<8x1xf32>
    %284 = arith.select %282, %283, %280 : vector<8x1xi1>, vector<8x1xf32>
    %285 = arith.subf %258, %284 : vector<8x1xf32>
    %286 = arith.index_cast %c2_i32 : i32 to index
    %287 = memref.load %arg1[%286] : memref<8xf32, #tpu.memory_space<smem>>
    %288 = vector.broadcast %287 : f32 to vector<8x1xf32>
    %289 = arith.mulf %288, %285 : vector<8x1xf32>
    %290 = arith.addf %207, %289 : vector<8x1xf32>
    %c3_i32 = arith.constant 3 : i32
    %291 = arith.sitofp %c3_i32 : i32 to f32
    %292 = arith.divf %291, %cst_6 : f32
    %293 = arith.mulf %9, %292 : f32
    %294 = arith.addf %4, %293 : f32
    %c7_i32_59 = arith.constant 7 : i32
    %295 = arith.cmpi eq, %c3_i32, %c7_i32_59 : i32
    %cst_60 = arith.constant 1.000000e+00 : f32
    %296 = arith.addf %291, %cst_60 : f32
    %297 = arith.divf %296, %cst_6 : f32
    %298 = arith.mulf %9, %297 : f32
    %299 = arith.addf %4, %298 : f32
    %cst_61 = arith.constant 0x7F800000 : f32
    %300 = arith.select %295, %cst_61, %299 : f32
    %301 = vector.broadcast %294 : f32 to vector<8x256xf32>
    %302 = arith.cmpf oge, %0, %301 : vector<8x256xf32>
    %303 = vector.broadcast %300 : f32 to vector<8x256xf32>
    %304 = arith.cmpf olt, %0, %303 : vector<8x256xf32>
    %305 = arith.andi %302, %304 : vector<8x256xi1>
    %306 = arith.extui %305 : vector<8x256xi1> to vector<8x256xi32>
    %307 = arith.sitofp %306 : vector<8x256xi32> to vector<8x256xf32>
    %cst_62 = arith.constant dense<0.000000e+00> : vector<8xf32>
    %308 = vector.multi_reduction <add>, %307, %cst_62 [1] : vector<8x256xf32> to vector<8xf32>
    %309 = vector.shape_cast %308 : vector<8xf32> to vector<8x1xf32>
    %cst_63 = arith.constant dense<0.000000e+00> : vector<8x256xf32>
    %310 = tpu.matmul %24, %307, %cst_63 {dimension_numbers = #tpu.dot_dimension_numbers<[1], [0], [0], [1], [0, 0, 1, 1], [], []>} : vector<8x8xf32>, vector<8x256xf32>, vector<8x256xf32> -> vector<8x256xf32>
    %cst_64 = arith.constant dense<0.000000e+00> : vector<8xf32>
    %311 = vector.multi_reduction <add>, %310, %cst_64 [1] : vector<8x256xf32> to vector<8xf32>
    %312 = vector.shape_cast %311 : vector<8xf32> to vector<8x1xf32>
    %313 = arith.fptosi %312 : vector<8x1xf32> to vector<8x1xi32>
    %314 = arith.fptosi %309 : vector<8x1xf32> to vector<8x1xi32>
    %315 = arith.subi %313, %314 : vector<8x1xi32>
    %316 = vector.broadcast %313 : vector<8x1xi32> to vector<8x8xi32>
    %317 = arith.cmpi sle, %39, %316 : vector<8x8xi32>
    %c256_i32_65 = arith.constant 256 : i32
    %318 = vector.broadcast %c256_i32_65 : i32 to vector<8x8xi32>
    %319 = arith.addi %39, %318 : vector<8x8xi32>
    %320 = vector.broadcast %313 : vector<8x1xi32> to vector<8x8xi32>
    %321 = arith.cmpi slt, %320, %319 : vector<8x8xi32>
    %322 = arith.andi %317, %321 : vector<8x8xi1>
    %323 = arith.extui %322 : vector<8x8xi1> to vector<8x8xi32>
    %324 = arith.sitofp %323 : vector<8x8xi32> to vector<8x8xf32>
    %c0_i32_66 = arith.constant 0 : i32
    %325 = vector.broadcast %c0_i32_66 : i32 to vector<8x8xi32>
    %326 = arith.select %322, %39, %325 : vector<8x8xi1>, vector<8x8xi32>
    %cst_67 = arith.constant dense<0> : vector<8xi32>
    %327 = vector.multi_reduction <add>, %326, %cst_67 [1] : vector<8x8xi32> to vector<8xi32>
    %328 = vector.shape_cast %327 : vector<8xi32> to vector<8x1xi32>
    %329 = arith.subi %313, %328 : vector<8x1xi32>
    %cst_68 = arith.constant dense<0.000000e+00> : vector<8x256xf32>
    %330 = tpu.matmul %324, %33, %cst_68 {dimension_numbers = #tpu.dot_dimension_numbers<[1], [0], [0], [1], [0, 0, 1, 1], [], []>} : vector<8x8xf32>, vector<8x256xf32>, vector<8x256xf32> -> vector<8x256xf32>
    %331 = vector.broadcast %329 : vector<8x1xi32> to vector<8x256xi32>
    %332 = arith.cmpi eq, %40, %331 : vector<8x256xi32>
    %333 = arith.extui %332 : vector<8x256xi1> to vector<8x256xi32>
    %334 = arith.sitofp %333 : vector<8x256xi32> to vector<8x256xf32>
    %335 = arith.mulf %330, %334 : vector<8x256xf32>
    %cst_69 = arith.constant dense<0.000000e+00> : vector<8xf32>
    %336 = vector.multi_reduction <add>, %335, %cst_69 [1] : vector<8x256xf32> to vector<8xf32>
    %337 = vector.shape_cast %336 : vector<8xf32> to vector<8x1xf32>
    %c2048_i32_70 = arith.constant 2048 : i32
    %338 = vector.broadcast %c2048_i32_70 : i32 to vector<8x1xi32>
    %339 = arith.cmpi sge, %313, %338 : vector<8x1xi32>
    %340 = vector.broadcast %37 : f32 to vector<8x1xf32>
    %341 = arith.select %339, %340, %337 : vector<8x1xi1>, vector<8x1xf32>
    %342 = vector.broadcast %315 : vector<8x1xi32> to vector<8x8xi32>
    %343 = arith.cmpi sle, %39, %342 : vector<8x8xi32>
    %c256_i32_71 = arith.constant 256 : i32
    %344 = vector.broadcast %c256_i32_71 : i32 to vector<8x8xi32>
    %345 = arith.addi %39, %344 : vector<8x8xi32>
    %346 = vector.broadcast %315 : vector<8x1xi32> to vector<8x8xi32>
    %347 = arith.cmpi slt, %346, %345 : vector<8x8xi32>
    %348 = arith.andi %343, %347 : vector<8x8xi1>
    %349 = arith.extui %348 : vector<8x8xi1> to vector<8x8xi32>
    %350 = arith.sitofp %349 : vector<8x8xi32> to vector<8x8xf32>
    %c0_i32_72 = arith.constant 0 : i32
    %351 = vector.broadcast %c0_i32_72 : i32 to vector<8x8xi32>
    %352 = arith.select %348, %39, %351 : vector<8x8xi1>, vector<8x8xi32>
    %cst_73 = arith.constant dense<0> : vector<8xi32>
    %353 = vector.multi_reduction <add>, %352, %cst_73 [1] : vector<8x8xi32> to vector<8xi32>
    %354 = vector.shape_cast %353 : vector<8xi32> to vector<8x1xi32>
    %355 = arith.subi %315, %354 : vector<8x1xi32>
    %cst_74 = arith.constant dense<0.000000e+00> : vector<8x256xf32>
    %356 = tpu.matmul %350, %33, %cst_74 {dimension_numbers = #tpu.dot_dimension_numbers<[1], [0], [0], [1], [0, 0, 1, 1], [], []>} : vector<8x8xf32>, vector<8x256xf32>, vector<8x256xf32> -> vector<8x256xf32>
    %357 = vector.broadcast %355 : vector<8x1xi32> to vector<8x256xi32>
    %358 = arith.cmpi eq, %40, %357 : vector<8x256xi32>
    %359 = arith.extui %358 : vector<8x256xi1> to vector<8x256xi32>
    %360 = arith.sitofp %359 : vector<8x256xi32> to vector<8x256xf32>
    %361 = arith.mulf %356, %360 : vector<8x256xf32>
    %cst_75 = arith.constant dense<0.000000e+00> : vector<8xf32>
    %362 = vector.multi_reduction <add>, %361, %cst_75 [1] : vector<8x256xf32> to vector<8xf32>
    %363 = vector.shape_cast %362 : vector<8xf32> to vector<8x1xf32>
    %c2048_i32_76 = arith.constant 2048 : i32
    %364 = vector.broadcast %c2048_i32_76 : i32 to vector<8x1xi32>
    %365 = arith.cmpi sge, %315, %364 : vector<8x1xi32>
    %366 = vector.broadcast %37 : f32 to vector<8x1xf32>
    %367 = arith.select %365, %366, %363 : vector<8x1xi1>, vector<8x1xf32>
    %368 = arith.subf %341, %367 : vector<8x1xf32>
    %369 = arith.index_cast %c3_i32 : i32 to index
    %370 = memref.load %arg1[%369] : memref<8xf32, #tpu.memory_space<smem>>
    %371 = vector.broadcast %370 : f32 to vector<8x1xf32>
    %372 = arith.mulf %371, %368 : vector<8x1xf32>
    %373 = arith.addf %290, %372 : vector<8x1xf32>
    %c4_i32 = arith.constant 4 : i32
    %374 = arith.sitofp %c4_i32 : i32 to f32
    %375 = arith.divf %374, %cst_6 : f32
    %376 = arith.mulf %9, %375 : f32
    %377 = arith.addf %4, %376 : f32
    %c7_i32_77 = arith.constant 7 : i32
    %378 = arith.cmpi eq, %c4_i32, %c7_i32_77 : i32
    %cst_78 = arith.constant 1.000000e+00 : f32
    %379 = arith.addf %374, %cst_78 : f32
    %380 = arith.divf %379, %cst_6 : f32
    %381 = arith.mulf %9, %380 : f32
    %382 = arith.addf %4, %381 : f32
    %cst_79 = arith.constant 0x7F800000 : f32
    %383 = arith.select %378, %cst_79, %382 : f32
    %384 = vector.broadcast %377 : f32 to vector<8x256xf32>
    %385 = arith.cmpf oge, %0, %384 : vector<8x256xf32>
    %386 = vector.broadcast %383 : f32 to vector<8x256xf32>
    %387 = arith.cmpf olt, %0, %386 : vector<8x256xf32>
    %388 = arith.andi %385, %387 : vector<8x256xi1>
    %389 = arith.extui %388 : vector<8x256xi1> to vector<8x256xi32>
    %390 = arith.sitofp %389 : vector<8x256xi32> to vector<8x256xf32>
    %cst_80 = arith.constant dense<0.000000e+00> : vector<8xf32>
    %391 = vector.multi_reduction <add>, %390, %cst_80 [1] : vector<8x256xf32> to vector<8xf32>
    %392 = vector.shape_cast %391 : vector<8xf32> to vector<8x1xf32>
    %cst_81 = arith.constant dense<0.000000e+00> : vector<8x256xf32>
    %393 = tpu.matmul %24, %390, %cst_81 {dimension_numbers = #tpu.dot_dimension_numbers<[1], [0], [0], [1], [0, 0, 1, 1], [], []>} : vector<8x8xf32>, vector<8x256xf32>, vector<8x256xf32> -> vector<8x256xf32>
    %cst_82 = arith.constant dense<0.000000e+00> : vector<8xf32>
    %394 = vector.multi_reduction <add>, %393, %cst_82 [1] : vector<8x256xf32> to vector<8xf32>
    %395 = vector.shape_cast %394 : vector<8xf32> to vector<8x1xf32>
    %396 = arith.fptosi %395 : vector<8x1xf32> to vector<8x1xi32>
    %397 = arith.fptosi %392 : vector<8x1xf32> to vector<8x1xi32>
    %398 = arith.subi %396, %397 : vector<8x1xi32>
    %399 = vector.broadcast %396 : vector<8x1xi32> to vector<8x8xi32>
    %400 = arith.cmpi sle, %39, %399 : vector<8x8xi32>
    %c256_i32_83 = arith.constant 256 : i32
    %401 = vector.broadcast %c256_i32_83 : i32 to vector<8x8xi32>
    %402 = arith.addi %39, %401 : vector<8x8xi32>
    %403 = vector.broadcast %396 : vector<8x1xi32> to vector<8x8xi32>
    %404 = arith.cmpi slt, %403, %402 : vector<8x8xi32>
    %405 = arith.andi %400, %404 : vector<8x8xi1>
    %406 = arith.extui %405 : vector<8x8xi1> to vector<8x8xi32>
    %407 = arith.sitofp %406 : vector<8x8xi32> to vector<8x8xf32>
    %c0_i32_84 = arith.constant 0 : i32
    %408 = vector.broadcast %c0_i32_84 : i32 to vector<8x8xi32>
    %409 = arith.select %405, %39, %408 : vector<8x8xi1>, vector<8x8xi32>
    %cst_85 = arith.constant dense<0> : vector<8xi32>
    %410 = vector.multi_reduction <add>, %409, %cst_85 [1] : vector<8x8xi32> to vector<8xi32>
    %411 = vector.shape_cast %410 : vector<8xi32> to vector<8x1xi32>
    %412 = arith.subi %396, %411 : vector<8x1xi32>
    %cst_86 = arith.constant dense<0.000000e+00> : vector<8x256xf32>
    %413 = tpu.matmul %407, %33, %cst_86 {dimension_numbers = #tpu.dot_dimension_numbers<[1], [0], [0], [1], [0, 0, 1, 1], [], []>} : vector<8x8xf32>, vector<8x256xf32>, vector<8x256xf32> -> vector<8x256xf32>
    %414 = vector.broadcast %412 : vector<8x1xi32> to vector<8x256xi32>
    %415 = arith.cmpi eq, %40, %414 : vector<8x256xi32>
    %416 = arith.extui %415 : vector<8x256xi1> to vector<8x256xi32>
    %417 = arith.sitofp %416 : vector<8x256xi32> to vector<8x256xf32>
    %418 = arith.mulf %413, %417 : vector<8x256xf32>
    %cst_87 = arith.constant dense<0.000000e+00> : vector<8xf32>
    %419 = vector.multi_reduction <add>, %418, %cst_87 [1] : vector<8x256xf32> to vector<8xf32>
    %420 = vector.shape_cast %419 : vector<8xf32> to vector<8x1xf32>
    %c2048_i32_88 = arith.constant 2048 : i32
    %421 = vector.broadcast %c2048_i32_88 : i32 to vector<8x1xi32>
    %422 = arith.cmpi sge, %396, %421 : vector<8x1xi32>
    %423 = vector.broadcast %37 : f32 to vector<8x1xf32>
    %424 = arith.select %422, %423, %420 : vector<8x1xi1>, vector<8x1xf32>
    %425 = vector.broadcast %398 : vector<8x1xi32> to vector<8x8xi32>
    %426 = arith.cmpi sle, %39, %425 : vector<8x8xi32>
    %c256_i32_89 = arith.constant 256 : i32
    %427 = vector.broadcast %c256_i32_89 : i32 to vector<8x8xi32>
    %428 = arith.addi %39, %427 : vector<8x8xi32>
    %429 = vector.broadcast %398 : vector<8x1xi32> to vector<8x8xi32>
    %430 = arith.cmpi slt, %429, %428 : vector<8x8xi32>
    %431 = arith.andi %426, %430 : vector<8x8xi1>
    %432 = arith.extui %431 : vector<8x8xi1> to vector<8x8xi32>
    %433 = arith.sitofp %432 : vector<8x8xi32> to vector<8x8xf32>
    %c0_i32_90 = arith.constant 0 : i32
    %434 = vector.broadcast %c0_i32_90 : i32 to vector<8x8xi32>
    %435 = arith.select %431, %39, %434 : vector<8x8xi1>, vector<8x8xi32>
    %cst_91 = arith.constant dense<0> : vector<8xi32>
    %436 = vector.multi_reduction <add>, %435, %cst_91 [1] : vector<8x8xi32> to vector<8xi32>
    %437 = vector.shape_cast %436 : vector<8xi32> to vector<8x1xi32>
    %438 = arith.subi %398, %437 : vector<8x1xi32>
    %cst_92 = arith.constant dense<0.000000e+00> : vector<8x256xf32>
    %439 = tpu.matmul %433, %33, %cst_92 {dimension_numbers = #tpu.dot_dimension_numbers<[1], [0], [0], [1], [0, 0, 1, 1], [], []>} : vector<8x8xf32>, vector<8x256xf32>, vector<8x256xf32> -> vector<8x256xf32>
    %440 = vector.broadcast %438 : vector<8x1xi32> to vector<8x256xi32>
    %441 = arith.cmpi eq, %40, %440 : vector<8x256xi32>
    %442 = arith.extui %441 : vector<8x256xi1> to vector<8x256xi32>
    %443 = arith.sitofp %442 : vector<8x256xi32> to vector<8x256xf32>
    %444 = arith.mulf %439, %443 : vector<8x256xf32>
    %cst_93 = arith.constant dense<0.000000e+00> : vector<8xf32>
    %445 = vector.multi_reduction <add>, %444, %cst_93 [1] : vector<8x256xf32> to vector<8xf32>
    %446 = vector.shape_cast %445 : vector<8xf32> to vector<8x1xf32>
    %c2048_i32_94 = arith.constant 2048 : i32
    %447 = vector.broadcast %c2048_i32_94 : i32 to vector<8x1xi32>
    %448 = arith.cmpi sge, %398, %447 : vector<8x1xi32>
    %449 = vector.broadcast %37 : f32 to vector<8x1xf32>
    %450 = arith.select %448, %449, %446 : vector<8x1xi1>, vector<8x1xf32>
    %451 = arith.subf %424, %450 : vector<8x1xf32>
    %452 = arith.index_cast %c4_i32 : i32 to index
    %453 = memref.load %arg1[%452] : memref<8xf32, #tpu.memory_space<smem>>
    %454 = vector.broadcast %453 : f32 to vector<8x1xf32>
    %455 = arith.mulf %454, %451 : vector<8x1xf32>
    %456 = arith.addf %373, %455 : vector<8x1xf32>
    %c5_i32 = arith.constant 5 : i32
    %457 = arith.sitofp %c5_i32 : i32 to f32
    %458 = arith.divf %457, %cst_6 : f32
    %459 = arith.mulf %9, %458 : f32
    %460 = arith.addf %4, %459 : f32
    %c7_i32_95 = arith.constant 7 : i32
    %461 = arith.cmpi eq, %c5_i32, %c7_i32_95 : i32
    %cst_96 = arith.constant 1.000000e+00 : f32
    %462 = arith.addf %457, %cst_96 : f32
    %463 = arith.divf %462, %cst_6 : f32
    %464 = arith.mulf %9, %463 : f32
    %465 = arith.addf %4, %464 : f32
    %cst_97 = arith.constant 0x7F800000 : f32
    %466 = arith.select %461, %cst_97, %465 : f32
    %467 = vector.broadcast %460 : f32 to vector<8x256xf32>
    %468 = arith.cmpf oge, %0, %467 : vector<8x256xf32>
    %469 = vector.broadcast %466 : f32 to vector<8x256xf32>
    %470 = arith.cmpf olt, %0, %469 : vector<8x256xf32>
    %471 = arith.andi %468, %470 : vector<8x256xi1>
    %472 = arith.extui %471 : vector<8x256xi1> to vector<8x256xi32>
    %473 = arith.sitofp %472 : vector<8x256xi32> to vector<8x256xf32>
    %cst_98 = arith.constant dense<0.000000e+00> : vector<8xf32>
    %474 = vector.multi_reduction <add>, %473, %cst_98 [1] : vector<8x256xf32> to vector<8xf32>
    %475 = vector.shape_cast %474 : vector<8xf32> to vector<8x1xf32>
    %cst_99 = arith.constant dense<0.000000e+00> : vector<8x256xf32>
    %476 = tpu.matmul %24, %473, %cst_99 {dimension_numbers = #tpu.dot_dimension_numbers<[1], [0], [0], [1], [0, 0, 1, 1], [], []>} : vector<8x8xf32>, vector<8x256xf32>, vector<8x256xf32> -> vector<8x256xf32>
    %cst_100 = arith.constant dense<0.000000e+00> : vector<8xf32>
    %477 = vector.multi_reduction <add>, %476, %cst_100 [1] : vector<8x256xf32> to vector<8xf32>
    %478 = vector.shape_cast %477 : vector<8xf32> to vector<8x1xf32>
    %479 = arith.fptosi %478 : vector<8x1xf32> to vector<8x1xi32>
    %480 = arith.fptosi %475 : vector<8x1xf32> to vector<8x1xi32>
    %481 = arith.subi %479, %480 : vector<8x1xi32>
    %482 = vector.broadcast %479 : vector<8x1xi32> to vector<8x8xi32>
    %483 = arith.cmpi sle, %39, %482 : vector<8x8xi32>
    %c256_i32_101 = arith.constant 256 : i32
    %484 = vector.broadcast %c256_i32_101 : i32 to vector<8x8xi32>
    %485 = arith.addi %39, %484 : vector<8x8xi32>
    %486 = vector.broadcast %479 : vector<8x1xi32> to vector<8x8xi32>
    %487 = arith.cmpi slt, %486, %485 : vector<8x8xi32>
    %488 = arith.andi %483, %487 : vector<8x8xi1>
    %489 = arith.extui %488 : vector<8x8xi1> to vector<8x8xi32>
    %490 = arith.sitofp %489 : vector<8x8xi32> to vector<8x8xf32>
    %c0_i32_102 = arith.constant 0 : i32
    %491 = vector.broadcast %c0_i32_102 : i32 to vector<8x8xi32>
    %492 = arith.select %488, %39, %491 : vector<8x8xi1>, vector<8x8xi32>
    %cst_103 = arith.constant dense<0> : vector<8xi32>
    %493 = vector.multi_reduction <add>, %492, %cst_103 [1] : vector<8x8xi32> to vector<8xi32>
    %494 = vector.shape_cast %493 : vector<8xi32> to vector<8x1xi32>
    %495 = arith.subi %479, %494 : vector<8x1xi32>
    %cst_104 = arith.constant dense<0.000000e+00> : vector<8x256xf32>
    %496 = tpu.matmul %490, %33, %cst_104 {dimension_numbers = #tpu.dot_dimension_numbers<[1], [0], [0], [1], [0, 0, 1, 1], [], []>} : vector<8x8xf32>, vector<8x256xf32>, vector<8x256xf32> -> vector<8x256xf32>
    %497 = vector.broadcast %495 : vector<8x1xi32> to vector<8x256xi32>
    %498 = arith.cmpi eq, %40, %497 : vector<8x256xi32>
    %499 = arith.extui %498 : vector<8x256xi1> to vector<8x256xi32>
    %500 = arith.sitofp %499 : vector<8x256xi32> to vector<8x256xf32>
    %501 = arith.mulf %496, %500 : vector<8x256xf32>
    %cst_105 = arith.constant dense<0.000000e+00> : vector<8xf32>
    %502 = vector.multi_reduction <add>, %501, %cst_105 [1] : vector<8x256xf32> to vector<8xf32>
    %503 = vector.shape_cast %502 : vector<8xf32> to vector<8x1xf32>
    %c2048_i32_106 = arith.constant 2048 : i32
    %504 = vector.broadcast %c2048_i32_106 : i32 to vector<8x1xi32>
    %505 = arith.cmpi sge, %479, %504 : vector<8x1xi32>
    %506 = vector.broadcast %37 : f32 to vector<8x1xf32>
    %507 = arith.select %505, %506, %503 : vector<8x1xi1>, vector<8x1xf32>
    %508 = vector.broadcast %481 : vector<8x1xi32> to vector<8x8xi32>
    %509 = arith.cmpi sle, %39, %508 : vector<8x8xi32>
    %c256_i32_107 = arith.constant 256 : i32
    %510 = vector.broadcast %c256_i32_107 : i32 to vector<8x8xi32>
    %511 = arith.addi %39, %510 : vector<8x8xi32>
    %512 = vector.broadcast %481 : vector<8x1xi32> to vector<8x8xi32>
    %513 = arith.cmpi slt, %512, %511 : vector<8x8xi32>
    %514 = arith.andi %509, %513 : vector<8x8xi1>
    %515 = arith.extui %514 : vector<8x8xi1> to vector<8x8xi32>
    %516 = arith.sitofp %515 : vector<8x8xi32> to vector<8x8xf32>
    %c0_i32_108 = arith.constant 0 : i32
    %517 = vector.broadcast %c0_i32_108 : i32 to vector<8x8xi32>
    %518 = arith.select %514, %39, %517 : vector<8x8xi1>, vector<8x8xi32>
    %cst_109 = arith.constant dense<0> : vector<8xi32>
    %519 = vector.multi_reduction <add>, %518, %cst_109 [1] : vector<8x8xi32> to vector<8xi32>
    %520 = vector.shape_cast %519 : vector<8xi32> to vector<8x1xi32>
    %521 = arith.subi %481, %520 : vector<8x1xi32>
    %cst_110 = arith.constant dense<0.000000e+00> : vector<8x256xf32>
    %522 = tpu.matmul %516, %33, %cst_110 {dimension_numbers = #tpu.dot_dimension_numbers<[1], [0], [0], [1], [0, 0, 1, 1], [], []>} : vector<8x8xf32>, vector<8x256xf32>, vector<8x256xf32> -> vector<8x256xf32>
    %523 = vector.broadcast %521 : vector<8x1xi32> to vector<8x256xi32>
    %524 = arith.cmpi eq, %40, %523 : vector<8x256xi32>
    %525 = arith.extui %524 : vector<8x256xi1> to vector<8x256xi32>
    %526 = arith.sitofp %525 : vector<8x256xi32> to vector<8x256xf32>
    %527 = arith.mulf %522, %526 : vector<8x256xf32>
    %cst_111 = arith.constant dense<0.000000e+00> : vector<8xf32>
    %528 = vector.multi_reduction <add>, %527, %cst_111 [1] : vector<8x256xf32> to vector<8xf32>
    %529 = vector.shape_cast %528 : vector<8xf32> to vector<8x1xf32>
    %c2048_i32_112 = arith.constant 2048 : i32
    %530 = vector.broadcast %c2048_i32_112 : i32 to vector<8x1xi32>
    %531 = arith.cmpi sge, %481, %530 : vector<8x1xi32>
    %532 = vector.broadcast %37 : f32 to vector<8x1xf32>
    %533 = arith.select %531, %532, %529 : vector<8x1xi1>, vector<8x1xf32>
    %534 = arith.subf %507, %533 : vector<8x1xf32>
    %535 = arith.index_cast %c5_i32 : i32 to index
    %536 = memref.load %arg1[%535] : memref<8xf32, #tpu.memory_space<smem>>
    %537 = vector.broadcast %536 : f32 to vector<8x1xf32>
    %538 = arith.mulf %537, %534 : vector<8x1xf32>
    %539 = arith.addf %456, %538 : vector<8x1xf32>
    %c6_i32 = arith.constant 6 : i32
    %540 = arith.sitofp %c6_i32 : i32 to f32
    %541 = arith.divf %540, %cst_6 : f32
    %542 = arith.mulf %9, %541 : f32
    %543 = arith.addf %4, %542 : f32
    %c7_i32_113 = arith.constant 7 : i32
    %544 = arith.cmpi eq, %c6_i32, %c7_i32_113 : i32
    %cst_114 = arith.constant 1.000000e+00 : f32
    %545 = arith.addf %540, %cst_114 : f32
    %546 = arith.divf %545, %cst_6 : f32
    %547 = arith.mulf %9, %546 : f32
    %548 = arith.addf %4, %547 : f32
    %cst_115 = arith.constant 0x7F800000 : f32
    %549 = arith.select %544, %cst_115, %548 : f32
    %550 = vector.broadcast %543 : f32 to vector<8x256xf32>
    %551 = arith.cmpf oge, %0, %550 : vector<8x256xf32>
    %552 = vector.broadcast %549 : f32 to vector<8x256xf32>
    %553 = arith.cmpf olt, %0, %552 : vector<8x256xf32>
    %554 = arith.andi %551, %553 : vector<8x256xi1>
    %555 = arith.extui %554 : vector<8x256xi1> to vector<8x256xi32>
    %556 = arith.sitofp %555 : vector<8x256xi32> to vector<8x256xf32>
    %cst_116 = arith.constant dense<0.000000e+00> : vector<8xf32>
    %557 = vector.multi_reduction <add>, %556, %cst_116 [1] : vector<8x256xf32> to vector<8xf32>
    %558 = vector.shape_cast %557 : vector<8xf32> to vector<8x1xf32>
    %cst_117 = arith.constant dense<0.000000e+00> : vector<8x256xf32>
    %559 = tpu.matmul %24, %556, %cst_117 {dimension_numbers = #tpu.dot_dimension_numbers<[1], [0], [0], [1], [0, 0, 1, 1], [], []>} : vector<8x8xf32>, vector<8x256xf32>, vector<8x256xf32> -> vector<8x256xf32>
    %cst_118 = arith.constant dense<0.000000e+00> : vector<8xf32>
    %560 = vector.multi_reduction <add>, %559, %cst_118 [1] : vector<8x256xf32> to vector<8xf32>
    %561 = vector.shape_cast %560 : vector<8xf32> to vector<8x1xf32>
    %562 = arith.fptosi %561 : vector<8x1xf32> to vector<8x1xi32>
    %563 = arith.fptosi %558 : vector<8x1xf32> to vector<8x1xi32>
    %564 = arith.subi %562, %563 : vector<8x1xi32>
    %565 = vector.broadcast %562 : vector<8x1xi32> to vector<8x8xi32>
    %566 = arith.cmpi sle, %39, %565 : vector<8x8xi32>
    %c256_i32_119 = arith.constant 256 : i32
    %567 = vector.broadcast %c256_i32_119 : i32 to vector<8x8xi32>
    %568 = arith.addi %39, %567 : vector<8x8xi32>
    %569 = vector.broadcast %562 : vector<8x1xi32> to vector<8x8xi32>
    %570 = arith.cmpi slt, %569, %568 : vector<8x8xi32>
    %571 = arith.andi %566, %570 : vector<8x8xi1>
    %572 = arith.extui %571 : vector<8x8xi1> to vector<8x8xi32>
    %573 = arith.sitofp %572 : vector<8x8xi32> to vector<8x8xf32>
    %c0_i32_120 = arith.constant 0 : i32
    %574 = vector.broadcast %c0_i32_120 : i32 to vector<8x8xi32>
    %575 = arith.select %571, %39, %574 : vector<8x8xi1>, vector<8x8xi32>
    %cst_121 = arith.constant dense<0> : vector<8xi32>
    %576 = vector.multi_reduction <add>, %575, %cst_121 [1] : vector<8x8xi32> to vector<8xi32>
    %577 = vector.shape_cast %576 : vector<8xi32> to vector<8x1xi32>
    %578 = arith.subi %562, %577 : vector<8x1xi32>
    %cst_122 = arith.constant dense<0.000000e+00> : vector<8x256xf32>
    %579 = tpu.matmul %573, %33, %cst_122 {dimension_numbers = #tpu.dot_dimension_numbers<[1], [0], [0], [1], [0, 0, 1, 1], [], []>} : vector<8x8xf32>, vector<8x256xf32>, vector<8x256xf32> -> vector<8x256xf32>
    %580 = vector.broadcast %578 : vector<8x1xi32> to vector<8x256xi32>
    %581 = arith.cmpi eq, %40, %580 : vector<8x256xi32>
    %582 = arith.extui %581 : vector<8x256xi1> to vector<8x256xi32>
    %583 = arith.sitofp %582 : vector<8x256xi32> to vector<8x256xf32>
    %584 = arith.mulf %579, %583 : vector<8x256xf32>
    %cst_123 = arith.constant dense<0.000000e+00> : vector<8xf32>
    %585 = vector.multi_reduction <add>, %584, %cst_123 [1] : vector<8x256xf32> to vector<8xf32>
    %586 = vector.shape_cast %585 : vector<8xf32> to vector<8x1xf32>
    %c2048_i32_124 = arith.constant 2048 : i32
    %587 = vector.broadcast %c2048_i32_124 : i32 to vector<8x1xi32>
    %588 = arith.cmpi sge, %562, %587 : vector<8x1xi32>
    %589 = vector.broadcast %37 : f32 to vector<8x1xf32>
    %590 = arith.select %588, %589, %586 : vector<8x1xi1>, vector<8x1xf32>
    %591 = vector.broadcast %564 : vector<8x1xi32> to vector<8x8xi32>
    %592 = arith.cmpi sle, %39, %591 : vector<8x8xi32>
    %c256_i32_125 = arith.constant 256 : i32
    %593 = vector.broadcast %c256_i32_125 : i32 to vector<8x8xi32>
    %594 = arith.addi %39, %593 : vector<8x8xi32>
    %595 = vector.broadcast %564 : vector<8x1xi32> to vector<8x8xi32>
    %596 = arith.cmpi slt, %595, %594 : vector<8x8xi32>
    %597 = arith.andi %592, %596 : vector<8x8xi1>
    %598 = arith.extui %597 : vector<8x8xi1> to vector<8x8xi32>
    %599 = arith.sitofp %598 : vector<8x8xi32> to vector<8x8xf32>
    %c0_i32_126 = arith.constant 0 : i32
    %600 = vector.broadcast %c0_i32_126 : i32 to vector<8x8xi32>
    %601 = arith.select %597, %39, %600 : vector<8x8xi1>, vector<8x8xi32>
    %cst_127 = arith.constant dense<0> : vector<8xi32>
    %602 = vector.multi_reduction <add>, %601, %cst_127 [1] : vector<8x8xi32> to vector<8xi32>
    %603 = vector.shape_cast %602 : vector<8xi32> to vector<8x1xi32>
    %604 = arith.subi %564, %603 : vector<8x1xi32>
    %cst_128 = arith.constant dense<0.000000e+00> : vector<8x256xf32>
    %605 = tpu.matmul %599, %33, %cst_128 {dimension_numbers = #tpu.dot_dimension_numbers<[1], [0], [0], [1], [0, 0, 1, 1], [], []>} : vector<8x8xf32>, vector<8x256xf32>, vector<8x256xf32> -> vector<8x256xf32>
    %606 = vector.broadcast %604 : vector<8x1xi32> to vector<8x256xi32>
    %607 = arith.cmpi eq, %40, %606 : vector<8x256xi32>
    %608 = arith.extui %607 : vector<8x256xi1> to vector<8x256xi32>
    %609 = arith.sitofp %608 : vector<8x256xi32> to vector<8x256xf32>
    %610 = arith.mulf %605, %609 : vector<8x256xf32>
    %cst_129 = arith.constant dense<0.000000e+00> : vector<8xf32>
    %611 = vector.multi_reduction <add>, %610, %cst_129 [1] : vector<8x256xf32> to vector<8xf32>
    %612 = vector.shape_cast %611 : vector<8xf32> to vector<8x1xf32>
    %c2048_i32_130 = arith.constant 2048 : i32
    %613 = vector.broadcast %c2048_i32_130 : i32 to vector<8x1xi32>
    %614 = arith.cmpi sge, %564, %613 : vector<8x1xi32>
    %615 = vector.broadcast %37 : f32 to vector<8x1xf32>
    %616 = arith.select %614, %615, %612 : vector<8x1xi1>, vector<8x1xf32>
    %617 = arith.subf %590, %616 : vector<8x1xf32>
    %618 = arith.index_cast %c6_i32 : i32 to index
    %619 = memref.load %arg1[%618] : memref<8xf32, #tpu.memory_space<smem>>
    %620 = vector.broadcast %619 : f32 to vector<8x1xf32>
    %621 = arith.mulf %620, %617 : vector<8x1xf32>
    %622 = arith.addf %539, %621 : vector<8x1xf32>
    %c7_i32_131 = arith.constant 7 : i32
    %623 = arith.sitofp %c7_i32_131 : i32 to f32
    %624 = arith.divf %623, %cst_6 : f32
    %625 = arith.mulf %9, %624 : f32
    %626 = arith.addf %4, %625 : f32
    %c7_i32_132 = arith.constant 7 : i32
    %627 = arith.cmpi eq, %c7_i32_131, %c7_i32_132 : i32
    %cst_133 = arith.constant 1.000000e+00 : f32
    %628 = arith.addf %623, %cst_133 : f32
    %629 = arith.divf %628, %cst_6 : f32
    %630 = arith.mulf %9, %629 : f32
    %631 = arith.addf %4, %630 : f32
    %cst_134 = arith.constant 0x7F800000 : f32
    %632 = arith.select %627, %cst_134, %631 : f32
    %633 = vector.broadcast %626 : f32 to vector<8x256xf32>
    %634 = arith.cmpf oge, %0, %633 : vector<8x256xf32>
    %635 = vector.broadcast %632 : f32 to vector<8x256xf32>
    %636 = arith.cmpf olt, %0, %635 : vector<8x256xf32>
    %637 = arith.andi %634, %636 : vector<8x256xi1>
    %638 = arith.extui %637 : vector<8x256xi1> to vector<8x256xi32>
    %639 = arith.sitofp %638 : vector<8x256xi32> to vector<8x256xf32>
    %cst_135 = arith.constant dense<0.000000e+00> : vector<8xf32>
    %640 = vector.multi_reduction <add>, %639, %cst_135 [1] : vector<8x256xf32> to vector<8xf32>
    %641 = vector.shape_cast %640 : vector<8xf32> to vector<8x1xf32>
    %cst_136 = arith.constant dense<0.000000e+00> : vector<8x256xf32>
    %642 = tpu.matmul %24, %639, %cst_136 {dimension_numbers = #tpu.dot_dimension_numbers<[1], [0], [0], [1], [0, 0, 1, 1], [], []>} : vector<8x8xf32>, vector<8x256xf32>, vector<8x256xf32> -> vector<8x256xf32>
    %cst_137 = arith.constant dense<0.000000e+00> : vector<8xf32>
    %643 = vector.multi_reduction <add>, %642, %cst_137 [1] : vector<8x256xf32> to vector<8xf32>
    %644 = vector.shape_cast %643 : vector<8xf32> to vector<8x1xf32>
    %645 = arith.fptosi %644 : vector<8x1xf32> to vector<8x1xi32>
    %646 = arith.fptosi %641 : vector<8x1xf32> to vector<8x1xi32>
    %647 = arith.subi %645, %646 : vector<8x1xi32>
    %648 = vector.broadcast %645 : vector<8x1xi32> to vector<8x8xi32>
    %649 = arith.cmpi sle, %39, %648 : vector<8x8xi32>
    %c256_i32_138 = arith.constant 256 : i32
    %650 = vector.broadcast %c256_i32_138 : i32 to vector<8x8xi32>
    %651 = arith.addi %39, %650 : vector<8x8xi32>
    %652 = vector.broadcast %645 : vector<8x1xi32> to vector<8x8xi32>
    %653 = arith.cmpi slt, %652, %651 : vector<8x8xi32>
    %654 = arith.andi %649, %653 : vector<8x8xi1>
    %655 = arith.extui %654 : vector<8x8xi1> to vector<8x8xi32>
    %656 = arith.sitofp %655 : vector<8x8xi32> to vector<8x8xf32>
    %c0_i32_139 = arith.constant 0 : i32
    %657 = vector.broadcast %c0_i32_139 : i32 to vector<8x8xi32>
    %658 = arith.select %654, %39, %657 : vector<8x8xi1>, vector<8x8xi32>
    %cst_140 = arith.constant dense<0> : vector<8xi32>
    %659 = vector.multi_reduction <add>, %658, %cst_140 [1] : vector<8x8xi32> to vector<8xi32>
    %660 = vector.shape_cast %659 : vector<8xi32> to vector<8x1xi32>
    %661 = arith.subi %645, %660 : vector<8x1xi32>
    %cst_141 = arith.constant dense<0.000000e+00> : vector<8x256xf32>
    %662 = tpu.matmul %656, %33, %cst_141 {dimension_numbers = #tpu.dot_dimension_numbers<[1], [0], [0], [1], [0, 0, 1, 1], [], []>} : vector<8x8xf32>, vector<8x256xf32>, vector<8x256xf32> -> vector<8x256xf32>
    %663 = vector.broadcast %661 : vector<8x1xi32> to vector<8x256xi32>
    %664 = arith.cmpi eq, %40, %663 : vector<8x256xi32>
    %665 = arith.extui %664 : vector<8x256xi1> to vector<8x256xi32>
    %666 = arith.sitofp %665 : vector<8x256xi32> to vector<8x256xf32>
    %667 = arith.mulf %662, %666 : vector<8x256xf32>
    %cst_142 = arith.constant dense<0.000000e+00> : vector<8xf32>
    %668 = vector.multi_reduction <add>, %667, %cst_142 [1] : vector<8x256xf32> to vector<8xf32>
    %669 = vector.shape_cast %668 : vector<8xf32> to vector<8x1xf32>
    %c2048_i32_143 = arith.constant 2048 : i32
    %670 = vector.broadcast %c2048_i32_143 : i32 to vector<8x1xi32>
    %671 = arith.cmpi sge, %645, %670 : vector<8x1xi32>
    %672 = vector.broadcast %37 : f32 to vector<8x1xf32>
    %673 = arith.select %671, %672, %669 : vector<8x1xi1>, vector<8x1xf32>
    %674 = vector.broadcast %647 : vector<8x1xi32> to vector<8x8xi32>
    %675 = arith.cmpi sle, %39, %674 : vector<8x8xi32>
    %c256_i32_144 = arith.constant 256 : i32
    %676 = vector.broadcast %c256_i32_144 : i32 to vector<8x8xi32>
    %677 = arith.addi %39, %676 : vector<8x8xi32>
    %678 = vector.broadcast %647 : vector<8x1xi32> to vector<8x8xi32>
    %679 = arith.cmpi slt, %678, %677 : vector<8x8xi32>
    %680 = arith.andi %675, %679 : vector<8x8xi1>
    %681 = arith.extui %680 : vector<8x8xi1> to vector<8x8xi32>
    %682 = arith.sitofp %681 : vector<8x8xi32> to vector<8x8xf32>
    %c0_i32_145 = arith.constant 0 : i32
    %683 = vector.broadcast %c0_i32_145 : i32 to vector<8x8xi32>
    %684 = arith.select %680, %39, %683 : vector<8x8xi1>, vector<8x8xi32>
    %cst_146 = arith.constant dense<0> : vector<8xi32>
    %685 = vector.multi_reduction <add>, %684, %cst_146 [1] : vector<8x8xi32> to vector<8xi32>
    %686 = vector.shape_cast %685 : vector<8xi32> to vector<8x1xi32>
    %687 = arith.subi %647, %686 : vector<8x1xi32>
    %cst_147 = arith.constant dense<0.000000e+00> : vector<8x256xf32>
    %688 = tpu.matmul %682, %33, %cst_147 {dimension_numbers = #tpu.dot_dimension_numbers<[1], [0], [0], [1], [0, 0, 1, 1], [], []>} : vector<8x8xf32>, vector<8x256xf32>, vector<8x256xf32> -> vector<8x256xf32>
    %689 = vector.broadcast %687 : vector<8x1xi32> to vector<8x256xi32>
    %690 = arith.cmpi eq, %40, %689 : vector<8x256xi32>
    %691 = arith.extui %690 : vector<8x256xi1> to vector<8x256xi32>
    %692 = arith.sitofp %691 : vector<8x256xi32> to vector<8x256xf32>
    %693 = arith.mulf %688, %692 : vector<8x256xf32>
    %cst_148 = arith.constant dense<0.000000e+00> : vector<8xf32>
    %694 = vector.multi_reduction <add>, %693, %cst_148 [1] : vector<8x256xf32> to vector<8xf32>
    %695 = vector.shape_cast %694 : vector<8xf32> to vector<8x1xf32>
    %c2048_i32_149 = arith.constant 2048 : i32
    %696 = vector.broadcast %c2048_i32_149 : i32 to vector<8x1xi32>
    %697 = arith.cmpi sge, %647, %696 : vector<8x1xi32>
    %698 = vector.broadcast %37 : f32 to vector<8x1xf32>
    %699 = arith.select %697, %698, %695 : vector<8x1xi1>, vector<8x1xf32>
    %700 = arith.subf %673, %699 : vector<8x1xf32>
    %701 = arith.index_cast %c7_i32_131 : i32 to index
    %702 = memref.load %arg1[%701] : memref<8xf32, #tpu.memory_space<smem>>
    %703 = vector.broadcast %702 : f32 to vector<8x1xf32>
    %704 = arith.mulf %703, %700 : vector<8x1xf32>
    %705 = arith.addf %622, %704 : vector<8x1xf32>
    %c8_i32 = arith.constant 8 : i32
    %706 = vector.shape_cast %705 : vector<8x1xf32> to vector<8x1xf32>
    %707 = vector.broadcast %706 : vector<8x1xf32> to vector<8x8xf32>
    %708 = arith.mulf %707, %27 : vector<8x8xf32>
    %cst_150 = arith.constant dense<0.000000e+00> : vector<8xf32>
    %709 = vector.multi_reduction <add>, %708, %cst_150 [0] : vector<8x8xf32> to vector<8xf32>
    %710 = vector.shape_cast %709 : vector<8xf32> to vector<1x8xf32>
    %c0_151 = arith.constant 0 : index
    %c0_152 = arith.constant 0 : index
    %711 = vector.load %arg2[%c0_151, %c0_152] : memref<1x8xf32, #tpu.memory_space<vmem>>, vector<1x8xf32>
    tpu.vector_store %arg2[%c0_151, %c0_152], %710 {strides = array<i32>} : memref<1x8xf32, #tpu.memory_space<vmem>>, vector<1x8xf32>,
    return
  }
}

</mosaic_0001>

<llo_original>
// kernel: tpu_custom_call.1
$region0: #{tpu_custom_call.1}
  #allocation0 [shape = 'u32[]', space=smem, size = 0x4, offset = 0x4, fixed_abs, tag = 'smem constant byte address 0x4 - core index']
  #allocation1 [shape = 'u32[144,128]{1,0:T(1,128)}', space=vmem, size = 0x12000, scoped, tag = 'internal scratch']
  %s0 = inlined_call_operand.hbm [shape: f32[8,256], index: 0, kind: input, shape index: {}]
  %s1 = inlined_call_operand.vmem [shape: f32[8], index: 1, kind: input, shape index: {}]
  %s2 = inlined_call_operand.hbm [shape: f32[1,8], index: 2, kind: output, shape index: {}]
  %s3 = sld [smem:[#allocation0]]
  $region26: #{tpu_custom_call.1} parent=0
    _
  %s5 = ssub.s32 1, %s3
  %s6 = scalar_select 0, %s5, %s3
  $region1: #{tpu_custom_call.1} parent=0
    #allocation2 [shape = 'u8[8192]{0}', space=vmem, size = 0x2000, scoped, tag = 'input window, operand 0, single buffered']
    #allocation3 [shape = 's32[1]{0}', space=sflag, size = 0x4, scoped, tag = 'scoped memory for tpu_custom_call.1']
    #allocation4 [shape = 's32[1]{0}', space=sflag, size = 0x4, scoped, tag = 'scoped memory for tpu_custom_call.1']
    #allocation5 [shape = 's32[1]{0}', space=sflag, size = 0x4, scoped, tag = 'scoped memory for tpu_custom_call.1']
    #allocation6 [shape = 'u8[512]{0}', space=smem, size = 0x200, scoped, tag = 'input window, operand 1, single buffered']
    #allocation7 [shape = 'u8[512]{0}', space=vmem, size = 0x400, scoped, tag = 'output window, operand 0, single buffered']
    %7 = vsyncpa [#allocation3], 0
    %8 = vsyncpa [#allocation5], 0
    %9 = vsyncpa [#allocation4], 0
    // Predicated region
    $region2: #{tpu_custom_call.1} parent=1 // pred_check
      _
    $region3: #{tpu_custom_call.1} parent=1 // pred_check_branch
      %11 = sbr.rel (0) target = $region5
    $region4: #{tpu_custom_call.1} parent=1 // pred_region
      %s13 = ssub.s32 256, 256
      %14 = vsyncadd [#allocation3], %s13
      %s16 = sshll.u32 [#allocation2], 4
      %s17 = int_to_ptr.vmem [resolvable:$true] %s16
      %19 = dma.hbm_to_vmem [thread:$0]  %s0, 256, %s17, [#allocation3]
    $region5: #{tpu_custom_call.1} parent=1 // pred_fallthru
      _
    // Predicated region
    $region6: #{tpu_custom_call.1} parent=1 // pred_check
      _
    $region7: #{tpu_custom_call.1} parent=1 // pred_check_branch
      %21 = sbr.rel (0) target = $region9
    $region8: #{tpu_custom_call.1} parent=1 // pred_region
      %s23 = ssub.s32 16, 16
      %24 = vsyncadd [#allocation5], %s23
      %s26 = sshll.u32 %s1, 4
      %s27 = int_to_ptr.vmem [resolvable:$true] %s26
      %29 = dma.vmem_to_smem %s27, 16, [#allocation6], [#allocation5]
    $region9: #{tpu_custom_call.1} parent=1 // pred_fallthru
      _
    // Predicated region
    $region10: #{tpu_custom_call.1} parent=1 // pred_check
      _
    $region11: #{tpu_custom_call.1} parent=1 // pred_check_branch
      %31 = sbr.rel (0) target = $region13
    $region12: #{tpu_custom_call.1} parent=1 // pred_region
      %32 = dma.done [#allocation3], 256
    $region13: #{tpu_custom_call.1} parent=1 // pred_fallthru
      _
    // Predicated region
    $region14: #{tpu_custom_call.1} parent=1 // pred_check
      _
    $region15: #{tpu_custom_call.1} parent=1 // pred_check_branch
      %34 = sbr.rel (0) target = $region17
    $region16: #{tpu_custom_call.1} parent=1 // pred_region
      %35 = dma.done [#allocation5], 16
    $region17: #{tpu_custom_call.1} parent=1 // pred_fallthru
      _
    %36 = sfence
    %v37 = vld [vmem:[#allocation2] sm:$0xff]
    %v38 = vld [vmem:[#allocation2 + $0x8] sm:$0xff]
    %v39 = vmin.f32 %v37, %v38
    %40 = vmin.xlane.f32.xlu0 %v39
    %v41 = vpop.xlane.xlu0 %40
    %v42 = vrot.slane %v41, 4
    %v43 = vmin.f32 %v41, %v42
    %v44 = vrot.slane %v43, 2
    %v45 = vmin.f32 %v43, %v44
    %v46 = vrot.slane %v45, 1
    %v47 = vmin.f32 %v45, %v46
    %s48 = vtos %v47
    %v49 = vmax.f32 %v37, %v38
    %50 = vmax.xlane.f32.xlu0 %v49
    %v51 = vpop.xlane.xlu0 %50
    %v52 = vrot.slane %v51, 4
    %v53 = vmax.f32 %v51, %v52
    %v54 = vrot.slane %v53, 2
    %v55 = vmax.f32 %v53, %v54
    %v56 = vrot.slane %v55, 1
    %v57 = vmax.f32 %v55, %v56
    %s58 = vtos %v57
    %s59 = ssub.f32 %s58, %s48
    %v60 = vtanh.pop %v37
    %v61 = vtanh.pop %v38
    %v62 = vlaneseq
    %v63 = vshrl.u32 %v62, 7
    %v64 = vadd.s32 %v63, 8
    %v65 = vadd.s32 %v63, 16
    %v66 = vadd.s32 %v63, 24
    %v67 = vadd.s32 %v63, 32
    %v68 = vadd.s32 %v63, 40
    %v69 = vadd.s32 %v63, 48
    %v70 = vadd.s32 %v63, 56
    %v71 = vadd.s32 %v63, 64
    %v72 = vadd.s32 %v63, 72
    %v73 = vadd.s32 %v63, 80
    %v74 = vadd.s32 %v63, 88
    %v75 = vadd.s32 %v63, 96
    %v76 = vadd.s32 %v63, 104
    %v77 = vadd.s32 %v63, 112
    %v78 = vadd.s32 %v63, 120
    %v79 = vadd.s32 %v63, 128
    %v80 = vadd.s32 %v63, 136
    %v81 = vadd.s32 %v63, 144
    %v82 = vadd.s32 %v63, 152
    %v83 = vadd.s32 %v63, 160
    %v84 = vadd.s32 %v63, 168
    %v85 = vadd.s32 %v63, 176
    %v86 = vadd.s32 %v63, 184
    %v87 = vadd.s32 %v63, 192
    %v88 = vadd.s32 %v63, 200
    %v89 = vadd.s32 %v63, 208
    %v90 = vadd.s32 %v63, 216
    %v91 = vadd.s32 %v63, 224
    %v92 = vadd.s32 %v63, 232
    %v93 = vadd.s32 %v63, 240
    %v94 = vadd.s32 %v63, 248
    %v95 = vlaneseq
    %v96 = vand.u32 %v95, 127
    %v97 = vadd.s32 %v96, 128
    %vm98 = vcmp.le.s32.totalorder %v63, %v96
    %vm99 = vcmp.le.s32.totalorder %v63, %v97
    %vm100 = vcmp.le.s32.totalorder %v64, %v96
    %vm101 = vcmp.le.s32.totalorder %v64, %v97
    %vm102 = vcmp.le.s32.totalorder %v65, %v96
    %vm103 = vcmp.le.s32.totalorder %v65, %v97
    %vm104 = vcmp.le.s32.totalorder %v66, %v96
    %vm105 = vcmp.le.s32.totalorder %v66, %v97
    %vm106 = vcmp.le.s32.totalorder %v67, %v96
    %vm107 = vcmp.le.s32.totalorder %v67, %v97
    %vm108 = vcmp.le.s32.totalorder %v68, %v96
    %vm109 = vcmp.le.s32.totalorder %v68, %v97
    %vm110 = vcmp.le.s32.totalorder %v69, %v96
    %vm111 = vcmp.le.s32.totalorder %v69, %v97
    %vm112 = vcmp.le.s32.totalorder %v70, %v96
    %vm113 = vcmp.le.s32.totalorder %v70, %v97
    %vm114 = vcmp.le.s32.totalorder %v71, %v96
    %vm115 = vcmp.le.s32.totalorder %v71, %v97
    %vm116 = vcmp.le.s32.totalorder %v72, %v96
    %vm117 = vcmp.le.s32.totalorder %v72, %v97
    %vm118 = vcmp.le.s32.totalorder %v73, %v96
    %vm119 = vcmp.le.s32.totalorder %v73, %v97
    %vm120 = vcmp.le.s32.totalorder %v74, %v96
    %vm121 = vcmp.le.s32.totalorder %v74, %v97
    %vm122 = vcmp.le.s32.totalorder %v75, %v96
    %vm123 = vcmp.le.s32.totalorder %v75, %v97
    %vm124 = vcmp.le.s32.totalorder %v76, %v96
    %vm125 = vcmp.le.s32.totalorder %v76, %v97
    %vm126 = vcmp.le.s32.totalorder %v77, %v96
    %vm127 = vcmp.le.s32.totalorder %v77, %v97
    %vm128 = vcmp.le.s32.totalorder %v78, %v96
    %vm129 = vcmp.le.s32.totalorder %v78, %v97
    %vm130 = vcmp.le.s32.totalorder %v79, %v96
    %vm131 = vcmp.le.s32.totalorder %v79, %v97
    %vm132 = vcmp.le.s32.totalorder %v80, %v96
    %vm133 = vcmp.le.s32.totalorder %v80, %v97
    %vm134 = vcmp.le.s32.totalorder %v81, %v96
    %vm135 = vcmp.le.s32.totalorder %v81, %v97
    %vm136 = vcmp.le.s32.totalorder %v82, %v96
    %vm137 = vcmp.le.s32.totalorder %v82, %v97
    %vm138 = vcmp.le.s32.totalorder %v83, %v96
    %vm139 = vcmp.le.s32.totalorder %v83, %v97
    %vm140 = vcmp.le.s32.totalorder %v84, %v96
    %vm141 = vcmp.le.s32.totalorder %v84, %v97
    %vm142 = vcmp.le.s32.totalorder %v85, %v96
    %vm143 = vcmp.le.s32.totalorder %v85, %v97
    %vm144 = vcmp.le.s32.totalorder %v86, %v96
    %vm145 = vcmp.le.s32.totalorder %v86, %v97
    %vm146 = vcmp.le.s32.totalorder %v87, %v96
    %vm147 = vcmp.le.s32.totalorder %v87, %v97
    %vm148 = vcmp.le.s32.totalorder %v88, %v96
    %vm149 = vcmp.le.s32.totalorder %v88, %v97
    %vm150 = vcmp.le.s32.totalorder %v89, %v96
    %vm151 = vcmp.le.s32.totalorder %v89, %v97
    %vm152 = vcmp.le.s32.totalorder %v90, %v96
    %vm153 = vcmp.le.s32.totalorder %v90, %v97
    %vm154 = vcmp.le.s32.totalorder %v91, %v96
    %vm155 = vcmp.le.s32.totalorder %v91, %v97
    %vm156 = vcmp.le.s32.totalorder %v92, %v96
    %vm157 = vcmp.le.s32.totalorder %v92, %v97
    %vm158 = vcmp.le.s32.totalorder %v93, %v96
    %vm159 = vcmp.le.s32.totalorder %v93, %v97
    %vm160 = vcmp.le.s32.totalorder %v94, %v96
    %vm161 = vcmp.le.s32.totalorder %v94, %v97
    %v162 = vsel %vm98, 1, 0
    %v163 = vsel %vm99, 1, 0
    %v164 = vsel %vm100, 1, 0
    %v165 = vsel %vm101, 1, 0
    %v166 = vsel %vm102, 1, 0
    %v167 = vsel %vm103, 1, 0
    %v168 = vsel %vm104, 1, 0
    %v169 = vsel %vm105, 1, 0
    %v170 = vsel %vm106, 1, 0
    %v171 = vsel %vm107, 1, 0
    %v172 = vsel %vm108, 1, 0
    %v173 = vsel %vm109, 1, 0
    %v174 = vsel %vm110, 1, 0
    %v175 = vsel %vm111, 1, 0
    %v176 = vsel %vm112, 1, 0
    %v177 = vsel %vm113, 1, 0
    %v178 = vsel %vm114, 1, 0
    %v179 = vsel %vm115, 1, 0
    %v180 = vsel %vm116, 1, 0
    %v181 = vsel %vm117, 1, 0
    %v182 = vsel %vm118, 1, 0
    %v183 = vsel %vm119, 1, 0
    %v184 = vsel %vm120, 1, 0
    %v185 = vsel %vm121, 1, 0
    %v186 = vsel %vm122, 1, 0
    %v187 = vsel %vm123, 1, 0
    %v188 = vsel %vm124, 1, 0
    %v189 = vsel %vm125, 1, 0
    %v190 = vsel %vm126, 1, 0
    %v191 = vsel %vm127, 1, 0
    %v192 = vsel %vm128, 1, 0
    %v193 = vsel %vm129, 1, 0
    %v194 = vsel %vm130, 1, 0
    %v195 = vsel %vm131, 1, 0
    %v196 = vsel %vm132, 1, 0
    %v197 = vsel %vm133, 1, 0
    %v198 = vsel %vm134, 1, 0
    %v199 = vsel %vm135, 1, 0
    %v200 = vsel %vm136, 1, 0
    %v201 = vsel %vm137, 1, 0
    %v202 = vsel %vm138, 1, 0
    %v203 = vsel %vm139, 1, 0
    %v204 = vsel %vm140, 1, 0
    %v205 = vsel %vm141, 1, 0
    %v206 = vsel %vm142, 1, 0
    %v207 = vsel %vm143, 1, 0
    %v208 = vsel %vm144, 1, 0
    %v209 = vsel %vm145, 1, 0
    %v210 = vsel %vm146, 1, 0
    %v211 = vsel %vm147, 1, 0
    %v212 = vsel %vm148, 1, 0
    %v213 = vsel %vm149, 1, 0
    %v214 = vsel %vm150, 1, 0
    %v215 = vsel %vm151, 1, 0
    %v216 = vsel %vm152, 1, 0
    %v217 = vsel %vm153, 1, 0
    %v218 = vsel %vm154, 1, 0
    %v219 = vsel %vm155, 1, 0
    %v220 = vsel %vm156, 1, 0
    %v221 = vsel %vm157, 1, 0
    %v222 = vsel %vm158, 1, 0
    %v223 = vsel %vm159, 1, 0
    %v224 = vsel %vm160, 1, 0
    %v225 = vsel %vm161, 1, 0
    %v226 = vcvt.s32.f32 %v162
    %v227 = vcvt.s32.f32 %v163
    %v228 = vcvt.s32.f32 %v164
    %v229 = vcvt.s32.f32 %v165
    %v230 = vcvt.s32.f32 %v166
    %v231 = vcvt.s32.f32 %v167
    %v232 = vcvt.s32.f32 %v168
    %v233 = vcvt.s32.f32 %v169
    %v234 = vcvt.s32.f32 %v170
    %v235 = vcvt.s32.f32 %v171
    %v236 = vcvt.s32.f32 %v172
    %v237 = vcvt.s32.f32 %v173
    %v238 = vcvt.s32.f32 %v174
    %v239 = vcvt.s32.f32 %v175
    %v240 = vcvt.s32.f32 %v176
    %v241 = vcvt.s32.f32 %v177
    %v242 = vcvt.s32.f32 %v178
    %v243 = vcvt.s32.f32 %v179
    %v244 = vcvt.s32.f32 %v180
    %v245 = vcvt.s32.f32 %v181
    %v246 = vcvt.s32.f32 %v182
    %v247 = vcvt.s32.f32 %v183
    %v248 = vcvt.s32.f32 %v184
    %v249 = vcvt.s32.f32 %v185
    %v250 = vcvt.s32.f32 %v186
    %v251 = vcvt.s32.f32 %v187
    %v252 = vcvt.s32.f32 %v188
    %v253 = vcvt.s32.f32 %v189
    %v254 = vcvt.s32.f32 %v190
    %v255 = vcvt.s32.f32 %v191
    %v256 = vcvt.s32.f32 %v192
    %v257 = vcvt.s32.f32 %v193
    %v258 = vcvt.s32.f32 %v194
    %v259 = vcvt.s32.f32 %v195
    %v260 = vcvt.s32.f32 %v196
    %v261 = vcvt.s32.f32 %v197
    %v262 = vcvt.s32.f32 %v198
    %v263 = vcvt.s32.f32 %v199
    %v264 = vcvt.s32.f32 %v200
    %v265 = vcvt.s32.f32 %v201
    %v266 = vcvt.s32.f32 %v202
    %v267 = vcvt.s32.f32 %v203
    %v268 = vcvt.s32.f32 %v204
    %v269 = vcvt.s32.f32 %v205
    %v270 = vcvt.s32.f32 %v206
    %v271 = vcvt.s32.f32 %v207
    %v272 = vcvt.s32.f32 %v208
    %v273 = vcvt.s32.f32 %v209
    %v274 = vcvt.s32.f32 %v210
    %v275 = vcvt.s32.f32 %v211
    %v276 = vcvt.s32.f32 %v212
    %v277 = vcvt.s32.f32 %v213
    %v278 = vcvt.s32.f32 %v214
    %v279 = vcvt.s32.f32 %v215
    %v280 = vcvt.s32.f32 %v216
    %v281 = vcvt.s32.f32 %v217
    %v282 = vcvt.s32.f32 %v218
    %v283 = vcvt.s32.f32 %v219
    %v284 = vcvt.s32.f32 %v220
    %v285 = vcvt.s32.f32 %v221
    %v286 = vcvt.s32.f32 %v222
    %v287 = vcvt.s32.f32 %v223
    %v288 = vcvt.s32.f32 %v224
    %v289 = vcvt.s32.f32 %v225
    %290 = vmatprep.subr.mxu0 %v227
    %291 = vmatpush1.msra.mxu0 %v226
    %292 = vmatprep.subr.mxu0 %v229
    %293 = vmatpush1.msra.mxu0 %v228
    %294 = vmatprep.subr.mxu0 %v231
    %295 = vmatpush1.msra.mxu0 %v230
    %296 = vmatprep.subr.mxu0 %v233
    %297 = vmatpush1.msra.mxu0 %v232
    %298 = vmatprep.subr.mxu0 %v235
    %299 = vmatpush1.msra.mxu0 %v234
    %300 = vmatprep.subr.mxu0 %v237
    %301 = vmatpush1.msra.mxu0 %v236
    %302 = vmatprep.subr.mxu0 %v239
    %303 = vmatpush1.msra.mxu0 %v238
    %304 = vmatprep.subr.mxu0 %v241
    %305 = vmatpush1.msra.mxu0 %v240
    %306 = vmatprep.subr.mxu0 %v243
    %307 = vmatpush1.msra.mxu0 %v242
    %308 = vmatprep.subr.mxu0 %v245
    %309 = vmatpush1.msra.mxu0 %v244
    %310 = vmatprep.subr.mxu0 %v247
    %311 = vmatpush1.msra.mxu0 %v246
    %312 = vmatprep.subr.mxu0 %v249
    %313 = vmatpush1.msra.mxu0 %v248
    %314 = vmatprep.subr.mxu0 %v251
    %315 = vmatpush1.msra.mxu0 %v250
    %316 = vmatprep.subr.mxu0 %v253
    %317 = vmatpush1.msra.mxu0 %v252
    %318 = vmatprep.subr.mxu0 %v255
    %319 = vmatpush1.msra.mxu0 %v254
    %320 = vmatprep.subr.mxu0 %v257
    %321 = vmatpush1.msra.mxu0 %v256
    %322 = vmatprep.subr.mxu0 %v259
    %323 = vmatpush1.msra.mxu0 %v258
    %324 = vmatprep.subr.mxu0 %v261
    %325 = vmatpush1.msra.mxu0 %v260
    %326 = vmatprep.subr.mxu0 %v263
    %327 = vmatpush1.msra.mxu0 %v262
    %328 = vmatprep.subr.mxu0 %v265
    %329 = vmatpush1.msra.mxu0 %v264
    %330 = vmatprep.subr.mxu0 %v267
    %331 = vmatpush1.msra.mxu0 %v266
    %332 = vmatprep.subr.mxu0 %v269
    %333 = vmatpush1.msra.mxu0 %v268
    %334 = vmatprep.subr.mxu0 %v271
    %335 = vmatpush1.msra.mxu0 %v270
    %336 = vmatprep.subr.mxu0 %v273
    %337 = vmatpush1.msra.mxu0 %v272
    %338 = vmatprep.subr.mxu0 %v275
    %339 = vmatpush1.msra.mxu0 %v274
    %340 = vmatprep.subr.mxu0 %v277
    %341 = vmatpush1.msra.mxu0 %v276
    %342 = vmatprep.subr.mxu0 %v279
    %343 = vmatpush1.msra.mxu0 %v278
    %344 = vmatprep.subr.mxu0 %v281
    %345 = vmatpush1.msra.mxu0 %v280
    %346 = vmatprep.subr.mxu0 %v283
    %347 = vmatpush1.msra.mxu0 %v282
    %348 = vmatprep.subr.mxu0 %v285
    %349 = vmatpush1.msra.mxu0 %v284
    %350 = vmatprep.subr.mxu0 %v287
    %351 = vmatpush1.msra.mxu0 %v286
    %352 = vmatprep.subr.mxu0 %v289
    %353 = vmatpush1.msra.mxu0 %v288
    %354 = vmatprep.mubr.f32.mxu0 %v61
    %355 = vmatmul.mubr.f32.gmra.mrb[0].mxu0 %v60
    %v356 = vpop.f32.mrb[0].mxu0
    %v357 = vadd.f32 0.0, %v356
    %v358 = vpop.f32.mrb[0].mxu0
    %v359 = vadd.f32 0.0, %v358
    %360 = vdwg.mxu0
    %vm361 = vcmp.lt.s32.totalorder %v96, %v63
    %v362 = vsel %vm361, 1, 0
    %v363 = vcvt.s32.f32 %v362
    %vm364 = vcmp.le.s32.totalorder %v96, %v63
    %v365 = vsel %vm364, 1, 0
    %v366 = vcvt.s32.f32 %v365
    %vm367 = vcmp.eq.s32.totalorder %v63, %v96
    %v368 = vsel %vm367, 1, 0
    %v369 = vcvt.s32.f32 %v368
    %371 = vset.pattern.permute.xlu0 127
    %372 = vperm.xlu0 %371, %v359
    %v373 = vpop.permute.xlu0 %372
    %vm375 = vcmask 64512
    %v377 = vsel %vm375, %v363, 0
    %379 = vmatprep.subr.mxu0 %v373
    %380 = vmatpush1.msra.mxu0 %v373
    %381 = vmatprep.subr.mxu0 0.0
    %382 = vmatpush1.msra.mxu0 0.0
    %383 = vmatprep.subr.mxu0 0.0
    %384 = vmatpush1.msra.mxu0 0.0
    %385 = vmatprep.subr.mxu0 0.0
    %386 = vmatpush1.msra.mxu0 0.0
    %387 = vmatprep.subr.mxu0 0.0
    %388 = vmatpush1.msra.mxu0 0.0
    %389 = vmatprep.subr.mxu0 0.0
    %390 = vmatpush1.msra.mxu0 0.0
    %391 = vmatprep.subr.mxu0 0.0
    %392 = vmatpush1.msra.mxu0 0.0
    %393 = vmatprep.subr.mxu0 0.0
    %394 = vmatpush1.msra.mxu0 0.0
    %395 = vmatprep.subr.mxu0 0.0
    %396 = vmatpush1.msra.mxu0 0.0
    %397 = vmatprep.subr.mxu0 0.0
    %398 = vmatpush1.msra.mxu0 0.0
    %399 = vmatprep.subr.mxu0 0.0
    %400 = vmatpush1.msra.mxu0 0.0
    %401 = vmatprep.subr.mxu0 0.0
    %402 = vmatpush1.msra.mxu0 0.0
    %403 = vmatprep.subr.mxu0 0.0
    %404 = vmatpush1.msra.mxu0 0.0
    %405 = vmatprep.subr.mxu0 0.0
    %406 = vmatpush1.msra.mxu0 0.0
    %407 = vmatprep.subr.mxu0 0.0
    %408 = vmatpush1.msra.mxu0 0.0
    %409 = vmatprep.subr.mxu0 0.0
    %410 = vmatpush1.msra.mxu0 0.0
    %411 = vmatprep.subr.mxu0 0.0
    %412 = vmatpush1.msra.mxu0 0.0
    %413 = vmatprep.subr.mxu0 0.0
    %414 = vmatpush1.msra.mxu0 0.0
    %415 = vmatprep.subr.mxu0 0.0
    %416 = vmatpush1.msra.mxu0 0.0
    %417 = vmatprep.subr.mxu0 0.0
    %418 = vmatpush1.msra.mxu0 0.0
    %419 = vmatprep.subr.mxu0 0.0
    %420 = vmatpush1.msra.mxu0 0.0
    %421 = vmatprep.subr.mxu0 0.0
    %422 = vmatpush1.msra.mxu0 0.0
    %423 = vmatprep.subr.mxu0 0.0
    %424 = vmatpush1.msra.mxu0 0.0
    %425 = vmatprep.subr.mxu0 0.0
    %426 = vmatpush1.msra.mxu0 0.0
    %427 = vmatprep.subr.mxu0 0.0
    %428 = vmatpush1.msra.mxu0 0.0
    %429 = vmatprep.subr.mxu0 0.0
    %430 = vmatpush1.msra.mxu0 0.0
    %431 = vmatprep.subr.mxu0 0.0
    %432 = vmatpush1.msra.mxu0 0.0
    %433 = vmatprep.subr.mxu0 0.0
    %434 = vmatpush1.msra.mxu0 0.0
    %435 = vmatprep.subr.mxu0 0.0
    %436 = vmatpush1.msra.mxu0 0.0
    %437 = vmatprep.subr.mxu0 0.0
    %438 = vmatpush1.msra.mxu0 0.0
    %439 = vmatprep.subr.mxu0 0.0
    %440 = vmatpush1.msra.mxu0 0.0
    %441 = vmatprep.subr.mxu0 0.0
    %442 = vmatpush1.msra.mxu0 0.0
    %443 = vmatprep.mubr.f32.mxu0 0.0
    %444 = vmatmul.mubr.f32.gmra.mrb[0].mxu0 %v377
    %v445 = vpop.f32.mrb[0].mxu0
    %v446 = vadd.f32 %v357, %v445
    %v447 = vpop.f32.mrb[0].mxu0
    %v448 = vadd.f32 %v359, %v447
    %449 = vdwg.mxu0
    %v450 = vsub.f32 %v446, %v60
    %v451 = vsub.f32 %v448, %v61
    %v452 = vadd.f32 %v60, %v61
    %453 = vadd.xlane.f32.xlu0 %v452
    %v454 = vpop.xlane.xlu0 %453
    %v455 = vrot.slane %v454, 4
    %v456 = vadd.f32 %v454, %v455
    %v457 = vrot.slane %v456, 2
    %v458 = vadd.f32 %v456, %v457
    %v459 = vrot.slane %v458, 1
    %v460 = vadd.f32 %v458, %v459
    %s461 = vtos %v460
    %v462 = vmul.u32 %v96, 256
    %s463 = smul.f32 %s59, 0.0
    %s464 = sadd.f32 %s48, %s463
    %s465 = smul.f32 %s59, 0.125
    %s466 = sadd.f32 %s48, %s465
    %v467 = vstv %s464
    %vm468 = vcmp.ge.f32.partialorder %v37, %v467
    %vm469 = vcmp.ge.f32.partialorder %v38, %v467
    %v470 = vstv %s466
    %vm471 = vcmp.lt.f32.partialorder %v37, %v470
    %vm472 = vcmp.lt.f32.partialorder %v38, %v470
    %vm473 = vmand %vm468, %vm471
    %vm474 = vmand %vm469, %vm472
    %v475 = vsel %vm473, 1, 0
    %v476 = vsel %vm474, 1, 0
    %v477 = vcvt.s32.f32 %v475
    %v478 = vcvt.s32.f32 %v476
    %v479 = vadd.f32 %v477, %v478
    %480 = vadd.xlane.f32.xlu0 %v479
    %v481 = vpop.xlane.xlu0 %480
    %v483 = vsel %vm375, %v366, 0
    %485 = vmatprep.subr.mxu0 %v478
    %486 = vmatpush1.msra.mxu0 %v477
    %487 = vmatprep.subr.mxu0 0.0
    %488 = vmatpush1.msra.mxu0 0.0
    %489 = vmatprep.subr.mxu0 0.0
    %490 = vmatpush1.msra.mxu0 0.0
    %491 = vmatprep.subr.mxu0 0.0
    %492 = vmatpush1.msra.mxu0 0.0
    %493 = vmatprep.subr.mxu0 0.0
    %494 = vmatpush1.msra.mxu0 0.0
    %495 = vmatprep.subr.mxu0 0.0
    %496 = vmatpush1.msra.mxu0 0.0
    %497 = vmatprep.subr.mxu0 0.0
    %498 = vmatpush1.msra.mxu0 0.0
    %499 = vmatprep.subr.mxu0 0.0
    %500 = vmatpush1.msra.mxu0 0.0
    %501 = vmatprep.subr.mxu0 0.0
    %502 = vmatpush1.msra.mxu0 0.0
    %503 = vmatprep.subr.mxu0 0.0
    %504 = vmatpush1.msra.mxu0 0.0
    %505 = vmatprep.subr.mxu0 0.0
    %506 = vmatpush1.msra.mxu0 0.0
    %507 = vmatprep.subr.mxu0 0.0
    %508 = vmatpush1.msra.mxu0 0.0
    %509 = vmatprep.subr.mxu0 0.0
    %510 = vmatpush1.msra.mxu0 0.0
    %511 = vmatprep.subr.mxu0 0.0
    %512 = vmatpush1.msra.mxu0 0.0
    %513 = vmatprep.subr.mxu0 0.0
    %514 = vmatpush1.msra.mxu0 0.0
    %515 = vmatprep.subr.mxu0 0.0
    %516 = vmatpush1.msra.mxu0 0.0
    %517 = vmatprep.subr.mxu0 0.0
    %518 = vmatpush1.msra.mxu0 0.0
    %519 = vmatprep.subr.mxu0 0.0
    %520 = vmatpush1.msra.mxu0 0.0
    %521 = vmatprep.subr.mxu0 0.0
    %522 = vmatpush1.msra.mxu0 0.0
    %523 = vmatprep.subr.mxu0 0.0
    %524 = vmatpush1.msra.mxu0 0.0
    %525 = vmatprep.subr.mxu0 0.0
    %526 = vmatpush1.msra.mxu0 0.0
    %527 = vmatprep.subr.mxu0 0.0
    %528 = vmatpush1.msra.mxu0 0.0
    %529 = vmatprep.subr.mxu0 0.0
    %530 = vmatpush1.msra.mxu0 0.0
    %531 = vmatprep.subr.mxu0 0.0
    %532 = vmatpush1.msra.mxu0 0.0
    %533 = vmatprep.subr.mxu0 0.0
    %534 = vmatpush1.msra.mxu0 0.0
    %535 = vmatprep.subr.mxu0 0.0
    %536 = vmatpush1.msra.mxu0 0.0
    %537 = vmatprep.subr.mxu0 0.0
    %538 = vmatpush1.msra.mxu0 0.0
    %539 = vmatprep.subr.mxu0 0.0
    %540 = vmatpush1.msra.mxu0 0.0
    %541 = vmatprep.subr.mxu0 0.0
    %542 = vmatpush1.msra.mxu0 0.0
    %543 = vmatprep.subr.mxu0 0.0
    %544 = vmatpush1.msra.mxu0 0.0
    %545 = vmatprep.subr.mxu0 0.0
    %546 = vmatpush1.msra.mxu0 0.0
    %547 = vmatprep.subr.mxu0 0.0
    %548 = vmatpush1.msra.mxu0 0.0
    %549 = vmatprep.mubr.f32.mxu0 0.0
    %550 = vmatmul.mubr.f32.gmra.mrb[0].mxu0 %v483
    %v551 = vpop.f32.mrb[0].mxu0
    %v552 = vadd.f32 0.0, %v551
    %v553 = vpop.f32.mrb[0].mxu0
    %v554 = vadd.f32 0.0, %v553
    %555 = vdwg.mxu0
    %v556 = vadd.f32 %v552, %v554
    %557 = vadd.xlane.f32.xlu0 %v556
    %v558 = vpop.xlane.xlu0 %557
    %v559 = vcvt.f32.s32.to.zero.pseudo %v558
    %v560 = vcvt.f32.s32.to.zero.pseudo %v481
    %v561 = vsub.s32 %v559, %v560
    %vm562 = vcmp.le.s32.totalorder %v462, %v559
    %v563 = vadd.s32 %v462, 256
    %vm564 = vcmp.lt.s32.totalorder %v559, %v563
    %vm565 = vmand %vm562, %vm564
    %v566 = vsel %vm565, 1, 0
    %v567 = vcvt.s32.f32 %v566
    %v568 = vsel %vm565, %v462, 0
    %v569 = vsel %vm375, %v568, 0
    %v570 = vand.u32 %v569, 65535
    %v571 = vshrl.u32 %v569, 16
    %v572 = vcvt.s32.f32 %v570
    %v573 = vcvt.s32.f32 %v571
    %574 = vadd.xlane.f32.xlu0 %v572
    %v575 = vpop.xlane.xlu0 %574
    %576 = vadd.xlane.f32.xlu0 %v573
    %v577 = vpop.xlane.xlu0 %576
    %v578 = vcvt.f32.s32 %v575
    %v579 = vcvt.f32.s32 %v577
    %v580 = vshll.u32 %v579, 16
    %v581 = vadd.s32 %v580, %v578
    %v582 = vsub.s32 %v559, %v581
    %v584 = vsel %vm375, %v567, 0
    %586 = vmatprep.subr.mxu0 %v451
    %587 = vmatpush1.msra.mxu0 %v450
    %588 = vmatprep.subr.mxu0 0.0
    %589 = vmatpush1.msra.mxu0 0.0
    %590 = vmatprep.subr.mxu0 0.0
    %591 = vmatpush1.msra.mxu0 0.0
    %592 = vmatprep.subr.mxu0 0.0
    %593 = vmatpush1.msra.mxu0 0.0
    %594 = vmatprep.subr.mxu0 0.0
    %595 = vmatpush1.msra.mxu0 0.0
    %596 = vmatprep.subr.mxu0 0.0
    %597 = vmatpush1.msra.mxu0 0.0
    %598 = vmatprep.subr.mxu0 0.0
    %599 = vmatpush1.msra.mxu0 0.0
    %600 = vmatprep.subr.mxu0 0.0
    %601 = vmatpush1.msra.mxu0 0.0
    %602 = vmatprep.subr.mxu0 0.0
    %603 = vmatpush1.msra.mxu0 0.0
    %604 = vmatprep.subr.mxu0 0.0
    %605 = vmatpush1.msra.mxu0 0.0
    %606 = vmatprep.subr.mxu0 0.0
    %607 = vmatpush1.msra.mxu0 0.0
    %608 = vmatprep.subr.mxu0 0.0
    %609 = vmatpush1.msra.mxu0 0.0
    %610 = vmatprep.subr.mxu0 0.0
    %611 = vmatpush1.msra.mxu0 0.0
    %612 = vmatprep.subr.mxu0 0.0
    %613 = vmatpush1.msra.mxu0 0.0
    %614 = vmatprep.subr.mxu0 0.0
    %615 = vmatpush1.msra.mxu0 0.0
    %616 = vmatprep.subr.mxu0 0.0
    %617 = vmatpush1.msra.mxu0 0.0
    %618 = vmatprep.subr.mxu0 0.0
    %619 = vmatpush1.msra.mxu0 0.0
    %620 = vmatprep.subr.mxu0 0.0
    %621 = vmatpush1.msra.mxu0 0.0
    %622 = vmatprep.subr.mxu0 0.0
    %623 = vmatpush1.msra.mxu0 0.0
    %624 = vmatprep.subr.mxu0 0.0
    %625 = vmatpush1.msra.mxu0 0.0
    %626 = vmatprep.subr.mxu0 0.0
    %627 = vmatpush1.msra.mxu0 0.0
    %628 = vmatprep.subr.mxu0 0.0
    %629 = vmatpush1.msra.mxu0 0.0
    %630 = vmatprep.subr.mxu0 0.0
    %631 = vmatpush1.msra.mxu0 0.0
    %632 = vmatprep.subr.mxu0 0.0
    %633 = vmatpush1.msra.mxu0 0.0
    %634 = vmatprep.subr.mxu0 0.0
    %635 = vmatpush1.msra.mxu0 0.0
    %636 = vmatprep.subr.mxu0 0.0
    %637 = vmatpush1.msra.mxu0 0.0
    %638 = vmatprep.subr.mxu0 0.0
    %639 = vmatpush1.msra.mxu0 0.0
    %640 = vmatprep.subr.mxu0 0.0
    %641 = vmatpush1.msra.mxu0 0.0
    %642 = vmatprep.subr.mxu0 0.0
    %643 = vmatpush1.msra.mxu0 0.0
    %644 = vmatprep.subr.mxu0 0.0
    %645 = vmatpush1.msra.mxu0 0.0
    %646 = vmatprep.subr.mxu0 0.0
    %647 = vmatpush1.msra.mxu0 0.0
    %648 = vmatprep.subr.mxu0 0.0
    %649 = vmatpush1.msra.mxu0 0.0
    %650 = vmatprep.mubr.f32.mxu0 0.0
    %651 = vmatmul.mubr.f32.gmra.mrb[0].mxu0 %v584
    %v652 = vpop.f32.mrb[0].mxu0
    %v653 = vadd.f32 0.0, %v652
    %v654 = vpop.f32.mrb[0].mxu0
    %v655 = vadd.f32 0.0, %v654
    %656 = vdwg.mxu0
    %vm657 = vcmp.eq.s32.totalorder %v96, %v582
    %vm658 = vcmp.eq.s32.totalorder %v97, %v582
    %v659 = vsel %vm657, 1, 0
    %v660 = vsel %vm658, 1, 0
    %v661 = vcvt.s32.f32 %v659
    %v662 = vcvt.s32.f32 %v660
    %v663 = vmul.f32 %v653, %v661
    %v664 = vmul.f32 %v655, %v662
    %v665 = vadd.f32 %v663, %v664
    %666 = vadd.xlane.f32.xlu0 %v665
    %v667 = vpop.xlane.xlu0 %666
    %vm668 = vcmp.ge.s32.totalorder %v559, 2048
    %v669 = vstv %s461
    %v670 = vsel %vm668, %v669, %v667
    %vm671 = vcmp.le.s32.totalorder %v462, %v561
    %vm672 = vcmp.lt.s32.totalorder %v561, %v563
    %vm673 = vmand %vm671, %vm672
    %v674 = vsel %vm673, 1, 0
    %v675 = vcvt.s32.f32 %v674
    %v676 = vsel %vm673, %v462, 0
    %v677 = vsel %vm375, %v676, 0
    %v678 = vand.u32 %v677, 65535
    %v679 = vshrl.u32 %v677, 16
    %v680 = vcvt.s32.f32 %v678
    %v681 = vcvt.s32.f32 %v679
    %682 = vadd.xlane.f32.xlu0 %v680
    %v683 = vpop.xlane.xlu0 %682
    %684 = vadd.xlane.f32.xlu0 %v681
    %v685 = vpop.xlane.xlu0 %684
    %v686 = vcvt.f32.s32 %v683
    %v687 = vcvt.f32.s32 %v685
    %v688 = vshll.u32 %v687, 16
    %v689 = vadd.s32 %v688, %v686
    %v690 = vsub.s32 %v561, %v689
    %v692 = vsel %vm375, %v675, 0
    %694 = vmatprep.subr.mxu0 %v451
    %695 = vmatpush1.msra.mxu0 %v450
    %696 = vmatprep.subr.mxu0 0.0
    %697 = vmatpush1.msra.mxu0 0.0
    %698 = vmatprep.subr.mxu0 0.0
    %699 = vmatpush1.msra.mxu0 0.0
    %700 = vmatprep.subr.mxu0 0.0
    %701 = vmatpush1.msra.mxu0 0.0
    %702 = vmatprep.subr.mxu0 0.0
    %703 = vmatpush1.msra.mxu0 0.0
    %704 = vmatprep.subr.mxu0 0.0
    %705 = vmatpush1.msra.mxu0 0.0
    %706 = vmatprep.subr.mxu0 0.0
    %707 = vmatpush1.msra.mxu0 0.0
    %708 = vmatprep.subr.mxu0 0.0
    %709 = vmatpush1.msra.mxu0 0.0
    %710 = vmatprep.subr.mxu0 0.0
    %711 = vmatpush1.msra.mxu0 0.0
    %712 = vmatprep.subr.mxu0 0.0
    %713 = vmatpush1.msra.mxu0 0.0
    %714 = vmatprep.subr.mxu0 0.0
    %715 = vmatpush1.msra.mxu0 0.0
    %716 = vmatprep.subr.mxu0 0.0
    %717 = vmatpush1.msra.mxu0 0.0
    %718 = vmatprep.subr.mxu0 0.0
    %719 = vmatpush1.msra.mxu0 0.0
    %720 = vmatprep.subr.mxu0 0.0
    %721 = vmatpush1.msra.mxu0 0.0
    %722 = vmatprep.subr.mxu0 0.0
    %723 = vmatpush1.msra.mxu0 0.0
    %724 = vmatprep.subr.mxu0 0.0
    %725 = vmatpush1.msra.mxu0 0.0
    %726 = vmatprep.subr.mxu0 0.0
    %727 = vmatpush1.msra.mxu0 0.0
    %728 = vmatprep.subr.mxu0 0.0
    %729 = vmatpush1.msra.mxu0 0.0
    %730 = vmatprep.subr.mxu0 0.0
    %731 = vmatpush1.msra.mxu0 0.0
    %732 = vmatprep.subr.mxu0 0.0
    %733 = vmatpush1.msra.mxu0 0.0
    %734 = vmatprep.subr.mxu0 0.0
    %735 = vmatpush1.msra.mxu0 0.0
    %736 = vmatprep.subr.mxu0 0.0
    %737 = vmatpush1.msra.mxu0 0.0
    %738 = vmatprep.subr.mxu0 0.0
    %739 = vmatpush1.msra.mxu0 0.0
    %740 = vmatprep.subr.mxu0 0.0
    %741 = vmatpush1.msra.mxu0 0.0
    %742 = vmatprep.subr.mxu0 0.0
    %743 = vmatpush1.msra.mxu0 0.0
    %744 = vmatprep.subr.mxu0 0.0
    %745 = vmatpush1.msra.mxu0 0.0
    %746 = vmatprep.subr.mxu0 0.0
    %747 = vmatpush1.msra.mxu0 0.0
    %748 = vmatprep.subr.mxu0 0.0
    %749 = vmatpush1.msra.mxu0 0.0
    %750 = vmatprep.subr.mxu0 0.0
    %751 = vmatpush1.msra.mxu0 0.0
    %752 = vmatprep.subr.mxu0 0.0
    %753 = vmatpush1.msra.mxu0 0.0
    %754 = vmatprep.subr.mxu0 0.0
    %755 = vmatpush1.msra.mxu0 0.0
    %756 = vmatprep.subr.mxu0 0.0
    %757 = vmatpush1.msra.mxu0 0.0
    %758 = vmatprep.mubr.f32.mxu0 0.0
    %759 = vmatmul.mubr.f32.gmra.mrb[0].mxu0 %v692
    %v760 = vpop.f32.mrb[0].mxu0
    %v761 = vadd.f32 0.0, %v760
    %v762 = vpop.f32.mrb[0].mxu0
    %v763 = vadd.f32 0.0, %v762
    %764 = vdwg.mxu0
    %vm765 = vcmp.eq.s32.totalorder %v96, %v690
    %vm766 = vcmp.eq.s32.totalorder %v97, %v690
    %v767 = vsel %vm765, 1, 0
    %v768 = vsel %vm766, 1, 0
    %v769 = vcvt.s32.f32 %v767
    %v770 = vcvt.s32.f32 %v768
    %v771 = vmul.f32 %v761, %v769
    %v772 = vmul.f32 %v763, %v770
    %v773 = vadd.f32 %v771, %v772
    %774 = vadd.xlane.f32.xlu0 %v773
    %v775 = vpop.xlane.xlu0 %774
    %vm776 = vcmp.ge.s32.totalorder %v561, 2048
    %v777 = vsel %vm776, %v669, %v775
    %v778 = vsub.f32 %v670, %v777
    %s779 = sld [smem:[#allocation6]]
    %v780 = vstv %s779
    %v781 = vmul.f32 %v780, %v778
    %v782 = vadd.f32 %v781, 0.0
    %s783 = smul.f32 %s59, 0.25
    %s784 = sadd.f32 %s48, %s783
    %vm785 = vcmp.ge.f32.partialorder %v37, %v470
    %vm786 = vcmp.ge.f32.partialorder %v38, %v470
    %v787 = vstv %s784
    %vm788 = vcmp.lt.f32.partialorder %v37, %v787
    %vm789 = vcmp.lt.f32.partialorder %v38, %v787
    %vm790 = vmand %vm785, %vm788
    %vm791 = vmand %vm786, %vm789
    %v792 = vsel %vm790, 1, 0
    %v793 = vsel %vm791, 1, 0
    %v794 = vcvt.s32.f32 %v792
    %v795 = vcvt.s32.f32 %v793
    %v796 = vadd.f32 %v794, %v795
    %797 = vadd.xlane.f32.xlu0 %v796
    %v798 = vpop.xlane.xlu0 %797
    %799 = vmatprep.subr.mxu0 %v795
    %800 = vmatpush1.msra.mxu0 %v794
    %801 = vmatprep.subr.mxu0 0.0
    %802 = vmatpush1.msra.mxu0 0.0
    %803 = vmatprep.subr.mxu0 0.0
    %804 = vmatpush1.msra.mxu0 0.0
    %805 = vmatprep.subr.mxu0 0.0
    %806 = vmatpush1.msra.mxu0 0.0
    %807 = vmatprep.subr.mxu0 0.0
    %808 = vmatpush1.msra.mxu0 0.0
    %809 = vmatprep.subr.mxu0 0.0
    %810 = vmatpush1.msra.mxu0 0.0
    %811 = vmatprep.subr.mxu0 0.0
    %812 = vmatpush1.msra.mxu0 0.0
    %813 = vmatprep.subr.mxu0 0.0
    %814 = vmatpush1.msra.mxu0 0.0
    %815 = vmatprep.subr.mxu0 0.0
    %816 = vmatpush1.msra.mxu0 0.0
    %817 = vmatprep.subr.mxu0 0.0
    %818 = vmatpush1.msra.mxu0 0.0
    %819 = vmatprep.subr.mxu0 0.0
    %820 = vmatpush1.msra.mxu0 0.0
    %821 = vmatprep.subr.mxu0 0.0
    %822 = vmatpush1.msra.mxu0 0.0
    %823 = vmatprep.subr.mxu0 0.0
    %824 = vmatpush1.msra.mxu0 0.0
    %825 = vmatprep.subr.mxu0 0.0
    %826 = vmatpush1.msra.mxu0 0.0
    %827 = vmatprep.subr.mxu0 0.0
    %828 = vmatpush1.msra.mxu0 0.0
    %829 = vmatprep.subr.mxu0 0.0
    %830 = vmatpush1.msra.mxu0 0.0
    %831 = vmatprep.subr.mxu0 0.0
    %832 = vmatpush1.msra.mxu0 0.0
    %833 = vmatprep.subr.mxu0 0.0
    %834 = vmatpush1.msra.mxu0 0.0
    %835 = vmatprep.subr.mxu0 0.0
    %836 = vmatpush1.msra.mxu0 0.0
    %837 = vmatprep.subr.mxu0 0.0
    %838 = vmatpush1.msra.mxu0 0.0
    %839 = vmatprep.subr.mxu0 0.0
    %840 = vmatpush1.msra.mxu0 0.0
    %841 = vmatprep.subr.mxu0 0.0
    %842 = vmatpush1.msra.mxu0 0.0
    %843 = vmatprep.subr.mxu0 0.0
    %844 = vmatpush1.msra.mxu0 0.0
    %845 = vmatprep.subr.mxu0 0.0
    %846 = vmatpush1.msra.mxu0 0.0
    %847 = vmatprep.subr.mxu0 0.0
    %848 = vmatpush1.msra.mxu0 0.0
    %849 = vmatprep.subr.mxu0 0.0
    %850 = vmatpush1.msra.mxu0 0.0
    %851 = vmatprep.subr.mxu0 0.0
    %852 = vmatpush1.msra.mxu0 0.0
    %853 = vmatprep.subr.mxu0 0.0
    %854 = vmatpush1.msra.mxu0 0.0
    %855 = vmatprep.subr.mxu0 0.0
    %856 = vmatpush1.msra.mxu0 0.0
    %857 = vmatprep.subr.mxu0 0.0
    %858 = vmatpush1.msra.mxu0 0.0
    %859 = vmatprep.subr.mxu0 0.0
    %860 = vmatpush1.msra.mxu0 0.0
    %861 = vmatprep.subr.mxu0 0.0
    %862 = vmatpush1.msra.mxu0 0.0
    %863 = vmatprep.mubr.f32.mxu0 0.0
    %864 = vmatmul.mubr.f32.gmra.mrb[0].mxu0 %v483
    %v865 = vpop.f32.mrb[0].mxu0
    %v866 = vadd.f32 0.0, %v865
    %v867 = vpop.f32.mrb[0].mxu0
    %v868 = vadd.f32 0.0, %v867
    %869 = vdwg.mxu0
    %v870 = vadd.f32 %v866, %v868
    %871 = vadd.xlane.f32.xlu0 %v870
    %v872 = vpop.xlane.xlu0 %871
    %v873 = vcvt.f32.s32.to.zero.pseudo %v872
    %v874 = vcvt.f32.s32.to.zero.pseudo %v798
    %v875 = vsub.s32 %v873, %v874
    %vm876 = vcmp.le.s32.totalorder %v462, %v873
    %vm877 = vcmp.lt.s32.totalorder %v873, %v563
    %vm878 = vmand %vm876, %vm877
    %v879 = vsel %vm878, 1, 0
    %v880 = vcvt.s32.f32 %v879
    %v881 = vsel %vm878, %v462, 0
    %v882 = vsel %vm375, %v881, 0
    %v883 = vand.u32 %v882, 65535
    %v884 = vshrl.u32 %v882, 16
    %v885 = vcvt.s32.f32 %v883
    %v886 = vcvt.s32.f32 %v884
    %887 = vadd.xlane.f32.xlu0 %v885
    %v888 = vpop.xlane.xlu0 %887
    %889 = vadd.xlane.f32.xlu0 %v886
    %v890 = vpop.xlane.xlu0 %889
    %v891 = vcvt.f32.s32 %v888
    %v892 = vcvt.f32.s32 %v890
    %v893 = vshll.u32 %v892, 16
    %v894 = vadd.s32 %v893, %v891
    %v895 = vsub.s32 %v873, %v894
    %v897 = vsel %vm375, %v880, 0
    %899 = vmatprep.subr.mxu0 %v451
    %900 = vmatpush1.msra.mxu0 %v450
    %901 = vmatprep.subr.mxu0 0.0
    %902 = vmatpush1.msra.mxu0 0.0
    %903 = vmatprep.subr.mxu0 0.0
    %904 = vmatpush1.msra.mxu0 0.0
    %905 = vmatprep.subr.mxu0 0.0
    %906 = vmatpush1.msra.mxu0 0.0
    %907 = vmatprep.subr.mxu0 0.0
    %908 = vmatpush1.msra.mxu0 0.0
    %909 = vmatprep.subr.mxu0 0.0
    %910 = vmatpush1.msra.mxu0 0.0
    %911 = vmatprep.subr.mxu0 0.0
    %912 = vmatpush1.msra.mxu0 0.0
    %913 = vmatprep.subr.mxu0 0.0
    %914 = vmatpush1.msra.mxu0 0.0
    %915 = vmatprep.subr.mxu0 0.0
    %916 = vmatpush1.msra.mxu0 0.0
    %917 = vmatprep.subr.mxu0 0.0
    %918 = vmatpush1.msra.mxu0 0.0
    %919 = vmatprep.subr.mxu0 0.0
    %920 = vmatpush1.msra.mxu0 0.0
    %921 = vmatprep.subr.mxu0 0.0
    %922 = vmatpush1.msra.mxu0 0.0
    %923 = vmatprep.subr.mxu0 0.0
    %924 = vmatpush1.msra.mxu0 0.0
    %925 = vmatprep.subr.mxu0 0.0
    %926 = vmatpush1.msra.mxu0 0.0
    %927 = vmatprep.subr.mxu0 0.0
    %928 = vmatpush1.msra.mxu0 0.0
    %929 = vmatprep.subr.mxu0 0.0
    %930 = vmatpush1.msra.mxu0 0.0
    %931 = vmatprep.subr.mxu0 0.0
    %932 = vmatpush1.msra.mxu0 0.0
    %933 = vmatprep.subr.mxu0 0.0
    %934 = vmatpush1.msra.mxu0 0.0
    %935 = vmatprep.subr.mxu0 0.0
    %936 = vmatpush1.msra.mxu0 0.0
    %937 = vmatprep.subr.mxu0 0.0
    %938 = vmatpush1.msra.mxu0 0.0
    %939 = vmatprep.subr.mxu0 0.0
    %940 = vmatpush1.msra.mxu0 0.0
    %941 = vmatprep.subr.mxu0 0.0
    %942 = vmatpush1.msra.mxu0 0.0
    %943 = vmatprep.subr.mxu0 0.0
    %944 = vmatpush1.msra.mxu0 0.0
    %945 = vmatprep.subr.mxu0 0.0
    %946 = vmatpush1.msra.mxu0 0.0
    %947 = vmatprep.subr.mxu0 0.0
    %948 = vmatpush1.msra.mxu0 0.0
    %949 = vmatprep.subr.mxu0 0.0
    %950 = vmatpush1.msra.mxu0 0.0
    %951 = vmatprep.subr.mxu0 0.0
    %952 = vmatpush1.msra.mxu0 0.0
    %953 = vmatprep.subr.mxu0 0.0
    %954 = vmatpush1.msra.mxu0 0.0
    %955 = vmatprep.subr.mxu0 0.0
    %956 = vmatpush1.msra.mxu0 0.0
    %957 = vmatprep.subr.mxu0 0.0
    %958 = vmatpush1.msra.mxu0 0.0
    %959 = vmatprep.subr.mxu0 0.0
    %960 = vmatpush1.msra.mxu0 0.0
    %961 = vmatprep.subr.mxu0 0.0
    %962 = vmatpush1.msra.mxu0 0.0
    %963 = vmatprep.mubr.f32.mxu0 0.0
    %964 = vmatmul.mubr.f32.gmra.mrb[0].mxu0 %v897
    %v965 = vpop.f32.mrb[0].mxu0
    %v966 = vadd.f32 0.0, %v965
    %v967 = vpop.f32.mrb[0].mxu0
    %v968 = vadd.f32 0.0, %v967
    %969 = vdwg.mxu0
    %vm970 = vcmp.eq.s32.totalorder %v96, %v895
    %vm971 = vcmp.eq.s32.totalorder %v97, %v895
    %v972 = vsel %vm970, 1, 0
    %v973 = vsel %vm971, 1, 0
    %v974 = vcvt.s32.f32 %v972
    %v975 = vcvt.s32.f32 %v973
    %v976 = vmul.f32 %v966, %v974
    %v977 = vmul.f32 %v968, %v975
    %v978 = vadd.f32 %v976, %v977
    %979 = vadd.xlane.f32.xlu0 %v978
    %v980 = vpop.xlane.xlu0 %979
    %vm981 = vcmp.ge.s32.totalorder %v873, 2048
    %v982 = vsel %vm981, %v669, %v980
    %vm983 = vcmp.le.s32.totalorder %v462, %v875
    %vm984 = vcmp.lt.s32.totalorder %v875, %v563
    %vm985 = vmand %vm983, %vm984
    %v986 = vsel %vm985, 1, 0
    %v987 = vcvt.s32.f32 %v986
    %v988 = vsel %vm985, %v462, 0
    %v989 = vsel %vm375, %v988, 0
    %v990 = vand.u32 %v989, 65535
    %v991 = vshrl.u32 %v989, 16
    %v992 = vcvt.s32.f32 %v990
    %v993 = vcvt.s32.f32 %v991
    %994 = vadd.xlane.f32.xlu0 %v992
    %v995 = vpop.xlane.xlu0 %994
    %996 = vadd.xlane.f32.xlu0 %v993
    %v997 = vpop.xlane.xlu0 %996
    %v998 = vcvt.f32.s32 %v995
    %v999 = vcvt.f32.s32 %v997
    %v1000 = vshll.u32 %v999, 16
    %v1001 = vadd.s32 %v1000, %v998
    %v1002 = vsub.s32 %v875, %v1001
    %v1004 = vsel %vm375, %v987, 0
    %1006 = vmatprep.subr.mxu0 %v451
    %1007 = vmatpush1.msra.mxu0 %v450
    %1008 = vmatprep.subr.mxu0 0.0
    %1009 = vmatpush1.msra.mxu0 0.0
    %1010 = vmatprep.subr.mxu0 0.0
    %1011 = vmatpush1.msra.mxu0 0.0
    %1012 = vmatprep.subr.mxu0 0.0
    %1013 = vmatpush1.msra.mxu0 0.0
    %1014 = vmatprep.subr.mxu0 0.0
    %1015 = vmatpush1.msra.mxu0 0.0
    %1016 = vmatprep.subr.mxu0 0.0
    %1017 = vmatpush1.msra.mxu0 0.0
    %1018 = vmatprep.subr.mxu0 0.0
    %1019 = vmatpush1.msra.mxu0 0.0
    %1020 = vmatprep.subr.mxu0 0.0
    %1021 = vmatpush1.msra.mxu0 0.0
    %1022 = vmatprep.subr.mxu0 0.0
    %1023 = vmatpush1.msra.mxu0 0.0
    %1024 = vmatprep.subr.mxu0 0.0
    %1025 = vmatpush1.msra.mxu0 0.0
    %1026 = vmatprep.subr.mxu0 0.0
    %1027 = vmatpush1.msra.mxu0 0.0
    %1028 = vmatprep.subr.mxu0 0.0
    %1029 = vmatpush1.msra.mxu0 0.0
    %1030 = vmatprep.subr.mxu0 0.0
    %1031 = vmatpush1.msra.mxu0 0.0
    %1032 = vmatprep.subr.mxu0 0.0
    %1033 = vmatpush1.msra.mxu0 0.0
    %1034 = vmatprep.subr.mxu0 0.0
    %1035 = vmatpush1.msra.mxu0 0.0
    %1036 = vmatprep.subr.mxu0 0.0
    %1037 = vmatpush1.msra.mxu0 0.0
    %1038 = vmatprep.subr.mxu0 0.0
    %1039 = vmatpush1.msra.mxu0 0.0
    %1040 = vmatprep.subr.mxu0 0.0
    %1041 = vmatpush1.msra.mxu0 0.0
    %1042 = vmatprep.subr.mxu0 0.0
    %1043 = vmatpush1.msra.mxu0 0.0
    %1044 = vmatprep.subr.mxu0 0.0
    %1045 = vmatpush1.msra.mxu0 0.0
    %1046 = vmatprep.subr.mxu0 0.0
    %1047 = vmatpush1.msra.mxu0 0.0
    %1048 = vmatprep.subr.mxu0 0.0
    %1049 = vmatpush1.msra.mxu0 0.0
    %1050 = vmatprep.subr.mxu0 0.0
    %1051 = vmatpush1.msra.mxu0 0.0
    %1052 = vmatprep.subr.mxu0 0.0
    %1053 = vmatpush1.msra.mxu0 0.0
    %1054 = vmatprep.subr.mxu0 0.0
    %1055 = vmatpush1.msra.mxu0 0.0
    %1056 = vmatprep.subr.mxu0 0.0
    %1057 = vmatpush1.msra.mxu0 0.0
    %1058 = vmatprep.subr.mxu0 0.0
    %1059 = vmatpush1.msra.mxu0 0.0
    %1060 = vmatprep.subr.mxu0 0.0
    %1061 = vmatpush1.msra.mxu0 0.0
    %1062 = vmatprep.subr.mxu0 0.0
    %1063 = vmatpush1.msra.mxu0 0.0
    %1064 = vmatprep.subr.mxu0 0.0
    %1065 = vmatpush1.msra.mxu0 0.0
    %1066 = vmatprep.subr.mxu0 0.0
    %1067 = vmatpush1.msra.mxu0 0.0
    %1068 = vmatprep.subr.mxu0 0.0
    %1069 = vmatpush1.msra.mxu0 0.0
    %1070 = vmatprep.mubr.f32.mxu0 0.0
    %1071 = vmatmul.mubr.f32.gmra.mrb[0].mxu0 %v1004
    %v1072 = vpop.f32.mrb[0].mxu0
    %v1073 = vadd.f32 0.0, %v1072
    %v1074 = vpop.f32.mrb[0].mxu0
    %v1075 = vadd.f32 0.0, %v1074
    %1076 = vdwg.mxu0
    %vm1077 = vcmp.eq.s32.totalorder %v96, %v1002
    %vm1078 = vcmp.eq.s32.totalorder %v97, %v1002
    %v1079 = vsel %vm1077, 1, 0
    %v1080 = vsel %vm1078, 1, 0
    %v1081 = vcvt.s32.f32 %v1079
    %v1082 = vcvt.s32.f32 %v1080
    %v1083 = vmul.f32 %v1073, %v1081
    %v1084 = vmul.f32 %v1075, %v1082
    %v1085 = vadd.f32 %v1083, %v1084
    %1086 = vadd.xlane.f32.xlu0 %v1085
    %v1087 = vpop.xlane.xlu0 %1086
    %vm1088 = vcmp.ge.s32.totalorder %v875, 2048
    %v1089 = vsel %vm1088, %v669, %v1087
    %v1090 = vsub.f32 %v982, %v1089
    %s1091 = sld [smem:[#allocation6 + $0x1]]
    %v1092 = vstv %s1091
    %v1093 = vmul.f32 %v1092, %v1090
    %v1094 = vadd.f32 %v782, %v1093
    %s1095 = smul.f32 %s59, 0.375
    %s1096 = sadd.f32 %s48, %s1095
    %vm1097 = vcmp.ge.f32.partialorder %v37, %v787
    %vm1098 = vcmp.ge.f32.partialorder %v38, %v787
    %v1099 = vstv %s1096
    %vm1100 = vcmp.lt.f32.partialorder %v37, %v1099
    %vm1101 = vcmp.lt.f32.partialorder %v38, %v1099
    %vm1102 = vmand %vm1097, %vm1100
    %vm1103 = vmand %vm1098, %vm1101
    %v1104 = vsel %vm1102, 1, 0
    %v1105 = vsel %vm1103, 1, 0
    %v1106 = vcvt.s32.f32 %v1104
    %v1107 = vcvt.s32.f32 %v1105
    %v1108 = vadd.f32 %v1106, %v1107
    %1109 = vadd.xlane.f32.xlu0 %v1108
    %v1110 = vpop.xlane.xlu0 %1109
    %1111 = vmatprep.subr.mxu0 %v1107
    %1112 = vmatpush1.msra.mxu0 %v1106
    %1113 = vmatprep.subr.mxu0 0.0
    %1114 = vmatpush1.msra.mxu0 0.0
    %1115 = vmatprep.subr.mxu0 0.0
    %1116 = vmatpush1.msra.mxu0 0.0
    %1117 = vmatprep.subr.mxu0 0.0
    %1118 = vmatpush1.msra.mxu0 0.0
    %1119 = vmatprep.subr.mxu0 0.0
    %1120 = vmatpush1.msra.mxu0 0.0
    %1121 = vmatprep.subr.mxu0 0.0
    %1122 = vmatpush1.msra.mxu0 0.0
    %1123 = vmatprep.subr.mxu0 0.0
    %1124 = vmatpush1.msra.mxu0 0.0
    %1125 = vmatprep.subr.mxu0 0.0
    %1126 = vmatpush1.msra.mxu0 0.0
    %1127 = vmatprep.subr.mxu0 0.0
    %1128 = vmatpush1.msra.mxu0 0.0
    %1129 = vmatprep.subr.mxu0 0.0
    %1130 = vmatpush1.msra.mxu0 0.0
    %1131 = vmatprep.subr.mxu0 0.0
    %1132 = vmatpush1.msra.mxu0 0.0
    %1133 = vmatprep.subr.mxu0 0.0
    %1134 = vmatpush1.msra.mxu0 0.0
    %1135 = vmatprep.subr.mxu0 0.0
    %1136 = vmatpush1.msra.mxu0 0.0
    %1137 = vmatprep.subr.mxu0 0.0
    %1138 = vmatpush1.msra.mxu0 0.0
    %1139 = vmatprep.subr.mxu0 0.0
    %1140 = vmatpush1.msra.mxu0 0.0
    %1141 = vmatprep.subr.mxu0 0.0
    %1142 = vmatpush1.msra.mxu0 0.0
    %1143 = vmatprep.subr.mxu0 0.0
    %1144 = vmatpush1.msra.mxu0 0.0
    %1145 = vmatprep.subr.mxu0 0.0
    %1146 = vmatpush1.msra.mxu0 0.0
    %1147 = vmatprep.subr.mxu0 0.0
    %1148 = vmatpush1.msra.mxu0 0.0
    %1149 = vmatprep.subr.mxu0 0.0
    %1150 = vmatpush1.msra.mxu0 0.0
    %1151 = vmatprep.subr.mxu0 0.0
    %1152 = vmatpush1.msra.mxu0 0.0
    %1153 = vmatprep.subr.mxu0 0.0
    %1154 = vmatpush1.msra.mxu0 0.0
    %1155 = vmatprep.subr.mxu0 0.0
    %1156 = vmatpush1.msra.mxu0 0.0
    %1157 = vmatprep.subr.mxu0 0.0
    %1158 = vmatpush1.msra.mxu0 0.0
    %1159 = vmatprep.subr.mxu0 0.0
    %1160 = vmatpush1.msra.mxu0 0.0
    %1161 = vmatprep.subr.mxu0 0.0
    %1162 = vmatpush1.msra.mxu0 0.0
    %1163 = vmatprep.subr.mxu0 0.0
    %1164 = vmatpush1.msra.mxu0 0.0
    %1165 = vmatprep.subr.mxu0 0.0
    %1166 = vmatpush1.msra.mxu0 0.0
    %1167 = vmatprep.subr.mxu0 0.0
    %1168 = vmatpush1.msra.mxu0 0.0
    %1169 = vmatprep.subr.mxu0 0.0
    %1170 = vmatpush1.msra.mxu0 0.0
    %1171 = vmatprep.subr.mxu0 0.0
    %1172 = vmatpush1.msra.mxu0 0.0
    %1173 = vmatprep.subr.mxu0 0.0
    %1174 = vmatpush1.msra.mxu0 0.0
    %1175 = vmatprep.mubr.f32.mxu0 0.0
    %1176 = vmatmul.mubr.f32.gmra.mrb[0].mxu0 %v483
    %v1177 = vpop.f32.mrb[0].mxu0
    %v1178 = vadd.f32 0.0, %v1177
    %v1179 = vpop.f32.mrb[0].mxu0
    %v1180 = vadd.f32 0.0, %v1179
    %1181 = vdwg.mxu0
    %v1182 = vadd.f32 %v1178, %v1180
    %1183 = vadd.xlane.f32.xlu0 %v1182
    %v1184 = vpop.xlane.xlu0 %1183
    %v1185 = vcvt.f32.s32.to.zero.pseudo %v1184
    %v1186 = vcvt.f32.s32.to.zero.pseudo %v1110
    %v1187 = vsub.s32 %v1185, %v1186
    %vm1188 = vcmp.le.s32.totalorder %v462, %v1185
    %vm1189 = vcmp.lt.s32.totalorder %v1185, %v563
    %vm1190 = vmand %vm1188, %vm1189
    %v1191 = vsel %vm1190, 1, 0
    %v1192 = vcvt.s32.f32 %v1191
    %v1193 = vsel %vm1190, %v462, 0
    %v1194 = vsel %vm375, %v1193, 0
    %v1195 = vand.u32 %v1194, 65535
    %v1196 = vshrl.u32 %v1194, 16
    %v1197 = vcvt.s32.f32 %v1195
    %v1198 = vcvt.s32.f32 %v1196
    %1199 = vadd.xlane.f32.xlu0 %v1197
    %v1200 = vpop.xlane.xlu0 %1199
    %1201 = vadd.xlane.f32.xlu0 %v1198
    %v1202 = vpop.xlane.xlu0 %1201
    %v1203 = vcvt.f32.s32 %v1200
    %v1204 = vcvt.f32.s32 %v1202
    %v1205 = vshll.u32 %v1204, 16
    %v1206 = vadd.s32 %v1205, %v1203
    %v1207 = vsub.s32 %v1185, %v1206
    %v1209 = vsel %vm375, %v1192, 0
    %1211 = vmatprep.subr.mxu0 %v451
    %1212 = vmatpush1.msra.mxu0 %v450
    %1213 = vmatprep.subr.mxu0 0.0
    %1214 = vmatpush1.msra.mxu0 0.0
    %1215 = vmatprep.subr.mxu0 0.0
    %1216 = vmatpush1.msra.mxu0 0.0
    %1217 = vmatprep.subr.mxu0 0.0
    %1218 = vmatpush1.msra.mxu0 0.0
    %1219 = vmatprep.subr.mxu0 0.0
    %1220 = vmatpush1.msra.mxu0 0.0
    %1221 = vmatprep.subr.mxu0 0.0
    %1222 = vmatpush1.msra.mxu0 0.0
    %1223 = vmatprep.subr.mxu0 0.0
    %1224 = vmatpush1.msra.mxu0 0.0
    %1225 = vmatprep.subr.mxu0 0.0
    %1226 = vmatpush1.msra.mxu0 0.0
    %1227 = vmatprep.subr.mxu0 0.0
    %1228 = vmatpush1.msra.mxu0 0.0
    %1229 = vmatprep.subr.mxu0 0.0
    %1230 = vmatpush1.msra.mxu0 0.0
    %1231 = vmatprep.subr.mxu0 0.0
    %1232 = vmatpush1.msra.mxu0 0.0
    %1233 = vmatprep.subr.mxu0 0.0
    %1234 = vmatpush1.msra.mxu0 0.0
    %1235 = vmatprep.subr.mxu0 0.0
    %1236 = vmatpush1.msra.mxu0 0.0
    %1237 = vmatprep.subr.mxu0 0.0
    %1238 = vmatpush1.msra.mxu0 0.0
    %1239 = vmatprep.subr.mxu0 0.0
    %1240 = vmatpush1.msra.mxu0 0.0
    %1241 = vmatprep.subr.mxu0 0.0
    %1242 = vmatpush1.msra.mxu0 0.0
    %1243 = vmatprep.subr.mxu0 0.0
    %1244 = vmatpush1.msra.mxu0 0.0
    %1245 = vmatprep.subr.mxu0 0.0
    %1246 = vmatpush1.msra.mxu0 0.0
    %1247 = vmatprep.subr.mxu0 0.0
    %1248 = vmatpush1.msra.mxu0 0.0
    %1249 = vmatprep.subr.mxu0 0.0
    %1250 = vmatpush1.msra.mxu0 0.0
    %1251 = vmatprep.subr.mxu0 0.0
    %1252 = vmatpush1.msra.mxu0 0.0
    %1253 = vmatprep.subr.mxu0 0.0
    %1254 = vmatpush1.msra.mxu0 0.0
    %1255 = vmatprep.subr.mxu0 0.0
    %1256 = vmatpush1.msra.mxu0 0.0
    %1257 = vmatprep.subr.mxu0 0.0
    %1258 = vmatpush1.msra.mxu0 0.0
    %1259 = vmatprep.subr.mxu0 0.0
    %1260 = vmatpush1.msra.mxu0 0.0
    %1261 = vmatprep.subr.mxu0 0.0
    %1262 = vmatpush1.msra.mxu0 0.0
    %1263 = vmatprep.subr.mxu0 0.0
    %1264 = vmatpush1.msra.mxu0 0.0
    %1265 = vmatprep.subr.mxu0 0.0
    %1266 = vmatpush1.msra.mxu0 0.0
    %1267 = vmatprep.subr.mxu0 0.0
    %1268 = vmatpush1.msra.mxu0 0.0
    %1269 = vmatprep.subr.mxu0 0.0
    %1270 = vmatpush1.msra.mxu0 0.0
    %1271 = vmatprep.subr.mxu0 0.0
    %1272 = vmatpush1.msra.mxu0 0.0
    %1273 = vmatprep.subr.mxu0 0.0
    %1274 = vmatpush1.msra.mxu0 0.0
    %1275 = vmatprep.mubr.f32.mxu0 0.0
    %1276 = vmatmul.mubr.f32.gmra.mrb[0].mxu0 %v1209
    %v1277 = vpop.f32.mrb[0].mxu0
    %v1278 = vadd.f32 0.0, %v1277
    %v1279 = vpop.f32.mrb[0].mxu0
    %v1280 = vadd.f32 0.0, %v1279
    %1281 = vdwg.mxu0
    %vm1282 = vcmp.eq.s32.totalorder %v96, %v1207
    %vm1283 = vcmp.eq.s32.totalorder %v97, %v1207
    %v1284 = vsel %vm1282, 1, 0
    %v1285 = vsel %vm1283, 1, 0
    %v1286 = vcvt.s32.f32 %v1284
    %v1287 = vcvt.s32.f32 %v1285
    %v1288 = vmul.f32 %v1278, %v1286
    %v1289 = vmul.f32 %v1280, %v1287
    %v1290 = vadd.f32 %v1288, %v1289
    %1291 = vadd.xlane.f32.xlu0 %v1290
    %v1292 = vpop.xlane.xlu0 %1291
    %vm1293 = vcmp.ge.s32.totalorder %v1185, 2048
    %v1294 = vsel %vm1293, %v669, %v1292
    %vm1295 = vcmp.le.s32.totalorder %v462, %v1187
    %vm1296 = vcmp.lt.s32.totalorder %v1187, %v563
    %vm1297 = vmand %vm1295, %vm1296
    %v1298 = vsel %vm1297, 1, 0
    %v1299 = vcvt.s32.f32 %v1298
    %v1300 = vsel %vm1297, %v462, 0
    %v1301 = vsel %vm375, %v1300, 0
    %v1302 = vand.u32 %v1301, 65535
    %v1303 = vshrl.u32 %v1301, 16
    %v1304 = vcvt.s32.f32 %v1302
    %v1305 = vcvt.s32.f32 %v1303
    %1306 = vadd.xlane.f32.xlu0 %v1304
    %v1307 = vpop.xlane.xlu0 %1306
    %1308 = vadd.xlane.f32.xlu0 %v1305
    %v1309 = vpop.xlane.xlu0 %1308
    %v1310 = vcvt.f32.s32 %v1307
    %v1311 = vcvt.f32.s32 %v1309
    %v1312 = vshll.u32 %v1311, 16
    %v1313 = vadd.s32 %v1312, %v1310
    %v1314 = vsub.s32 %v1187, %v1313
    %v1316 = vsel %vm375, %v1299, 0
    %1318 = vmatprep.subr.mxu0 %v451
    %1319 = vmatpush1.msra.mxu0 %v450
    %1320 = vmatprep.subr.mxu0 0.0
    %1321 = vmatpush1.msra.mxu0 0.0
    %1322 = vmatprep.subr.mxu0 0.0
    %1323 = vmatpush1.msra.mxu0 0.0
    %1324 = vmatprep.subr.mxu0 0.0
    %1325 = vmatpush1.msra.mxu0 0.0
    %1326 = vmatprep.subr.mxu0 0.0
    %1327 = vmatpush1.msra.mxu0 0.0
    %1328 = vmatprep.subr.mxu0 0.0
    %1329 = vmatpush1.msra.mxu0 0.0
    %1330 = vmatprep.subr.mxu0 0.0
    %1331 = vmatpush1.msra.mxu0 0.0
    %1332 = vmatprep.subr.mxu0 0.0
    %1333 = vmatpush1.msra.mxu0 0.0
    %1334 = vmatprep.subr.mxu0 0.0
    %1335 = vmatpush1.msra.mxu0 0.0
    %1336 = vmatprep.subr.mxu0 0.0
    %1337 = vmatpush1.msra.mxu0 0.0
    %1338 = vmatprep.subr.mxu0 0.0
    %1339 = vmatpush1.msra.mxu0 0.0
    %1340 = vmatprep.subr.mxu0 0.0
    %1341 = vmatpush1.msra.mxu0 0.0
    %1342 = vmatprep.subr.mxu0 0.0
    %1343 = vmatpush1.msra.mxu0 0.0
    %1344 = vmatprep.subr.mxu0 0.0
    %1345 = vmatpush1.msra.mxu0 0.0
    %1346 = vmatprep.subr.mxu0 0.0
    %1347 = vmatpush1.msra.mxu0 0.0
    %1348 = vmatprep.subr.mxu0 0.0
    %1349 = vmatpush1.msra.mxu0 0.0
    %1350 = vmatprep.subr.mxu0 0.0
    %1351 = vmatpush1.msra.mxu0 0.0
    %1352 = vmatprep.subr.mxu0 0.0
    %1353 = vmatpush1.msra.mxu0 0.0
    %1354 = vmatprep.subr.mxu0 0.0
    %1355 = vmatpush1.msra.mxu0 0.0
    %1356 = vmatprep.subr.mxu0 0.0
    %1357 = vmatpush1.msra.mxu0 0.0
    %1358 = vmatprep.subr.mxu0 0.0
    %1359 = vmatpush1.msra.mxu0 0.0
    %1360 = vmatprep.subr.mxu0 0.0
    %1361 = vmatpush1.msra.mxu0 0.0
    %1362 = vmatprep.subr.mxu0 0.0
    %1363 = vmatpush1.msra.mxu0 0.0
    %1364 = vmatprep.subr.mxu0 0.0
    %1365 = vmatpush1.msra.mxu0 0.0
    %1366 = vmatprep.subr.mxu0 0.0
    %1367 = vmatpush1.msra.mxu0 0.0
    %1368 = vmatprep.subr.mxu0 0.0
    %1369 = vmatpush1.msra.mxu0 0.0
    %1370 = vmatprep.subr.mxu0 0.0
    %1371 = vmatpush1.msra.mxu0 0.0
    %1372 = vmatprep.subr.mxu0 0.0
    %1373 = vmatpush1.msra.mxu0 0.0
    %1374 = vmatprep.subr.mxu0 0.0
    %1375 = vmatpush1.msra.mxu0 0.0
    %1376 = vmatprep.subr.mxu0 0.0
    %1377 = vmatpush1.msra.mxu0 0.0
    %1378 = vmatprep.subr.mxu0 0.0
    %1379 = vmatpush1.msra.mxu0 0.0
    %1380 = vmatprep.subr.mxu0 0.0
    %1381 = vmatpush1.msra.mxu0 0.0
    %1382 = vmatprep.mubr.f32.mxu0 0.0
    %1383 = vmatmul.mubr.f32.gmra.mrb[0].mxu0 %v1316
    %v1384 = vpop.f32.mrb[0].mxu0
    %v1385 = vadd.f32 0.0, %v1384
    %v1386 = vpop.f32.mrb[0].mxu0
    %v1387 = vadd.f32 0.0, %v1386
    %1388 = vdwg.mxu0
    %vm1389 = vcmp.eq.s32.totalorder %v96, %v1314
    %vm1390 = vcmp.eq.s32.totalorder %v97, %v1314
    %v1391 = vsel %vm1389, 1, 0
    %v1392 = vsel %vm1390, 1, 0
    %v1393 = vcvt.s32.f32 %v1391
    %v1394 = vcvt.s32.f32 %v1392
    %v1395 = vmul.f32 %v1385, %v1393
    %v1396 = vmul.f32 %v1387, %v1394
    %v1397 = vadd.f32 %v1395, %v1396
    %1398 = vadd.xlane.f32.xlu0 %v1397
    %v1399 = vpop.xlane.xlu0 %1398
    %vm1400 = vcmp.ge.s32.totalorder %v1187, 2048
    %v1401 = vsel %vm1400, %v669, %v1399
    %v1402 = vsub.f32 %v1294, %v1401
    %s1403 = sld [smem:[#allocation6 + $0x2]]
    %v1404 = vstv %s1403
    %v1405 = vmul.f32 %v1404, %v1402
    %v1406 = vadd.f32 %v1094, %v1405
    %s1407 = smul.f32 %s59, 0.5
    %s1408 = sadd.f32 %s48, %s1407
    %vm1409 = vcmp.ge.f32.partialorder %v37, %v1099
    %vm1410 = vcmp.ge.f32.partialorder %v38, %v1099
    %v1411 = vstv %s1408
    %vm1412 = vcmp.lt.f32.partialorder %v37, %v1411
    %vm1413 = vcmp.lt.f32.partialorder %v38, %v1411
    %vm1414 = vmand %vm1409, %vm1412
    %vm1415 = vmand %vm1410, %vm1413
    %v1416 = vsel %vm1414, 1, 0
    %v1417 = vsel %vm1415, 1, 0
    %v1418 = vcvt.s32.f32 %v1416
    %v1419 = vcvt.s32.f32 %v1417
    %v1420 = vadd.f32 %v1418, %v1419
    %1421 = vadd.xlane.f32.xlu0 %v1420
    %v1422 = vpop.xlane.xlu0 %1421
    %1423 = vmatprep.subr.mxu0 %v1419
    %1424 = vmatpush1.msra.mxu0 %v1418
    %1425 = vmatprep.subr.mxu0 0.0
    %1426 = vmatpush1.msra.mxu0 0.0
    %1427 = vmatprep.subr.mxu0 0.0
    %1428 = vmatpush1.msra.mxu0 0.0
    %1429 = vmatprep.subr.mxu0 0.0
    %1430 = vmatpush1.msra.mxu0 0.0
    %1431 = vmatprep.subr.mxu0 0.0
    %1432 = vmatpush1.msra.mxu0 0.0
    %1433 = vmatprep.subr.mxu0 0.0
    %1434 = vmatpush1.msra.mxu0 0.0
    %1435 = vmatprep.subr.mxu0 0.0
    %1436 = vmatpush1.msra.mxu0 0.0
    %1437 = vmatprep.subr.mxu0 0.0
    %1438 = vmatpush1.msra.mxu0 0.0
    %1439 = vmatprep.subr.mxu0 0.0
    %1440 = vmatpush1.msra.mxu0 0.0
    %1441 = vmatprep.subr.mxu0 0.0
    %1442 = vmatpush1.msra.mxu0 0.0
    %1443 = vmatprep.subr.mxu0 0.0
    %1444 = vmatpush1.msra.mxu0 0.0
    %1445 = vmatprep.subr.mxu0 0.0
    %1446 = vmatpush1.msra.mxu0 0.0
    %1447 = vmatprep.subr.mxu0 0.0
    %1448 = vmatpush1.msra.mxu0 0.0
    %1449 = vmatprep.subr.mxu0 0.0
    %1450 = vmatpush1.msra.mxu0 0.0
    %1451 = vmatprep.subr.mxu0 0.0
    %1452 = vmatpush1.msra.mxu0 0.0
    %1453 = vmatprep.subr.mxu0 0.0
    %1454 = vmatpush1.msra.mxu0 0.0
    %1455 = vmatprep.subr.mxu0 0.0
    %1456 = vmatpush1.msra.mxu0 0.0
    %1457 = vmatprep.subr.mxu0 0.0
    %1458 = vmatpush1.msra.mxu0 0.0
    %1459 = vmatprep.subr.mxu0 0.0
    %1460 = vmatpush1.msra.mxu0 0.0
    %1461 = vmatprep.subr.mxu0 0.0
    %1462 = vmatpush1.msra.mxu0 0.0
    %1463 = vmatprep.subr.mxu0 0.0
    %1464 = vmatpush1.msra.mxu0 0.0
    %1465 = vmatprep.subr.mxu0 0.0
    %1466 = vmatpush1.msra.mxu0 0.0
    %1467 = vmatprep.subr.mxu0 0.0
    %1468 = vmatpush1.msra.mxu0 0.0
    %1469 = vmatprep.subr.mxu0 0.0
    %1470 = vmatpush1.msra.mxu0 0.0
    %1471 = vmatprep.subr.mxu0 0.0
    %1472 = vmatpush1.msra.mxu0 0.0
    %1473 = vmatprep.subr.mxu0 0.0
    %1474 = vmatpush1.msra.mxu0 0.0
    %1475 = vmatprep.subr.mxu0 0.0
    %1476 = vmatpush1.msra.mxu0 0.0
    %1477 = vmatprep.subr.mxu0 0.0
    %1478 = vmatpush1.msra.mxu0 0.0
    %1479 = vmatprep.subr.mxu0 0.0
    %1480 = vmatpush1.msra.mxu0 0.0
    %1481 = vmatprep.subr.mxu0 0.0
    %1482 = vmatpush1.msra.mxu0 0.0
    %1483 = vmatprep.subr.mxu0 0.0
    %1484 = vmatpush1.msra.mxu0 0.0
    %1485 = vmatprep.subr.mxu0 0.0
    %1486 = vmatpush1.msra.mxu0 0.0
    %1487 = vmatprep.mubr.f32.mxu0 0.0
    %1488 = vmatmul.mubr.f32.gmra.mrb[0].mxu0 %v483
    %v1489 = vpop.f32.mrb[0].mxu0
    %v1490 = vadd.f32 0.0, %v1489
    %v1491 = vpop.f32.mrb[0].mxu0
    %v1492 = vadd.f32 0.0, %v1491
    %1493 = vdwg.mxu0
    %v1494 = vadd.f32 %v1490, %v1492
    %1495 = vadd.xlane.f32.xlu0 %v1494
    %v1496 = vpop.xlane.xlu0 %1495
    %v1497 = vcvt.f32.s32.to.zero.pseudo %v1496
    %v1498 = vcvt.f32.s32.to.zero.pseudo %v1422
    %v1499 = vsub.s32 %v1497, %v1498
    %vm1500 = vcmp.le.s32.totalorder %v462, %v1497
    %vm1501 = vcmp.lt.s32.totalorder %v1497, %v563
    %vm1502 = vmand %vm1500, %vm1501
    %v1503 = vsel %vm1502, 1, 0
    %v1504 = vcvt.s32.f32 %v1503
    %v1505 = vsel %vm1502, %v462, 0
    %v1506 = vsel %vm375, %v1505, 0
    %v1507 = vand.u32 %v1506, 65535
    %v1508 = vshrl.u32 %v1506, 16
    %v1509 = vcvt.s32.f32 %v1507
    %v1510 = vcvt.s32.f32 %v1508
    %1511 = vadd.xlane.f32.xlu0 %v1509
    %v1512 = vpop.xlane.xlu0 %1511
    %1513 = vadd.xlane.f32.xlu0 %v1510
    %v1514 = vpop.xlane.xlu0 %1513
    %v1515 = vcvt.f32.s32 %v1512
    %v1516 = vcvt.f32.s32 %v1514
    %v1517 = vshll.u32 %v1516, 16
    %v1518 = vadd.s32 %v1517, %v1515
    %v1519 = vsub.s32 %v1497, %v1518
    %v1521 = vsel %vm375, %v1504, 0
    %1523 = vmatprep.subr.mxu0 %v451
    %1524 = vmatpush1.msra.mxu0 %v450
    %1525 = vmatprep.subr.mxu0 0.0
    %1526 = vmatpush1.msra.mxu0 0.0
    %1527 = vmatprep.subr.mxu0 0.0
    %1528 = vmatpush1.msra.mxu0 0.0
    %1529 = vmatprep.subr.mxu0 0.0
    %1530 = vmatpush1.msra.mxu0 0.0
    %1531 = vmatprep.subr.mxu0 0.0
    %1532 = vmatpush1.msra.mxu0 0.0
    %1533 = vmatprep.subr.mxu0 0.0
    %1534 = vmatpush1.msra.mxu0 0.0
    %1535 = vmatprep.subr.mxu0 0.0
    %1536 = vmatpush1.msra.mxu0 0.0
    %1537 = vmatprep.subr.mxu0 0.0
    %1538 = vmatpush1.msra.mxu0 0.0
    %1539 = vmatprep.subr.mxu0 0.0
    %1540 = vmatpush1.msra.mxu0 0.0
    %1541 = vmatprep.subr.mxu0 0.0
    %1542 = vmatpush1.msra.mxu0 0.0
    %1543 = vmatprep.subr.mxu0 0.0
    %1544 = vmatpush1.msra.mxu0 0.0
    %1545 = vmatprep.subr.mxu0 0.0
    %1546 = vmatpush1.msra.mxu0 0.0
    %1547 = vmatprep.subr.mxu0 0.0
    %1548 = vmatpush1.msra.mxu0 0.0
    %1549 = vmatprep.subr.mxu0 0.0
    %1550 = vmatpush1.msra.mxu0 0.0
    %1551 = vmatprep.subr.mxu0 0.0
    %1552 = vmatpush1.msra.mxu0 0.0
    %1553 = vmatprep.subr.mxu0 0.0
    %1554 = vmatpush1.msra.mxu0 0.0
    %1555 = vmatprep.subr.mxu0 0.0
    %1556 = vmatpush1.msra.mxu0 0.0
    %1557 = vmatprep.subr.mxu0 0.0
    %1558 = vmatpush1.msra.mxu0 0.0
    %1559 = vmatprep.subr.mxu0 0.0
    %1560 = vmatpush1.msra.mxu0 0.0
    %1561 = vmatprep.subr.mxu0 0.0
    %1562 = vmatpush1.msra.mxu0 0.0
    %1563 = vmatprep.subr.mxu0 0.0
    %1564 = vmatpush1.msra.mxu0 0.0
    %1565 = vmatprep.subr.mxu0 0.0
    %1566 = vmatpush1.msra.mxu0 0.0
    %1567 = vmatprep.subr.mxu0 0.0
    %1568 = vmatpush1.msra.mxu0 0.0
    %1569 = vmatprep.subr.mxu0 0.0
    %1570 = vmatpush1.msra.mxu0 0.0
    %1571 = vmatprep.subr.mxu0 0.0
    %1572 = vmatpush1.msra.mxu0 0.0
    %1573 = vmatprep.subr.mxu0 0.0
    %1574 = vmatpush1.msra.mxu0 0.0
    %1575 = vmatprep.subr.mxu0 0.0
    %1576 = vmatpush1.msra.mxu0 0.0
    %1577 = vmatprep.subr.mxu0 0.0
    %1578 = vmatpush1.msra.mxu0 0.0
    %1579 = vmatprep.subr.mxu0 0.0
    %1580 = vmatpush1.msra.mxu0 0.0
    %1581 = vmatprep.subr.mxu0 0.0
    %1582 = vmatpush1.msra.mxu0 0.0
    %1583 = vmatprep.subr.mxu0 0.0
    %1584 = vmatpush1.msra.mxu0 0.0
    %1585 = vmatprep.subr.mxu0 0.0
    %1586 = vmatpush1.msra.mxu0 0.0
    %1587 = vmatprep.mubr.f32.mxu0 0.0
    %1588 = vmatmul.mubr.f32.gmra.mrb[0].mxu0 %v1521
    %v1589 = vpop.f32.mrb[0].mxu0
    %v1590 = vadd.f32 0.0, %v1589
    %v1591 = vpop.f32.mrb[0].mxu0
    %v1592 = vadd.f32 0.0, %v1591
    %1593 = vdwg.mxu0
    %vm1594 = vcmp.eq.s32.totalorder %v96, %v1519
    %vm1595 = vcmp.eq.s32.totalorder %v97, %v1519
    %v1596 = vsel %vm1594, 1, 0
    %v1597 = vsel %vm1595, 1, 0
    %v1598 = vcvt.s32.f32 %v1596
    %v1599 = vcvt.s32.f32 %v1597
    %v1600 = vmul.f32 %v1590, %v1598
    %v1601 = vmul.f32 %v1592, %v1599
    %v1602 = vadd.f32 %v1600, %v1601
    %1603 = vadd.xlane.f32.xlu0 %v1602
    %v1604 = vpop.xlane.xlu0 %1603
    %vm1605 = vcmp.ge.s32.totalorder %v1497, 2048
    %v1606 = vsel %vm1605, %v669, %v1604
    %vm1607 = vcmp.le.s32.totalorder %v462, %v1499
    %vm1608 = vcmp.lt.s32.totalorder %v1499, %v563
    %vm1609 = vmand %vm1607, %vm1608
    %v1610 = vsel %vm1609, 1, 0
    %v1611 = vcvt.s32.f32 %v1610
    %v1612 = vsel %vm1609, %v462, 0
    %v1613 = vsel %vm375, %v1612, 0
    %v1614 = vand.u32 %v1613, 65535
    %v1615 = vshrl.u32 %v1613, 16
    %v1616 = vcvt.s32.f32 %v1614
    %v1617 = vcvt.s32.f32 %v1615
    %1618 = vadd.xlane.f32.xlu0 %v1616
    %v1619 = vpop.xlane.xlu0 %1618
    %1620 = vadd.xlane.f32.xlu0 %v1617
    %v1621 = vpop.xlane.xlu0 %1620
    %v1622 = vcvt.f32.s32 %v1619
    %v1623 = vcvt.f32.s32 %v1621
    %v1624 = vshll.u32 %v1623, 16
    %v1625 = vadd.s32 %v1624, %v1622
    %v1626 = vsub.s32 %v1499, %v1625
    %v1628 = vsel %vm375, %v1611, 0
    %1630 = vmatprep.subr.mxu0 %v451
    %1631 = vmatpush1.msra.mxu0 %v450
    %1632 = vmatprep.subr.mxu0 0.0
    %1633 = vmatpush1.msra.mxu0 0.0
    %1634 = vmatprep.subr.mxu0 0.0
    %1635 = vmatpush1.msra.mxu0 0.0
    %1636 = vmatprep.subr.mxu0 0.0
    %1637 = vmatpush1.msra.mxu0 0.0
    %1638 = vmatprep.subr.mxu0 0.0
    %1639 = vmatpush1.msra.mxu0 0.0
    %1640 = vmatprep.subr.mxu0 0.0
    %1641 = vmatpush1.msra.mxu0 0.0
    %1642 = vmatprep.subr.mxu0 0.0
    %1643 = vmatpush1.msra.mxu0 0.0
    %1644 = vmatprep.subr.mxu0 0.0
    %1645 = vmatpush1.msra.mxu0 0.0
    %1646 = vmatprep.subr.mxu0 0.0
    %1647 = vmatpush1.msra.mxu0 0.0
    %1648 = vmatprep.subr.mxu0 0.0
    %1649 = vmatpush1.msra.mxu0 0.0
    %1650 = vmatprep.subr.mxu0 0.0
    %1651 = vmatpush1.msra.mxu0 0.0
    %1652 = vmatprep.subr.mxu0 0.0
    %1653 = vmatpush1.msra.mxu0 0.0
    %1654 = vmatprep.subr.mxu0 0.0
    %1655 = vmatpush1.msra.mxu0 0.0
    %1656 = vmatprep.subr.mxu0 0.0
    %1657 = vmatpush1.msra.mxu0 0.0
    %1658 = vmatprep.subr.mxu0 0.0
    %1659 = vmatpush1.msra.mxu0 0.0
    %1660 = vmatprep.subr.mxu0 0.0
    %1661 = vmatpush1.msra.mxu0 0.0
    %1662 = vmatprep.subr.mxu0 0.0
    %1663 = vmatpush1.msra.mxu0 0.0
    %1664 = vmatprep.subr.mxu0 0.0
    %1665 = vmatpush1.msra.mxu0 0.0
    %1666 = vmatprep.subr.mxu0 0.0
    %1667 = vmatpush1.msra.mxu0 0.0
    %1668 = vmatprep.subr.mxu0 0.0
    %1669 = vmatpush1.msra.mxu0 0.0
    %1670 = vmatprep.subr.mxu0 0.0
    %1671 = vmatpush1.msra.mxu0 0.0
    %1672 = vmatprep.subr.mxu0 0.0
    %1673 = vmatpush1.msra.mxu0 0.0
    %1674 = vmatprep.subr.mxu0 0.0
    %1675 = vmatpush1.msra.mxu0 0.0
    %1676 = vmatprep.subr.mxu0 0.0
    %1677 = vmatpush1.msra.mxu0 0.0
    %1678 = vmatprep.subr.mxu0 0.0
    %1679 = vmatpush1.msra.mxu0 0.0
    %1680 = vmatprep.subr.mxu0 0.0
    %1681 = vmatpush1.msra.mxu0 0.0
    %1682 = vmatprep.subr.mxu0 0.0
    %1683 = vmatpush1.msra.mxu0 0.0
    %1684 = vmatprep.subr.mxu0 0.0
    %1685 = vmatpush1.msra.mxu0 0.0
    %1686 = vmatprep.subr.mxu0 0.0
    %1687 = vmatpush1.msra.mxu0 0.0
    %1688 = vmatprep.subr.mxu0 0.0
    %1689 = vmatpush1.msra.mxu0 0.0
    %1690 = vmatprep.subr.mxu0 0.0
    %1691 = vmatpush1.msra.mxu0 0.0
    %1692 = vmatprep.subr.mxu0 0.0
    %1693 = vmatpush1.msra.mxu0 0.0
    %1694 = vmatprep.mubr.f32.mxu0 0.0
    %1695 = vmatmul.mubr.f32.gmra.mrb[0].mxu0 %v1628
    %v1696 = vpop.f32.mrb[0].mxu0
    %v1697 = vadd.f32 0.0, %v1696
    %v1698 = vpop.f32.mrb[0].mxu0
    %v1699 = vadd.f32 0.0, %v1698
    %1700 = vdwg.mxu0
    %vm1701 = vcmp.eq.s32.totalorder %v96, %v1626
    %vm1702 = vcmp.eq.s32.totalorder %v97, %v1626
    %v1703 = vsel %vm1701, 1, 0
    %v1704 = vsel %vm1702, 1, 0
    %v1705 = vcvt.s32.f32 %v1703
    %v1706 = vcvt.s32.f32 %v1704
    %v1707 = vmul.f32 %v1697, %v1705
    %v1708 = vmul.f32 %v1699, %v1706
    %v1709 = vadd.f32 %v1707, %v1708
    %1710 = vadd.xlane.f32.xlu0 %v1709
    %v1711 = vpop.xlane.xlu0 %1710
    %vm1712 = vcmp.ge.s32.totalorder %v1499, 2048
    %v1713 = vsel %vm1712, %v669, %v1711
    %v1714 = vsub.f32 %v1606, %v1713
    %s1715 = sld [smem:[#allocation6 + $0x3]]
    %v1716 = vstv %s1715
    %v1717 = vmul.f32 %v1716, %v1714
    %v1718 = vadd.f32 %v1406, %v1717
    %s1719 = smul.f32 %s59, 0.625
    %s1720 = sadd.f32 %s48, %s1719
    %vm1721 = vcmp.ge.f32.partialorder %v37, %v1411
    %vm1722 = vcmp.ge.f32.partialorder %v38, %v1411
    %v1723 = vstv %s1720
    %vm1724 = vcmp.lt.f32.partialorder %v37, %v1723
    %vm1725 = vcmp.lt.f32.partialorder %v38, %v1723
    %vm1726 = vmand %vm1721, %vm1724
    %vm1727 = vmand %vm1722, %vm1725
    %v1728 = vsel %vm1726, 1, 0
    %v1729 = vsel %vm1727, 1, 0
    %v1730 = vcvt.s32.f32 %v1728
    %v1731 = vcvt.s32.f32 %v1729
    %v1732 = vadd.f32 %v1730, %v1731
    %1733 = vadd.xlane.f32.xlu0 %v1732
    %v1734 = vpop.xlane.xlu0 %1733
    %1735 = vmatprep.subr.mxu0 %v1731
    %1736 = vmatpush1.msra.mxu0 %v1730
    %1737 = vmatprep.subr.mxu0 0.0
    %1738 = vmatpush1.msra.mxu0 0.0
    %1739 = vmatprep.subr.mxu0 0.0
    %1740 = vmatpush1.msra.mxu0 0.0
    %1741 = vmatprep.subr.mxu0 0.0
    %1742 = vmatpush1.msra.mxu0 0.0
    %1743 = vmatprep.subr.mxu0 0.0
    %1744 = vmatpush1.msra.mxu0 0.0
    %1745 = vmatprep.subr.mxu0 0.0
    %1746 = vmatpush1.msra.mxu0 0.0
    %1747 = vmatprep.subr.mxu0 0.0
    %1748 = vmatpush1.msra.mxu0 0.0
    %1749 = vmatprep.subr.mxu0 0.0
    %1750 = vmatpush1.msra.mxu0 0.0
    %1751 = vmatprep.subr.mxu0 0.0
    %1752 = vmatpush1.msra.mxu0 0.0
    %1753 = vmatprep.subr.mxu0 0.0
    %1754 = vmatpush1.msra.mxu0 0.0
    %1755 = vmatprep.subr.mxu0 0.0
    %1756 = vmatpush1.msra.mxu0 0.0
    %1757 = vmatprep.subr.mxu0 0.0
    %1758 = vmatpush1.msra.mxu0 0.0
    %1759 = vmatprep.subr.mxu0 0.0
    %1760 = vmatpush1.msra.mxu0 0.0
    %1761 = vmatprep.subr.mxu0 0.0
    %1762 = vmatpush1.msra.mxu0 0.0
    %1763 = vmatprep.subr.mxu0 0.0
    %1764 = vmatpush1.msra.mxu0 0.0
    %1765 = vmatprep.subr.mxu0 0.0
    %1766 = vmatpush1.msra.mxu0 0.0
    %1767 = vmatprep.subr.mxu0 0.0
    %1768 = vmatpush1.msra.mxu0 0.0
    %1769 = vmatprep.subr.mxu0 0.0
    %1770 = vmatpush1.msra.mxu0 0.0
    %1771 = vmatprep.subr.mxu0 0.0
    %1772 = vmatpush1.msra.mxu0 0.0
    %1773 = vmatprep.subr.mxu0 0.0
    %1774 = vmatpush1.msra.mxu0 0.0
    %1775 = vmatprep.subr.mxu0 0.0
    %1776 = vmatpush1.msra.mxu0 0.0
    %1777 = vmatprep.subr.mxu0 0.0
    %1778 = vmatpush1.msra.mxu0 0.0
    %1779 = vmatprep.subr.mxu0 0.0
    %1780 = vmatpush1.msra.mxu0 0.0
    %1781 = vmatprep.subr.mxu0 0.0
    %1782 = vmatpush1.msra.mxu0 0.0
    %1783 = vmatprep.subr.mxu0 0.0
    %1784 = vmatpush1.msra.mxu0 0.0
    %1785 = vmatprep.subr.mxu0 0.0
    %1786 = vmatpush1.msra.mxu0 0.0
    %1787 = vmatprep.subr.mxu0 0.0
    %1788 = vmatpush1.msra.mxu0 0.0
    %1789 = vmatprep.subr.mxu0 0.0
    %1790 = vmatpush1.msra.mxu0 0.0
    %1791 = vmatprep.subr.mxu0 0.0
    %1792 = vmatpush1.msra.mxu0 0.0
    %1793 = vmatprep.subr.mxu0 0.0
    %1794 = vmatpush1.msra.mxu0 0.0
    %1795 = vmatprep.subr.mxu0 0.0
    %1796 = vmatpush1.msra.mxu0 0.0
    %1797 = vmatprep.subr.mxu0 0.0
    %1798 = vmatpush1.msra.mxu0 0.0
    %1799 = vmatprep.mubr.f32.mxu0 0.0
    %1800 = vmatmul.mubr.f32.gmra.mrb[0].mxu0 %v483
    %v1801 = vpop.f32.mrb[0].mxu0
    %v1802 = vadd.f32 0.0, %v1801
    %v1803 = vpop.f32.mrb[0].mxu0
    %v1804 = vadd.f32 0.0, %v1803
    %1805 = vdwg.mxu0
    %v1806 = vadd.f32 %v1802, %v1804
    %1807 = vadd.xlane.f32.xlu0 %v1806
    %v1808 = vpop.xlane.xlu0 %1807
    %v1809 = vcvt.f32.s32.to.zero.pseudo %v1808
    %v1810 = vcvt.f32.s32.to.zero.pseudo %v1734
    %v1811 = vsub.s32 %v1809, %v1810
    %vm1812 = vcmp.le.s32.totalorder %v462, %v1809
    %vm1813 = vcmp.lt.s32.totalorder %v1809, %v563
    %vm1814 = vmand %vm1812, %vm1813
    %v1815 = vsel %vm1814, 1, 0
    %v1816 = vcvt.s32.f32 %v1815
    %v1817 = vsel %vm1814, %v462, 0
    %v1818 = vsel %vm375, %v1817, 0
    %v1819 = vand.u32 %v1818, 65535
    %v1820 = vshrl.u32 %v1818, 16
    %v1821 = vcvt.s32.f32 %v1819
    %v1822 = vcvt.s32.f32 %v1820
    %1823 = vadd.xlane.f32.xlu0 %v1821
    %v1824 = vpop.xlane.xlu0 %1823
    %1825 = vadd.xlane.f32.xlu0 %v1822
    %v1826 = vpop.xlane.xlu0 %1825
    %v1827 = vcvt.f32.s32 %v1824
    %v1828 = vcvt.f32.s32 %v1826
    %v1829 = vshll.u32 %v1828, 16
    %v1830 = vadd.s32 %v1829, %v1827
    %v1831 = vsub.s32 %v1809, %v1830
    %v1833 = vsel %vm375, %v1816, 0
    %1835 = vmatprep.subr.mxu0 %v451
    %1836 = vmatpush1.msra.mxu0 %v450
    %1837 = vmatprep.subr.mxu0 0.0
    %1838 = vmatpush1.msra.mxu0 0.0
    %1839 = vmatprep.subr.mxu0 0.0
    %1840 = vmatpush1.msra.mxu0 0.0
    %1841 = vmatprep.subr.mxu0 0.0
    %1842 = vmatpush1.msra.mxu0 0.0
    %1843 = vmatprep.subr.mxu0 0.0
    %1844 = vmatpush1.msra.mxu0 0.0
    %1845 = vmatprep.subr.mxu0 0.0
    %1846 = vmatpush1.msra.mxu0 0.0
    %1847 = vmatprep.subr.mxu0 0.0
    %1848 = vmatpush1.msra.mxu0 0.0
    %1849 = vmatprep.subr.mxu0 0.0
    %1850 = vmatpush1.msra.mxu0 0.0
    %1851 = vmatprep.subr.mxu0 0.0
    %1852 = vmatpush1.msra.mxu0 0.0
    %1853 = vmatprep.subr.mxu0 0.0
    %1854 = vmatpush1.msra.mxu0 0.0
    %1855 = vmatprep.subr.mxu0 0.0
    %1856 = vmatpush1.msra.mxu0 0.0
    %1857 = vmatprep.subr.mxu0 0.0
    %1858 = vmatpush1.msra.mxu0 0.0
    %1859 = vmatprep.subr.mxu0 0.0
    %1860 = vmatpush1.msra.mxu0 0.0
    %1861 = vmatprep.subr.mxu0 0.0
    %1862 = vmatpush1.msra.mxu0 0.0
    %1863 = vmatprep.subr.mxu0 0.0
    %1864 = vmatpush1.msra.mxu0 0.0
    %1865 = vmatprep.subr.mxu0 0.0
    %1866 = vmatpush1.msra.mxu0 0.0
    %1867 = vmatprep.subr.mxu0 0.0
    %1868 = vmatpush1.msra.mxu0 0.0
    %1869 = vmatprep.subr.mxu0 0.0
    %1870 = vmatpush1.msra.mxu0 0.0
    %1871 = vmatprep.subr.mxu0 0.0
    %1872 = vmatpush1.msra.mxu0 0.0
    %1873 = vmatprep.subr.mxu0 0.0
    %1874 = vmatpush1.msra.mxu0 0.0
    %1875 = vmatprep.subr.mxu0 0.0
    %1876 = vmatpush1.msra.mxu0 0.0
    %1877 = vmatprep.subr.mxu0 0.0
    %1878 = vmatpush1.msra.mxu0 0.0
    %1879 = vmatprep.subr.mxu0 0.0
    %1880 = vmatpush1.msra.mxu0 0.0
    %1881 = vmatprep.subr.mxu0 0.0
    %1882 = vmatpush1.msra.mxu0 0.0
    %1883 = vmatprep.subr.mxu0 0.0
    %1884 = vmatpush1.msra.mxu0 0.0
    %1885 = vmatprep.subr.mxu0 0.0
    %1886 = vmatpush1.msra.mxu0 0.0
    %1887 = vmatprep.subr.mxu0 0.0
    %1888 = vmatpush1.msra.mxu0 0.0
    %1889 = vmatprep.subr.mxu0 0.0
    %1890 = vmatpush1.msra.mxu0 0.0
    %1891 = vmatprep.subr.mxu0 0.0
    %1892 = vmatpush1.msra.mxu0 0.0
    %1893 = vmatprep.subr.mxu0 0.0
    %1894 = vmatpush1.msra.mxu0 0.0
    %1895 = vmatprep.subr.mxu0 0.0
    %1896 = vmatpush1.msra.mxu0 0.0
    %1897 = vmatprep.subr.mxu0 0.0
    %1898 = vmatpush1.msra.mxu0 0.0
    %1899 = vmatprep.mubr.f32.mxu0 0.0
    %1900 = vmatmul.mubr.f32.gmra.mrb[0].mxu0 %v1833
    %v1901 = vpop.f32.mrb[0].mxu0
    %v1902 = vadd.f32 0.0, %v1901
    %v1903 = vpop.f32.mrb[0].mxu0
    %v1904 = vadd.f32 0.0, %v1903
    %1905 = vdwg.mxu0
    %vm1906 = vcmp.eq.s32.totalorder %v96, %v1831
    %vm1907 = vcmp.eq.s32.totalorder %v97, %v1831
    %v1908 = vsel %vm1906, 1, 0
    %v1909 = vsel %vm1907, 1, 0
    %v1910 = vcvt.s32.f32 %v1908
    %v1911 = vcvt.s32.f32 %v1909
    %v1912 = vmul.f32 %v1902, %v1910
    %v1913 = vmul.f32 %v1904, %v1911
    %v1914 = vadd.f32 %v1912, %v1913
    %1915 = vadd.xlane.f32.xlu0 %v1914
    %v1916 = vpop.xlane.xlu0 %1915
    %vm1917 = vcmp.ge.s32.totalorder %v1809, 2048
    %v1918 = vsel %vm1917, %v669, %v1916
    %vm1919 = vcmp.le.s32.totalorder %v462, %v1811
    %vm1920 = vcmp.lt.s32.totalorder %v1811, %v563
    %vm1921 = vmand %vm1919, %vm1920
    %v1922 = vsel %vm1921, 1, 0
    %v1923 = vcvt.s32.f32 %v1922
    %v1924 = vsel %vm1921, %v462, 0
    %v1925 = vsel %vm375, %v1924, 0
    %v1926 = vand.u32 %v1925, 65535
    %v1927 = vshrl.u32 %v1925, 16
    %v1928 = vcvt.s32.f32 %v1926
    %v1929 = vcvt.s32.f32 %v1927
    %1930 = vadd.xlane.f32.xlu0 %v1928
    %v1931 = vpop.xlane.xlu0 %1930
    %1932 = vadd.xlane.f32.xlu0 %v1929
    %v1933 = vpop.xlane.xlu0 %1932
    %v1934 = vcvt.f32.s32 %v1931
    %v1935 = vcvt.f32.s32 %v1933
    %v1936 = vshll.u32 %v1935, 16
    %v1937 = vadd.s32 %v1936, %v1934
    %v1938 = vsub.s32 %v1811, %v1937
    %v1940 = vsel %vm375, %v1923, 0
    %1942 = vmatprep.subr.mxu0 %v451
    %1943 = vmatpush1.msra.mxu0 %v450
    %1944 = vmatprep.subr.mxu0 0.0
    %1945 = vmatpush1.msra.mxu0 0.0
    %1946 = vmatprep.subr.mxu0 0.0
    %1947 = vmatpush1.msra.mxu0 0.0
    %1948 = vmatprep.subr.mxu0 0.0
    %1949 = vmatpush1.msra.mxu0 0.0
    %1950 = vmatprep.subr.mxu0 0.0
    %1951 = vmatpush1.msra.mxu0 0.0
    %1952 = vmatprep.subr.mxu0 0.0
    %1953 = vmatpush1.msra.mxu0 0.0
    %1954 = vmatprep.subr.mxu0 0.0
    %1955 = vmatpush1.msra.mxu0 0.0
    %1956 = vmatprep.subr.mxu0 0.0
    %1957 = vmatpush1.msra.mxu0 0.0
    %1958 = vmatprep.subr.mxu0 0.0
    %1959 = vmatpush1.msra.mxu0 0.0
    %1960 = vmatprep.subr.mxu0 0.0
    %1961 = vmatpush1.msra.mxu0 0.0
    %1962 = vmatprep.subr.mxu0 0.0
    %1963 = vmatpush1.msra.mxu0 0.0
    %1964 = vmatprep.subr.mxu0 0.0
    %1965 = vmatpush1.msra.mxu0 0.0
    %1966 = vmatprep.subr.mxu0 0.0
    %1967 = vmatpush1.msra.mxu0 0.0
    %1968 = vmatprep.subr.mxu0 0.0
    %1969 = vmatpush1.msra.mxu0 0.0
    %1970 = vmatprep.subr.mxu0 0.0
    %1971 = vmatpush1.msra.mxu0 0.0
    %1972 = vmatprep.subr.mxu0 0.0
    %1973 = vmatpush1.msra.mxu0 0.0
    %1974 = vmatprep.subr.mxu0 0.0
    %1975 = vmatpush1.msra.mxu0 0.0
    %1976 = vmatprep.subr.mxu0 0.0
    %1977 = vmatpush1.msra.mxu0 0.0
    %1978 = vmatprep.subr.mxu0 0.0
    %1979 = vmatpush1.msra.mxu0 0.0
    %1980 = vmatprep.subr.mxu0 0.0
    %1981 = vmatpush1.msra.mxu0 0.0
    %1982 = vmatprep.subr.mxu0 0.0
    %1983 = vmatpush1.msra.mxu0 0.0
    %1984 = vmatprep.subr.mxu0 0.0
    %1985 = vmatpush1.msra.mxu0 0.0
    %1986 = vmatprep.subr.mxu0 0.0
    %1987 = vmatpush1.msra.mxu0 0.0
    %1988 = vmatprep.subr.mxu0 0.0
    %1989 = vmatpush1.msra.mxu0 0.0
    %1990 = vmatprep.subr.mxu0 0.0
    %1991 = vmatpush1.msra.mxu0 0.0
    %1992 = vmatprep.subr.mxu0 0.0
    %1993 = vmatpush1.msra.mxu0 0.0
    %1994 = vmatprep.subr.mxu0 0.0
    %1995 = vmatpush1.msra.mxu0 0.0
    %1996 = vmatprep.subr.mxu0 0.0
    %1997 = vmatpush1.msra.mxu0 0.0
    %1998 = vmatprep.subr.mxu0 0.0
    %1999 = vmatpush1.msra.mxu0 0.0
    %2000 = vmatprep.subr.mxu0 0.0
    %2001 = vmatpush1.msra.mxu0 0.0
    %2002 = vmatprep.subr.mxu0 0.0
    %2003 = vmatpush1.msra.mxu0 0.0
    %2004 = vmatprep.subr.mxu0 0.0
    %2005 = vmatpush1.msra.mxu0 0.0
    %2006 = vmatprep.mubr.f32.mxu0 0.0
    %2007 = vmatmul.mubr.f32.gmra.mrb[0].mxu0 %v1940
    %v2008 = vpop.f32.mrb[0].mxu0
    %v2009 = vadd.f32 0.0, %v2008
    %v2010 = vpop.f32.mrb[0].mxu0
    %v2011 = vadd.f32 0.0, %v2010
    %2012 = vdwg.mxu0
    %vm2013 = vcmp.eq.s32.totalorder %v96, %v1938
    %vm2014 = vcmp.eq.s32.totalorder %v97, %v1938
    %v2015 = vsel %vm2013, 1, 0
    %v2016 = vsel %vm2014, 1, 0
    %v2017 = vcvt.s32.f32 %v2015
    %v2018 = vcvt.s32.f32 %v2016
    %v2019 = vmul.f32 %v2009, %v2017
    %v2020 = vmul.f32 %v2011, %v2018
    %v2021 = vadd.f32 %v2019, %v2020
    %2022 = vadd.xlane.f32.xlu0 %v2021
    %v2023 = vpop.xlane.xlu0 %2022
    %vm2024 = vcmp.ge.s32.totalorder %v1811, 2048
    %v2025 = vsel %vm2024, %v669, %v2023
    %v2026 = vsub.f32 %v1918, %v2025
    %s2027 = sld [smem:[#allocation6 + $0x4]]
    %v2028 = vstv %s2027
    %v2029 = vmul.f32 %v2028, %v2026
    %v2030 = vadd.f32 %v1718, %v2029
    %s2031 = smul.f32 %s59, 0.75
    %s2032 = sadd.f32 %s48, %s2031
    %vm2033 = vcmp.ge.f32.partialorder %v37, %v1723
    %vm2034 = vcmp.ge.f32.partialorder %v38, %v1723
    %v2035 = vstv %s2032
    %vm2036 = vcmp.lt.f32.partialorder %v37, %v2035
    %vm2037 = vcmp.lt.f32.partialorder %v38, %v2035
    %vm2038 = vmand %vm2033, %vm2036
    %vm2039 = vmand %vm2034, %vm2037
    %v2040 = vsel %vm2038, 1, 0
    %v2041 = vsel %vm2039, 1, 0
    %v2042 = vcvt.s32.f32 %v2040
    %v2043 = vcvt.s32.f32 %v2041
    %v2044 = vadd.f32 %v2042, %v2043
    %2045 = vadd.xlane.f32.xlu0 %v2044
    %v2046 = vpop.xlane.xlu0 %2045
    %2047 = vmatprep.subr.mxu0 %v2043
    %2048 = vmatpush1.msra.mxu0 %v2042
    %2049 = vmatprep.subr.mxu0 0.0
    %2050 = vmatpush1.msra.mxu0 0.0
    %2051 = vmatprep.subr.mxu0 0.0
    %2052 = vmatpush1.msra.mxu0 0.0
    %2053 = vmatprep.subr.mxu0 0.0
    %2054 = vmatpush1.msra.mxu0 0.0
    %2055 = vmatprep.subr.mxu0 0.0
    %2056 = vmatpush1.msra.mxu0 0.0
    %2057 = vmatprep.subr.mxu0 0.0
    %2058 = vmatpush1.msra.mxu0 0.0
    %2059 = vmatprep.subr.mxu0 0.0
    %2060 = vmatpush1.msra.mxu0 0.0
    %2061 = vmatprep.subr.mxu0 0.0
    %2062 = vmatpush1.msra.mxu0 0.0
    %2063 = vmatprep.subr.mxu0 0.0
    %2064 = vmatpush1.msra.mxu0 0.0
    %2065 = vmatprep.subr.mxu0 0.0
    %2066 = vmatpush1.msra.mxu0 0.0
    %2067 = vmatprep.subr.mxu0 0.0
    %2068 = vmatpush1.msra.mxu0 0.0
    %2069 = vmatprep.subr.mxu0 0.0
    %2070 = vmatpush1.msra.mxu0 0.0
    %2071 = vmatprep.subr.mxu0 0.0
    %2072 = vmatpush1.msra.mxu0 0.0
    %2073 = vmatprep.subr.mxu0 0.0
    %2074 = vmatpush1.msra.mxu0 0.0
    %2075 = vmatprep.subr.mxu0 0.0
    %2076 = vmatpush1.msra.mxu0 0.0
    %2077 = vmatprep.subr.mxu0 0.0
    %2078 = vmatpush1.msra.mxu0 0.0
    %2079 = vmatprep.subr.mxu0 0.0
    %2080 = vmatpush1.msra.mxu0 0.0
    %2081 = vmatprep.subr.mxu0 0.0
    %2082 = vmatpush1.msra.mxu0 0.0
    %2083 = vmatprep.subr.mxu0 0.0
    %2084 = vmatpush1.msra.mxu0 0.0
    %2085 = vmatprep.subr.mxu0 0.0
    %2086 = vmatpush1.msra.mxu0 0.0
    %2087 = vmatprep.subr.mxu0 0.0
    %2088 = vmatpush1.msra.mxu0 0.0
    %2089 = vmatprep.subr.mxu0 0.0
    %2090 = vmatpush1.msra.mxu0 0.0
    %2091 = vmatprep.subr.mxu0 0.0
    %2092 = vmatpush1.msra.mxu0 0.0
    %2093 = vmatprep.subr.mxu0 0.0
    %2094 = vmatpush1.msra.mxu0 0.0
    %2095 = vmatprep.subr.mxu0 0.0
    %2096 = vmatpush1.msra.mxu0 0.0
    %2097 = vmatprep.subr.mxu0 0.0
    %2098 = vmatpush1.msra.mxu0 0.0
    %2099 = vmatprep.subr.mxu0 0.0
    %2100 = vmatpush1.msra.mxu0 0.0
    %2101 = vmatprep.subr.mxu0 0.0
    %2102 = vmatpush1.msra.mxu0 0.0
    %2103 = vmatprep.subr.mxu0 0.0
    %2104 = vmatpush1.msra.mxu0 0.0
    %2105 = vmatprep.subr.mxu0 0.0
    %2106 = vmatpush1.msra.mxu0 0.0
    %2107 = vmatprep.subr.mxu0 0.0
    %2108 = vmatpush1.msra.mxu0 0.0
    %2109 = vmatprep.subr.mxu0 0.0
    %2110 = vmatpush1.msra.mxu0 0.0
    %2111 = vmatprep.mubr.f32.mxu0 0.0
    %2112 = vmatmul.mubr.f32.gmra.mrb[0].mxu0 %v483
    %v2113 = vpop.f32.mrb[0].mxu0
    %v2114 = vadd.f32 0.0, %v2113
    %v2115 = vpop.f32.mrb[0].mxu0
    %v2116 = vadd.f32 0.0, %v2115
    %2117 = vdwg.mxu0
    %v2118 = vadd.f32 %v2114, %v2116
    %2119 = vadd.xlane.f32.xlu0 %v2118
    %v2120 = vpop.xlane.xlu0 %2119
    %v2121 = vcvt.f32.s32.to.zero.pseudo %v2120
    %v2122 = vcvt.f32.s32.to.zero.pseudo %v2046
    %v2123 = vsub.s32 %v2121, %v2122
    %vm2124 = vcmp.le.s32.totalorder %v462, %v2121
    %vm2125 = vcmp.lt.s32.totalorder %v2121, %v563
    %vm2126 = vmand %vm2124, %vm2125
    %v2127 = vsel %vm2126, 1, 0
    %v2128 = vcvt.s32.f32 %v2127
    %v2129 = vsel %vm2126, %v462, 0
    %v2130 = vsel %vm375, %v2129, 0
    %v2131 = vand.u32 %v2130, 65535
    %v2132 = vshrl.u32 %v2130, 16
    %v2133 = vcvt.s32.f32 %v2131
    %v2134 = vcvt.s32.f32 %v2132
    %2135 = vadd.xlane.f32.xlu0 %v2133
    %v2136 = vpop.xlane.xlu0 %2135
    %2137 = vadd.xlane.f32.xlu0 %v2134
    %v2138 = vpop.xlane.xlu0 %2137
    %v2139 = vcvt.f32.s32 %v2136
    %v2140 = vcvt.f32.s32 %v2138
    %v2141 = vshll.u32 %v2140, 16
    %v2142 = vadd.s32 %v2141, %v2139
    %v2143 = vsub.s32 %v2121, %v2142
    %v2145 = vsel %vm375, %v2128, 0
    %2147 = vmatprep.subr.mxu0 %v451
    %2148 = vmatpush1.msra.mxu0 %v450
    %2149 = vmatprep.subr.mxu0 0.0
    %2150 = vmatpush1.msra.mxu0 0.0
    %2151 = vmatprep.subr.mxu0 0.0
    %2152 = vmatpush1.msra.mxu0 0.0
    %2153 = vmatprep.subr.mxu0 0.0
    %2154 = vmatpush1.msra.mxu0 0.0
    %2155 = vmatprep.subr.mxu0 0.0
    %2156 = vmatpush1.msra.mxu0 0.0
    %2157 = vmatprep.subr.mxu0 0.0
    %2158 = vmatpush1.msra.mxu0 0.0
    %2159 = vmatprep.subr.mxu0 0.0
    %2160 = vmatpush1.msra.mxu0 0.0
    %2161 = vmatprep.subr.mxu0 0.0
    %2162 = vmatpush1.msra.mxu0 0.0
    %2163 = vmatprep.subr.mxu0 0.0
    %2164 = vmatpush1.msra.mxu0 0.0
    %2165 = vmatprep.subr.mxu0 0.0
    %2166 = vmatpush1.msra.mxu0 0.0
    %2167 = vmatprep.subr.mxu0 0.0
    %2168 = vmatpush1.msra.mxu0 0.0
    %2169 = vmatprep.subr.mxu0 0.0
    %2170 = vmatpush1.msra.mxu0 0.0
    %2171 = vmatprep.subr.mxu0 0.0
    %2172 = vmatpush1.msra.mxu0 0.0
    %2173 = vmatprep.subr.mxu0 0.0
    %2174 = vmatpush1.msra.mxu0 0.0
    %2175 = vmatprep.subr.mxu0 0.0
    %2176 = vmatpush1.msra.mxu0 0.0
    %2177 = vmatprep.subr.mxu0 0.0
    %2178 = vmatpush1.msra.mxu0 0.0
    %2179 = vmatprep.subr.mxu0 0.0
    %2180 = vmatpush1.msra.mxu0 0.0
    %2181 = vmatprep.subr.mxu0 0.0
    %2182 = vmatpush1.msra.mxu0 0.0
    %2183 = vmatprep.subr.mxu0 0.0
    %2184 = vmatpush1.msra.mxu0 0.0
    %2185 = vmatprep.subr.mxu0 0.0
    %2186 = vmatpush1.msra.mxu0 0.0
    %2187 = vmatprep.subr.mxu0 0.0
    %2188 = vmatpush1.msra.mxu0 0.0
    %2189 = vmatprep.subr.mxu0 0.0
    %2190 = vmatpush1.msra.mxu0 0.0
    %2191 = vmatprep.subr.mxu0 0.0
    %2192 = vmatpush1.msra.mxu0 0.0
    %2193 = vmatprep.subr.mxu0 0.0
    %2194 = vmatpush1.msra.mxu0 0.0
    %2195 = vmatprep.subr.mxu0 0.0
    %2196 = vmatpush1.msra.mxu0 0.0
    %2197 = vmatprep.subr.mxu0 0.0
    %2198 = vmatpush1.msra.mxu0 0.0
    %2199 = vmatprep.subr.mxu0 0.0
    %2200 = vmatpush1.msra.mxu0 0.0
    %2201 = vmatprep.subr.mxu0 0.0
    %2202 = vmatpush1.msra.mxu0 0.0
    %2203 = vmatprep.subr.mxu0 0.0
    %2204 = vmatpush1.msra.mxu0 0.0
    %2205 = vmatprep.subr.mxu0 0.0
    %2206 = vmatpush1.msra.mxu0 0.0
    %2207 = vmatprep.subr.mxu0 0.0
    %2208 = vmatpush1.msra.mxu0 0.0
    %2209 = vmatprep.subr.mxu0 0.0
    %2210 = vmatpush1.msra.mxu0 0.0
    %2211 = vmatprep.mubr.f32.mxu0 0.0
    %2212 = vmatmul.mubr.f32.gmra.mrb[0].mxu0 %v2145
    %v2213 = vpop.f32.mrb[0].mxu0
    %v2214 = vadd.f32 0.0, %v2213
    %v2215 = vpop.f32.mrb[0].mxu0
    %v2216 = vadd.f32 0.0, %v2215
    %2217 = vdwg.mxu0
    %vm2218 = vcmp.eq.s32.totalorder %v96, %v2143
    %vm2219 = vcmp.eq.s32.totalorder %v97, %v2143
    %v2220 = vsel %vm2218, 1, 0
    %v2221 = vsel %vm2219, 1, 0
    %v2222 = vcvt.s32.f32 %v2220
    %v2223 = vcvt.s32.f32 %v2221
    %v2224 = vmul.f32 %v2214, %v2222
    %v2225 = vmul.f32 %v2216, %v2223
    %v2226 = vadd.f32 %v2224, %v2225
    %2227 = vadd.xlane.f32.xlu0 %v2226
    %v2228 = vpop.xlane.xlu0 %2227
    %vm2229 = vcmp.ge.s32.totalorder %v2121, 2048
    %v2230 = vsel %vm2229, %v669, %v2228
    %vm2231 = vcmp.le.s32.totalorder %v462, %v2123
    %vm2232 = vcmp.lt.s32.totalorder %v2123, %v563
    %vm2233 = vmand %vm2231, %vm2232
    %v2234 = vsel %vm2233, 1, 0
    %v2235 = vcvt.s32.f32 %v2234
    %v2236 = vsel %vm2233, %v462, 0
    %v2237 = vsel %vm375, %v2236, 0
    %v2238 = vand.u32 %v2237, 65535
    %v2239 = vshrl.u32 %v2237, 16
    %v2240 = vcvt.s32.f32 %v2238
    %v2241 = vcvt.s32.f32 %v2239
    %2242 = vadd.xlane.f32.xlu0 %v2240
    %v2243 = vpop.xlane.xlu0 %2242
    %2244 = vadd.xlane.f32.xlu0 %v2241
    %v2245 = vpop.xlane.xlu0 %2244
    %v2246 = vcvt.f32.s32 %v2243
    %v2247 = vcvt.f32.s32 %v2245
    %v2248 = vshll.u32 %v2247, 16
    %v2249 = vadd.s32 %v2248, %v2246
    %v2250 = vsub.s32 %v2123, %v2249
    %v2252 = vsel %vm375, %v2235, 0
    %2254 = vmatprep.subr.mxu0 %v451
    %2255 = vmatpush1.msra.mxu0 %v450
    %2256 = vmatprep.subr.mxu0 0.0
    %2257 = vmatpush1.msra.mxu0 0.0
    %2258 = vmatprep.subr.mxu0 0.0
    %2259 = vmatpush1.msra.mxu0 0.0
    %2260 = vmatprep.subr.mxu0 0.0
    %2261 = vmatpush1.msra.mxu0 0.0
    %2262 = vmatprep.subr.mxu0 0.0
    %2263 = vmatpush1.msra.mxu0 0.0
    %2264 = vmatprep.subr.mxu0 0.0
    %2265 = vmatpush1.msra.mxu0 0.0
    %2266 = vmatprep.subr.mxu0 0.0
    %2267 = vmatpush1.msra.mxu0 0.0
    %2268 = vmatprep.subr.mxu0 0.0
    %2269 = vmatpush1.msra.mxu0 0.0
    %2270 = vmatprep.subr.mxu0 0.0
    %2271 = vmatpush1.msra.mxu0 0.0
    %2272 = vmatprep.subr.mxu0 0.0
    %2273 = vmatpush1.msra.mxu0 0.0
    %2274 = vmatprep.subr.mxu0 0.0
    %2275 = vmatpush1.msra.mxu0 0.0
    %2276 = vmatprep.subr.mxu0 0.0
    %2277 = vmatpush1.msra.mxu0 0.0
    %2278 = vmatprep.subr.mxu0 0.0
    %2279 = vmatpush1.msra.mxu0 0.0
    %2280 = vmatprep.subr.mxu0 0.0
    %2281 = vmatpush1.msra.mxu0 0.0
    %2282 = vmatprep.subr.mxu0 0.0
    %2283 = vmatpush1.msra.mxu0 0.0
    %2284 = vmatprep.subr.mxu0 0.0
    %2285 = vmatpush1.msra.mxu0 0.0
    %2286 = vmatprep.subr.mxu0 0.0
    %2287 = vmatpush1.msra.mxu0 0.0
    %2288 = vmatprep.subr.mxu0 0.0
    %2289 = vmatpush1.msra.mxu0 0.0
    %2290 = vmatprep.subr.mxu0 0.0
    %2291 = vmatpush1.msra.mxu0 0.0
    %2292 = vmatprep.subr.mxu0 0.0
    %2293 = vmatpush1.msra.mxu0 0.0
    %2294 = vmatprep.subr.mxu0 0.0
    %2295 = vmatpush1.msra.mxu0 0.0
    %2296 = vmatprep.subr.mxu0 0.0
    %2297 = vmatpush1.msra.mxu0 0.0
    %2298 = vmatprep.subr.mxu0 0.0
    %2299 = vmatpush1.msra.mxu0 0.0
    %2300 = vmatprep.subr.mxu0 0.0
    %2301 = vmatpush1.msra.mxu0 0.0
    %2302 = vmatprep.subr.mxu0 0.0
    %2303 = vmatpush1.msra.mxu0 0.0
    %2304 = vmatprep.subr.mxu0 0.0
    %2305 = vmatpush1.msra.mxu0 0.0
    %2306 = vmatprep.subr.mxu0 0.0
    %2307 = vmatpush1.msra.mxu0 0.0
    %2308 = vmatprep.subr.mxu0 0.0
    %2309 = vmatpush1.msra.mxu0 0.0
    %2310 = vmatprep.subr.mxu0 0.0
    %2311 = vmatpush1.msra.mxu0 0.0
    %2312 = vmatprep.subr.mxu0 0.0
    %2313 = vmatpush1.msra.mxu0 0.0
    %2314 = vmatprep.subr.mxu0 0.0
    %2315 = vmatpush1.msra.mxu0 0.0
    %2316 = vmatprep.subr.mxu0 0.0
    %2317 = vmatpush1.msra.mxu0 0.0
    %2318 = vmatprep.mubr.f32.mxu0 0.0
    %2319 = vmatmul.mubr.f32.gmra.mrb[0].mxu0 %v2252
    %v2320 = vpop.f32.mrb[0].mxu0
    %v2321 = vadd.f32 0.0, %v2320
    %v2322 = vpop.f32.mrb[0].mxu0
    %v2323 = vadd.f32 0.0, %v2322
    %2324 = vdwg.mxu0
    %vm2325 = vcmp.eq.s32.totalorder %v96, %v2250
    %vm2326 = vcmp.eq.s32.totalorder %v97, %v2250
    %v2327 = vsel %vm2325, 1, 0
    %v2328 = vsel %vm2326, 1, 0
    %v2329 = vcvt.s32.f32 %v2327
    %v2330 = vcvt.s32.f32 %v2328
    %v2331 = vmul.f32 %v2321, %v2329
    %v2332 = vmul.f32 %v2323, %v2330
    %v2333 = vadd.f32 %v2331, %v2332
    %2334 = vadd.xlane.f32.xlu0 %v2333
    %v2335 = vpop.xlane.xlu0 %2334
    %vm2336 = vcmp.ge.s32.totalorder %v2123, 2048
    %v2337 = vsel %vm2336, %v669, %v2335
    %v2338 = vsub.f32 %v2230, %v2337
    %s2339 = sld [smem:[#allocation6 + $0x5]]
    %v2340 = vstv %s2339
    %v2341 = vmul.f32 %v2340, %v2338
    %v2342 = vadd.f32 %v2030, %v2341
    %s2343 = smul.f32 %s59, 0.875
    %s2344 = sadd.f32 %s48, %s2343
    %vm2345 = vcmp.ge.f32.partialorder %v37, %v2035
    %vm2346 = vcmp.ge.f32.partialorder %v38, %v2035
    %v2347 = vstv %s2344
    %vm2348 = vcmp.lt.f32.partialorder %v37, %v2347
    %vm2349 = vcmp.lt.f32.partialorder %v38, %v2347
    %vm2350 = vmand %vm2345, %vm2348
    %vm2351 = vmand %vm2346, %vm2349
    %v2352 = vsel %vm2350, 1, 0
    %v2353 = vsel %vm2351, 1, 0
    %v2354 = vcvt.s32.f32 %v2352
    %v2355 = vcvt.s32.f32 %v2353
    %v2356 = vadd.f32 %v2354, %v2355
    %2357 = vadd.xlane.f32.xlu0 %v2356
    %v2358 = vpop.xlane.xlu0 %2357
    %2359 = vmatprep.subr.mxu0 %v2355
    %2360 = vmatpush1.msra.mxu0 %v2354
    %2361 = vmatprep.subr.mxu0 0.0
    %2362 = vmatpush1.msra.mxu0 0.0
    %2363 = vmatprep.subr.mxu0 0.0
    %2364 = vmatpush1.msra.mxu0 0.0
    %2365 = vmatprep.subr.mxu0 0.0
    %2366 = vmatpush1.msra.mxu0 0.0
    %2367 = vmatprep.subr.mxu0 0.0
    %2368 = vmatpush1.msra.mxu0 0.0
    %2369 = vmatprep.subr.mxu0 0.0
    %2370 = vmatpush1.msra.mxu0 0.0
    %2371 = vmatprep.subr.mxu0 0.0
    %2372 = vmatpush1.msra.mxu0 0.0
    %2373 = vmatprep.subr.mxu0 0.0
    %2374 = vmatpush1.msra.mxu0 0.0
    %2375 = vmatprep.subr.mxu0 0.0
    %2376 = vmatpush1.msra.mxu0 0.0
    %2377 = vmatprep.subr.mxu0 0.0
    %2378 = vmatpush1.msra.mxu0 0.0
    %2379 = vmatprep.subr.mxu0 0.0
    %2380 = vmatpush1.msra.mxu0 0.0
    %2381 = vmatprep.subr.mxu0 0.0
    %2382 = vmatpush1.msra.mxu0 0.0
    %2383 = vmatprep.subr.mxu0 0.0
    %2384 = vmatpush1.msra.mxu0 0.0
    %2385 = vmatprep.subr.mxu0 0.0
    %2386 = vmatpush1.msra.mxu0 0.0
    %2387 = vmatprep.subr.mxu0 0.0
    %2388 = vmatpush1.msra.mxu0 0.0
    %2389 = vmatprep.subr.mxu0 0.0
    %2390 = vmatpush1.msra.mxu0 0.0
    %2391 = vmatprep.subr.mxu0 0.0
    %2392 = vmatpush1.msra.mxu0 0.0
    %2393 = vmatprep.subr.mxu0 0.0
    %2394 = vmatpush1.msra.mxu0 0.0
    %2395 = vmatprep.subr.mxu0 0.0
    %2396 = vmatpush1.msra.mxu0 0.0
    %2397 = vmatprep.subr.mxu0 0.0
    %2398 = vmatpush1.msra.mxu0 0.0
    %2399 = vmatprep.subr.mxu0 0.0
    %2400 = vmatpush1.msra.mxu0 0.0
    %2401 = vmatprep.subr.mxu0 0.0
    %2402 = vmatpush1.msra.mxu0 0.0
    %2403 = vmatprep.subr.mxu0 0.0
    %2404 = vmatpush1.msra.mxu0 0.0
    %2405 = vmatprep.subr.mxu0 0.0
    %2406 = vmatpush1.msra.mxu0 0.0
    %2407 = vmatprep.subr.mxu0 0.0
    %2408 = vmatpush1.msra.mxu0 0.0
    %2409 = vmatprep.subr.mxu0 0.0
    %2410 = vmatpush1.msra.mxu0 0.0
    %2411 = vmatprep.subr.mxu0 0.0
    %2412 = vmatpush1.msra.mxu0 0.0
    %2413 = vmatprep.subr.mxu0 0.0
    %2414 = vmatpush1.msra.mxu0 0.0
    %2415 = vmatprep.subr.mxu0 0.0
    %2416 = vmatpush1.msra.mxu0 0.0
    %2417 = vmatprep.subr.mxu0 0.0
    %2418 = vmatpush1.msra.mxu0 0.0
    %2419 = vmatprep.subr.mxu0 0.0
    %2420 = vmatpush1.msra.mxu0 0.0
    %2421 = vmatprep.subr.mxu0 0.0
    %2422 = vmatpush1.msra.mxu0 0.0
    %2423 = vmatprep.mubr.f32.mxu0 0.0
    %2424 = vmatmul.mubr.f32.gmra.mrb[0].mxu0 %v483
    %v2425 = vpop.f32.mrb[0].mxu0
    %v2426 = vadd.f32 0.0, %v2425
    %v2427 = vpop.f32.mrb[0].mxu0
    %v2428 = vadd.f32 0.0, %v2427
    %2429 = vdwg.mxu0
    %v2430 = vadd.f32 %v2426, %v2428
    %2431 = vadd.xlane.f32.xlu0 %v2430
    %v2432 = vpop.xlane.xlu0 %2431
    %v2433 = vcvt.f32.s32.to.zero.pseudo %v2432
    %v2434 = vcvt.f32.s32.to.zero.pseudo %v2358
    %v2435 = vsub.s32 %v2433, %v2434
    %vm2436 = vcmp.le.s32.totalorder %v462, %v2433
    %vm2437 = vcmp.lt.s32.totalorder %v2433, %v563
    %vm2438 = vmand %vm2436, %vm2437
    %v2439 = vsel %vm2438, 1, 0
    %v2440 = vcvt.s32.f32 %v2439
    %v2441 = vsel %vm2438, %v462, 0
    %v2442 = vsel %vm375, %v2441, 0
    %v2443 = vand.u32 %v2442, 65535
    %v2444 = vshrl.u32 %v2442, 16
    %v2445 = vcvt.s32.f32 %v2443
    %v2446 = vcvt.s32.f32 %v2444
    %2447 = vadd.xlane.f32.xlu0 %v2445
    %v2448 = vpop.xlane.xlu0 %2447
    %2449 = vadd.xlane.f32.xlu0 %v2446
    %v2450 = vpop.xlane.xlu0 %2449
    %v2451 = vcvt.f32.s32 %v2448
    %v2452 = vcvt.f32.s32 %v2450
    %v2453 = vshll.u32 %v2452, 16
    %v2454 = vadd.s32 %v2453, %v2451
    %v2455 = vsub.s32 %v2433, %v2454
    %v2457 = vsel %vm375, %v2440, 0
    %2459 = vmatprep.subr.mxu0 %v451
    %2460 = vmatpush1.msra.mxu0 %v450
    %2461 = vmatprep.subr.mxu0 0.0
    %2462 = vmatpush1.msra.mxu0 0.0
    %2463 = vmatprep.subr.mxu0 0.0
    %2464 = vmatpush1.msra.mxu0 0.0
    %2465 = vmatprep.subr.mxu0 0.0
    %2466 = vmatpush1.msra.mxu0 0.0
    %2467 = vmatprep.subr.mxu0 0.0
    %2468 = vmatpush1.msra.mxu0 0.0
    %2469 = vmatprep.subr.mxu0 0.0
    %2470 = vmatpush1.msra.mxu0 0.0
    %2471 = vmatprep.subr.mxu0 0.0
    %2472 = vmatpush1.msra.mxu0 0.0
    %2473 = vmatprep.subr.mxu0 0.0
    %2474 = vmatpush1.msra.mxu0 0.0
    %2475 = vmatprep.subr.mxu0 0.0
    %2476 = vmatpush1.msra.mxu0 0.0
    %2477 = vmatprep.subr.mxu0 0.0
    %2478 = vmatpush1.msra.mxu0 0.0
    %2479 = vmatprep.subr.mxu0 0.0
    %2480 = vmatpush1.msra.mxu0 0.0
    %2481 = vmatprep.subr.mxu0 0.0
    %2482 = vmatpush1.msra.mxu0 0.0
    %2483 = vmatprep.subr.mxu0 0.0
    %2484 = vmatpush1.msra.mxu0 0.0
    %2485 = vmatprep.subr.mxu0 0.0
    %2486 = vmatpush1.msra.mxu0 0.0
    %2487 = vmatprep.subr.mxu0 0.0
    %2488 = vmatpush1.msra.mxu0 0.0
    %2489 = vmatprep.subr.mxu0 0.0
    %2490 = vmatpush1.msra.mxu0 0.0
    %2491 = vmatprep.subr.mxu0 0.0
    %2492 = vmatpush1.msra.mxu0 0.0
    %2493 = vmatprep.subr.mxu0 0.0
    %2494 = vmatpush1.msra.mxu0 0.0
    %2495 = vmatprep.subr.mxu0 0.0
    %2496 = vmatpush1.msra.mxu0 0.0
    %2497 = vmatprep.subr.mxu0 0.0
    %2498 = vmatpush1.msra.mxu0 0.0
    %2499 = vmatprep.subr.mxu0 0.0
    %2500 = vmatpush1.msra.mxu0 0.0
    %2501 = vmatprep.subr.mxu0 0.0
    %2502 = vmatpush1.msra.mxu0 0.0
    %2503 = vmatprep.subr.mxu0 0.0
    %2504 = vmatpush1.msra.mxu0 0.0
    %2505 = vmatprep.subr.mxu0 0.0
    %2506 = vmatpush1.msra.mxu0 0.0
    %2507 = vmatprep.subr.mxu0 0.0
    %2508 = vmatpush1.msra.mxu0 0.0
    %2509 = vmatprep.subr.mxu0 0.0
    %2510 = vmatpush1.msra.mxu0 0.0
    %2511 = vmatprep.subr.mxu0 0.0
    %2512 = vmatpush1.msra.mxu0 0.0
    %2513 = vmatprep.subr.mxu0 0.0
    %2514 = vmatpush1.msra.mxu0 0.0
    %2515 = vmatprep.subr.mxu0 0.0
    %2516 = vmatpush1.msra.mxu0 0.0
    %2517 = vmatprep.subr.mxu0 0.0
    %2518 = vmatpush1.msra.mxu0 0.0
    %2519 = vmatprep.subr.mxu0 0.0
    %2520 = vmatpush1.msra.mxu0 0.0
    %2521 = vmatprep.subr.mxu0 0.0
    %2522 = vmatpush1.msra.mxu0 0.0
    %2523 = vmatprep.mubr.f32.mxu0 0.0
    %2524 = vmatmul.mubr.f32.gmra.mrb[0].mxu0 %v2457
    %v2525 = vpop.f32.mrb[0].mxu0
    %v2526 = vadd.f32 0.0, %v2525
    %v2527 = vpop.f32.mrb[0].mxu0
    %v2528 = vadd.f32 0.0, %v2527
    %2529 = vdwg.mxu0
    %vm2530 = vcmp.eq.s32.totalorder %v96, %v2455
    %vm2531 = vcmp.eq.s32.totalorder %v97, %v2455
    %v2532 = vsel %vm2530, 1, 0
    %v2533 = vsel %vm2531, 1, 0
    %v2534 = vcvt.s32.f32 %v2532
    %v2535 = vcvt.s32.f32 %v2533
    %v2536 = vmul.f32 %v2526, %v2534
    %v2537 = vmul.f32 %v2528, %v2535
    %v2538 = vadd.f32 %v2536, %v2537
    %2539 = vadd.xlane.f32.xlu0 %v2538
    %v2540 = vpop.xlane.xlu0 %2539
    %vm2541 = vcmp.ge.s32.totalorder %v2433, 2048
    %v2542 = vsel %vm2541, %v669, %v2540
    %vm2543 = vcmp.le.s32.totalorder %v462, %v2435
    %vm2544 = vcmp.lt.s32.totalorder %v2435, %v563
    %vm2545 = vmand %vm2543, %vm2544
    %v2546 = vsel %vm2545, 1, 0
    %v2547 = vcvt.s32.f32 %v2546
    %v2548 = vsel %vm2545, %v462, 0
    %v2549 = vsel %vm375, %v2548, 0
    %v2550 = vand.u32 %v2549, 65535
    %v2551 = vshrl.u32 %v2549, 16
    %v2552 = vcvt.s32.f32 %v2550
    %v2553 = vcvt.s32.f32 %v2551
    %2554 = vadd.xlane.f32.xlu0 %v2552
    %v2555 = vpop.xlane.xlu0 %2554
    %2556 = vadd.xlane.f32.xlu0 %v2553
    %v2557 = vpop.xlane.xlu0 %2556
    %v2558 = vcvt.f32.s32 %v2555
    %v2559 = vcvt.f32.s32 %v2557
    %v2560 = vshll.u32 %v2559, 16
    %v2561 = vadd.s32 %v2560, %v2558
    %v2562 = vsub.s32 %v2435, %v2561
    %v2564 = vsel %vm375, %v2547, 0
    %2566 = vmatprep.subr.mxu0 %v451
    %2567 = vmatpush1.msra.mxu0 %v450
    %2568 = vmatprep.subr.mxu0 0.0
    %2569 = vmatpush1.msra.mxu0 0.0
    %2570 = vmatprep.subr.mxu0 0.0
    %2571 = vmatpush1.msra.mxu0 0.0
    %2572 = vmatprep.subr.mxu0 0.0
    %2573 = vmatpush1.msra.mxu0 0.0
    %2574 = vmatprep.subr.mxu0 0.0
    %2575 = vmatpush1.msra.mxu0 0.0
    %2576 = vmatprep.subr.mxu0 0.0
    %2577 = vmatpush1.msra.mxu0 0.0
    %2578 = vmatprep.subr.mxu0 0.0
    %2579 = vmatpush1.msra.mxu0 0.0
    %2580 = vmatprep.subr.mxu0 0.0
    %2581 = vmatpush1.msra.mxu0 0.0
    %2582 = vmatprep.subr.mxu0 0.0
    %2583 = vmatpush1.msra.mxu0 0.0
    %2584 = vmatprep.subr.mxu0 0.0
    %2585 = vmatpush1.msra.mxu0 0.0
    %2586 = vmatprep.subr.mxu0 0.0
    %2587 = vmatpush1.msra.mxu0 0.0
    %2588 = vmatprep.subr.mxu0 0.0
    %2589 = vmatpush1.msra.mxu0 0.0
    %2590 = vmatprep.subr.mxu0 0.0
    %2591 = vmatpush1.msra.mxu0 0.0
    %2592 = vmatprep.subr.mxu0 0.0
    %2593 = vmatpush1.msra.mxu0 0.0
    %2594 = vmatprep.subr.mxu0 0.0
    %2595 = vmatpush1.msra.mxu0 0.0
    %2596 = vmatprep.subr.mxu0 0.0
    %2597 = vmatpush1.msra.mxu0 0.0
    %2598 = vmatprep.subr.mxu0 0.0
    %2599 = vmatpush1.msra.mxu0 0.0
    %2600 = vmatprep.subr.mxu0 0.0
    %2601 = vmatpush1.msra.mxu0 0.0
    %2602 = vmatprep.subr.mxu0 0.0
    %2603 = vmatpush1.msra.mxu0 0.0
    %2604 = vmatprep.subr.mxu0 0.0
    %2605 = vmatpush1.msra.mxu0 0.0
    %2606 = vmatprep.subr.mxu0 0.0
    %2607 = vmatpush1.msra.mxu0 0.0
    %2608 = vmatprep.subr.mxu0 0.0
    %2609 = vmatpush1.msra.mxu0 0.0
    %2610 = vmatprep.subr.mxu0 0.0
    %2611 = vmatpush1.msra.mxu0 0.0
    %2612 = vmatprep.subr.mxu0 0.0
    %2613 = vmatpush1.msra.mxu0 0.0
    %2614 = vmatprep.subr.mxu0 0.0
    %2615 = vmatpush1.msra.mxu0 0.0
    %2616 = vmatprep.subr.mxu0 0.0
    %2617 = vmatpush1.msra.mxu0 0.0
    %2618 = vmatprep.subr.mxu0 0.0
    %2619 = vmatpush1.msra.mxu0 0.0
    %2620 = vmatprep.subr.mxu0 0.0
    %2621 = vmatpush1.msra.mxu0 0.0
    %2622 = vmatprep.subr.mxu0 0.0
    %2623 = vmatpush1.msra.mxu0 0.0
    %2624 = vmatprep.subr.mxu0 0.0
    %2625 = vmatpush1.msra.mxu0 0.0
    %2626 = vmatprep.subr.mxu0 0.0
    %2627 = vmatpush1.msra.mxu0 0.0
    %2628 = vmatprep.subr.mxu0 0.0
    %2629 = vmatpush1.msra.mxu0 0.0
    %2630 = vmatprep.mubr.f32.mxu0 0.0
    %2631 = vmatmul.mubr.f32.gmra.mrb[0].mxu0 %v2564
    %v2632 = vpop.f32.mrb[0].mxu0
    %v2633 = vadd.f32 0.0, %v2632
    %v2634 = vpop.f32.mrb[0].mxu0
    %v2635 = vadd.f32 0.0, %v2634
    %2636 = vdwg.mxu0
    %vm2637 = vcmp.eq.s32.totalorder %v96, %v2562
    %vm2638 = vcmp.eq.s32.totalorder %v97, %v2562
    %v2639 = vsel %vm2637, 1, 0
    %v2640 = vsel %vm2638, 1, 0
    %v2641 = vcvt.s32.f32 %v2639
    %v2642 = vcvt.s32.f32 %v2640
    %v2643 = vmul.f32 %v2633, %v2641
    %v2644 = vmul.f32 %v2635, %v2642
    %v2645 = vadd.f32 %v2643, %v2644
    %2646 = vadd.xlane.f32.xlu0 %v2645
    %v2647 = vpop.xlane.xlu0 %2646
    %vm2648 = vcmp.ge.s32.totalorder %v2435, 2048
    %v2649 = vsel %vm2648, %v669, %v2647
    %v2650 = vsub.f32 %v2542, %v2649
    %s2651 = sld [smem:[#allocation6 + $0x6]]
    %v2652 = vstv %s2651
    %v2653 = vmul.f32 %v2652, %v2650
    %v2654 = vadd.f32 %v2342, %v2653
    %vm2655 = vcmp.ge.f32.partialorder %v37, %v2347
    %vm2656 = vcmp.ge.f32.partialorder %v38, %v2347
    %vm2657 = vcmp.lt.f32.partialorder %v37, inf
    %vm2658 = vcmp.lt.f32.partialorder %v38, inf
    %vm2659 = vmand %vm2655, %vm2657
    %vm2660 = vmand %vm2656, %vm2658
    %v2661 = vsel %vm2659, 1, 0
    %v2662 = vsel %vm2660, 1, 0
    %v2663 = vcvt.s32.f32 %v2661
    %v2664 = vcvt.s32.f32 %v2662
    %v2665 = vadd.f32 %v2663, %v2664
    %2666 = vadd.xlane.f32.xlu0 %v2665
    %v2667 = vpop.xlane.xlu0 %2666
    %2668 = vmatprep.subr.mxu0 %v2664
    %2669 = vmatpush1.msra.mxu0 %v2663
    %2670 = vmatprep.subr.mxu0 0.0
    %2671 = vmatpush1.msra.mxu0 0.0
    %2672 = vmatprep.subr.mxu0 0.0
    %2673 = vmatpush1.msra.mxu0 0.0
    %2674 = vmatprep.subr.mxu0 0.0
    %2675 = vmatpush1.msra.mxu0 0.0
    %2676 = vmatprep.subr.mxu0 0.0
    %2677 = vmatpush1.msra.mxu0 0.0
    %2678 = vmatprep.subr.mxu0 0.0
    %2679 = vmatpush1.msra.mxu0 0.0
    %2680 = vmatprep.subr.mxu0 0.0
    %2681 = vmatpush1.msra.mxu0 0.0
    %2682 = vmatprep.subr.mxu0 0.0
    %2683 = vmatpush1.msra.mxu0 0.0
    %2684 = vmatprep.subr.mxu0 0.0
    %2685 = vmatpush1.msra.mxu0 0.0
    %2686 = vmatprep.subr.mxu0 0.0
    %2687 = vmatpush1.msra.mxu0 0.0
    %2688 = vmatprep.subr.mxu0 0.0
    %2689 = vmatpush1.msra.mxu0 0.0
    %2690 = vmatprep.subr.mxu0 0.0
    %2691 = vmatpush1.msra.mxu0 0.0
    %2692 = vmatprep.subr.mxu0 0.0
    %2693 = vmatpush1.msra.mxu0 0.0
    %2694 = vmatprep.subr.mxu0 0.0
    %2695 = vmatpush1.msra.mxu0 0.0
    %2696 = vmatprep.subr.mxu0 0.0
    %2697 = vmatpush1.msra.mxu0 0.0
    %2698 = vmatprep.subr.mxu0 0.0
    %2699 = vmatpush1.msra.mxu0 0.0
    %2700 = vmatprep.subr.mxu0 0.0
    %2701 = vmatpush1.msra.mxu0 0.0
    %2702 = vmatprep.subr.mxu0 0.0
    %2703 = vmatpush1.msra.mxu0 0.0
    %2704 = vmatprep.subr.mxu0 0.0
    %2705 = vmatpush1.msra.mxu0 0.0
    %2706 = vmatprep.subr.mxu0 0.0
    %2707 = vmatpush1.msra.mxu0 0.0
    %2708 = vmatprep.subr.mxu0 0.0
    %2709 = vmatpush1.msra.mxu0 0.0
    %2710 = vmatprep.subr.mxu0 0.0
    %2711 = vmatpush1.msra.mxu0 0.0
    %2712 = vmatprep.subr.mxu0 0.0
    %2713 = vmatpush1.msra.mxu0 0.0
    %2714 = vmatprep.subr.mxu0 0.0
    %2715 = vmatpush1.msra.mxu0 0.0
    %2716 = vmatprep.subr.mxu0 0.0
    %2717 = vmatpush1.msra.mxu0 0.0
    %2718 = vmatprep.subr.mxu0 0.0
    %2719 = vmatpush1.msra.mxu0 0.0
    %2720 = vmatprep.subr.mxu0 0.0
    %2721 = vmatpush1.msra.mxu0 0.0
    %2722 = vmatprep.subr.mxu0 0.0
    %2723 = vmatpush1.msra.mxu0 0.0
    %2724 = vmatprep.subr.mxu0 0.0
    %2725 = vmatpush1.msra.mxu0 0.0
    %2726 = vmatprep.subr.mxu0 0.0
    %2727 = vmatpush1.msra.mxu0 0.0
    %2728 = vmatprep.subr.mxu0 0.0
    %2729 = vmatpush1.msra.mxu0 0.0
    %2730 = vmatprep.subr.mxu0 0.0
    %2731 = vmatpush1.msra.mxu0 0.0
    %2732 = vmatprep.mubr.f32.mxu0 0.0
    %2733 = vmatmul.mubr.f32.gmra.mrb[0].mxu0 %v483
    %v2734 = vpop.f32.mrb[0].mxu0
    %v2735 = vadd.f32 0.0, %v2734
    %v2736 = vpop.f32.mrb[0].mxu0
    %v2737 = vadd.f32 0.0, %v2736
    %2738 = vdwg.mxu0
    %v2739 = vadd.f32 %v2735, %v2737
    %2740 = vadd.xlane.f32.xlu0 %v2739
    %v2741 = vpop.xlane.xlu0 %2740
    %v2742 = vcvt.f32.s32.to.zero.pseudo %v2741
    %v2743 = vcvt.f32.s32.to.zero.pseudo %v2667
    %v2744 = vsub.s32 %v2742, %v2743
    %vm2745 = vcmp.le.s32.totalorder %v462, %v2742
    %vm2746 = vcmp.lt.s32.totalorder %v2742, %v563
    %vm2747 = vmand %vm2745, %vm2746
    %v2748 = vsel %vm2747, 1, 0
    %v2749 = vcvt.s32.f32 %v2748
    %v2750 = vsel %vm2747, %v462, 0
    %v2751 = vsel %vm375, %v2750, 0
    %v2752 = vand.u32 %v2751, 65535
    %v2753 = vshrl.u32 %v2751, 16
    %v2754 = vcvt.s32.f32 %v2752
    %v2755 = vcvt.s32.f32 %v2753
    %2756 = vadd.xlane.f32.xlu0 %v2754
    %v2757 = vpop.xlane.xlu0 %2756
    %2758 = vadd.xlane.f32.xlu0 %v2755
    %v2759 = vpop.xlane.xlu0 %2758
    %v2760 = vcvt.f32.s32 %v2757
    %v2761 = vcvt.f32.s32 %v2759
    %v2762 = vshll.u32 %v2761, 16
    %v2763 = vadd.s32 %v2762, %v2760
    %v2764 = vsub.s32 %v2742, %v2763
    %v2766 = vsel %vm375, %v2749, 0
    %2768 = vmatprep.subr.mxu0 %v451
    %2769 = vmatpush1.msra.mxu0 %v450
    %2770 = vmatprep.subr.mxu0 0.0
    %2771 = vmatpush1.msra.mxu0 0.0
    %2772 = vmatprep.subr.mxu0 0.0
    %2773 = vmatpush1.msra.mxu0 0.0
    %2774 = vmatprep.subr.mxu0 0.0
    %2775 = vmatpush1.msra.mxu0 0.0
    %2776 = vmatprep.subr.mxu0 0.0
    %2777 = vmatpush1.msra.mxu0 0.0
    %2778 = vmatprep.subr.mxu0 0.0
    %2779 = vmatpush1.msra.mxu0 0.0
    %2780 = vmatprep.subr.mxu0 0.0
    %2781 = vmatpush1.msra.mxu0 0.0
    %2782 = vmatprep.subr.mxu0 0.0
    %2783 = vmatpush1.msra.mxu0 0.0
    %2784 = vmatprep.subr.mxu0 0.0
    %2785 = vmatpush1.msra.mxu0 0.0
    %2786 = vmatprep.subr.mxu0 0.0
    %2787 = vmatpush1.msra.mxu0 0.0
    %2788 = vmatprep.subr.mxu0 0.0
    %2789 = vmatpush1.msra.mxu0 0.0
    %2790 = vmatprep.subr.mxu0 0.0
    %2791 = vmatpush1.msra.mxu0 0.0
    %2792 = vmatprep.subr.mxu0 0.0
    %2793 = vmatpush1.msra.mxu0 0.0
    %2794 = vmatprep.subr.mxu0 0.0
    %2795 = vmatpush1.msra.mxu0 0.0
    %2796 = vmatprep.subr.mxu0 0.0
    %2797 = vmatpush1.msra.mxu0 0.0
    %2798 = vmatprep.subr.mxu0 0.0
    %2799 = vmatpush1.msra.mxu0 0.0
    %2800 = vmatprep.subr.mxu0 0.0
    %2801 = vmatpush1.msra.mxu0 0.0
    %2802 = vmatprep.subr.mxu0 0.0
    %2803 = vmatpush1.msra.mxu0 0.0
    %2804 = vmatprep.subr.mxu0 0.0
    %2805 = vmatpush1.msra.mxu0 0.0
    %2806 = vmatprep.subr.mxu0 0.0
    %2807 = vmatpush1.msra.mxu0 0.0
    %2808 = vmatprep.subr.mxu0 0.0
    %2809 = vmatpush1.msra.mxu0 0.0
    %2810 = vmatprep.subr.mxu0 0.0
    %2811 = vmatpush1.msra.mxu0 0.0
    %2812 = vmatprep.subr.mxu0 0.0
    %2813 = vmatpush1.msra.mxu0 0.0
    %2814 = vmatprep.subr.mxu0 0.0
    %2815 = vmatpush1.msra.mxu0 0.0
    %2816 = vmatprep.subr.mxu0 0.0
    %2817 = vmatpush1.msra.mxu0 0.0
    %2818 = vmatprep.subr.mxu0 0.0
    %2819 = vmatpush1.msra.mxu0 0.0
    %2820 = vmatprep.subr.mxu0 0.0
    %2821 = vmatpush1.msra.mxu0 0.0
    %2822 = vmatprep.subr.mxu0 0.0
    %2823 = vmatpush1.msra.mxu0 0.0
    %2824 = vmatprep.subr.mxu0 0.0
    %2825 = vmatpush1.msra.mxu0 0.0
    %2826 = vmatprep.subr.mxu0 0.0
    %2827 = vmatpush1.msra.mxu0 0.0
    %2828 = vmatprep.subr.mxu0 0.0
    %2829 = vmatpush1.msra.mxu0 0.0
    %2830 = vmatprep.subr.mxu0 0.0
    %2831 = vmatpush1.msra.mxu0 0.0
    %2832 = vmatprep.mubr.f32.mxu0 0.0
    %2833 = vmatmul.mubr.f32.gmra.mrb[0].mxu0 %v2766
    %v2834 = vpop.f32.mrb[0].mxu0
    %v2835 = vadd.f32 0.0, %v2834
    %v2836 = vpop.f32.mrb[0].mxu0
    %v2837 = vadd.f32 0.0, %v2836
    %2838 = vdwg.mxu0
    %vm2839 = vcmp.eq.s32.totalorder %v96, %v2764
    %vm2840 = vcmp.eq.s32.totalorder %v97, %v2764
    %v2841 = vsel %vm2839, 1, 0
    %v2842 = vsel %vm2840, 1, 0
    %v2843 = vcvt.s32.f32 %v2841
    %v2844 = vcvt.s32.f32 %v2842
    %v2845 = vmul.f32 %v2835, %v2843
    %v2846 = vmul.f32 %v2837, %v2844
    %v2847 = vadd.f32 %v2845, %v2846
    %2848 = vadd.xlane.f32.xlu0 %v2847
    %v2849 = vpop.xlane.xlu0 %2848
    %vm2850 = vcmp.ge.s32.totalorder %v2742, 2048
    %v2851 = vsel %vm2850, %v669, %v2849
    %vm2852 = vcmp.le.s32.totalorder %v462, %v2744
    %vm2853 = vcmp.lt.s32.totalorder %v2744, %v563
    %vm2854 = vmand %vm2852, %vm2853
    %v2855 = vsel %vm2854, 1, 0
    %v2856 = vcvt.s32.f32 %v2855
    %v2857 = vsel %vm2854, %v462, 0
    %v2858 = vsel %vm375, %v2857, 0
    %v2859 = vand.u32 %v2858, 65535
    %v2860 = vshrl.u32 %v2858, 16
    %v2861 = vcvt.s32.f32 %v2859
    %v2862 = vcvt.s32.f32 %v2860
    %2863 = vadd.xlane.f32.xlu0 %v2861
    %v2864 = vpop.xlane.xlu0 %2863
    %2865 = vadd.xlane.f32.xlu0 %v2862
    %v2866 = vpop.xlane.xlu0 %2865
    %v2867 = vcvt.f32.s32 %v2864
    %v2868 = vcvt.f32.s32 %v2866
    %v2869 = vshll.u32 %v2868, 16
    %v2870 = vadd.s32 %v2869, %v2867
    %v2871 = vsub.s32 %v2744, %v2870
    %v2873 = vsel %vm375, %v2856, 0
    %2875 = vmatprep.subr.mxu0 %v451
    %2876 = vmatpush1.msra.mxu0 %v450
    %2877 = vmatprep.subr.mxu0 0.0
    %2878 = vmatpush1.msra.mxu0 0.0
    %2879 = vmatprep.subr.mxu0 0.0
    %2880 = vmatpush1.msra.mxu0 0.0
    %2881 = vmatprep.subr.mxu0 0.0
    %2882 = vmatpush1.msra.mxu0 0.0
    %2883 = vmatprep.subr.mxu0 0.0
    %2884 = vmatpush1.msra.mxu0 0.0
    %2885 = vmatprep.subr.mxu0 0.0
    %2886 = vmatpush1.msra.mxu0 0.0
    %2887 = vmatprep.subr.mxu0 0.0
    %2888 = vmatpush1.msra.mxu0 0.0
    %2889 = vmatprep.subr.mxu0 0.0
    %2890 = vmatpush1.msra.mxu0 0.0
    %2891 = vmatprep.subr.mxu0 0.0
    %2892 = vmatpush1.msra.mxu0 0.0
    %2893 = vmatprep.subr.mxu0 0.0
    %2894 = vmatpush1.msra.mxu0 0.0
    %2895 = vmatprep.subr.mxu0 0.0
    %2896 = vmatpush1.msra.mxu0 0.0
    %2897 = vmatprep.subr.mxu0 0.0
    %2898 = vmatpush1.msra.mxu0 0.0
    %2899 = vmatprep.subr.mxu0 0.0
    %2900 = vmatpush1.msra.mxu0 0.0
    %2901 = vmatprep.subr.mxu0 0.0
    %2902 = vmatpush1.msra.mxu0 0.0
    %2903 = vmatprep.subr.mxu0 0.0
    %2904 = vmatpush1.msra.mxu0 0.0
    %2905 = vmatprep.subr.mxu0 0.0
    %2906 = vmatpush1.msra.mxu0 0.0
    %2907 = vmatprep.subr.mxu0 0.0
    %2908 = vmatpush1.msra.mxu0 0.0
    %2909 = vmatprep.subr.mxu0 0.0
    %2910 = vmatpush1.msra.mxu0 0.0
    %2911 = vmatprep.subr.mxu0 0.0
    %2912 = vmatpush1.msra.mxu0 0.0
    %2913 = vmatprep.subr.mxu0 0.0
    %2914 = vmatpush1.msra.mxu0 0.0
    %2915 = vmatprep.subr.mxu0 0.0
    %2916 = vmatpush1.msra.mxu0 0.0
    %2917 = vmatprep.subr.mxu0 0.0
    %2918 = vmatpush1.msra.mxu0 0.0
    %2919 = vmatprep.subr.mxu0 0.0
    %2920 = vmatpush1.msra.mxu0 0.0
    %2921 = vmatprep.subr.mxu0 0.0
    %2922 = vmatpush1.msra.mxu0 0.0
    %2923 = vmatprep.subr.mxu0 0.0
    %2924 = vmatpush1.msra.mxu0 0.0
    %2925 = vmatprep.subr.mxu0 0.0
    %2926 = vmatpush1.msra.mxu0 0.0
    %2927 = vmatprep.subr.mxu0 0.0
    %2928 = vmatpush1.msra.mxu0 0.0
    %2929 = vmatprep.subr.mxu0 0.0
    %2930 = vmatpush1.msra.mxu0 0.0
    %2931 = vmatprep.subr.mxu0 0.0
    %2932 = vmatpush1.msra.mxu0 0.0
    %2933 = vmatprep.subr.mxu0 0.0
    %2934 = vmatpush1.msra.mxu0 0.0
    %2935 = vmatprep.subr.mxu0 0.0
    %2936 = vmatpush1.msra.mxu0 0.0
    %2937 = vmatprep.subr.mxu0 0.0
    %2938 = vmatpush1.msra.mxu0 0.0
    %2939 = vmatprep.mubr.f32.mxu0 0.0
    %2940 = vmatmul.mubr.f32.gmra.mrb[0].mxu0 %v2873
    %v2941 = vpop.f32.mrb[0].mxu0
    %v2942 = vadd.f32 0.0, %v2941
    %v2943 = vpop.f32.mrb[0].mxu0
    %v2944 = vadd.f32 0.0, %v2943
    %2945 = vdwg.mxu0
    %vm2946 = vcmp.eq.s32.totalorder %v96, %v2871
    %vm2947 = vcmp.eq.s32.totalorder %v97, %v2871
    %v2948 = vsel %vm2946, 1, 0
    %v2949 = vsel %vm2947, 1, 0
    %v2950 = vcvt.s32.f32 %v2948
    %v2951 = vcvt.s32.f32 %v2949
    %v2952 = vmul.f32 %v2942, %v2950
    %v2953 = vmul.f32 %v2944, %v2951
    %v2954 = vadd.f32 %v2952, %v2953
    %2955 = vadd.xlane.f32.xlu0 %v2954
    %v2956 = vpop.xlane.xlu0 %2955
    %vm2957 = vcmp.ge.s32.totalorder %v2744, 2048
    %v2958 = vsel %vm2957, %v669, %v2956
    %v2959 = vsub.f32 %v2851, %v2958
    %s2960 = sld [smem:[#allocation6 + $0x7]]
    %v2961 = vstv %s2960
    %v2962 = vmul.f32 %v2961, %v2959
    %v2963 = vadd.f32 %v2654, %v2962
    %v2964 = vmul.f32 %v2963, %v369
    %v2965 = vsel %vm375, %v2964, 0.0
    %v2966 = vrot.slane %v2965, 4
    %v2967 = vadd.f32 %v2965, %v2966
    %v2968 = vrot.slane %v2967, 2
    %v2969 = vadd.f32 %v2967, %v2968
    %v2970 = vrot.slane %v2969, 1
    %v2971 = vadd.f32 %v2969, %v2970
    %vm2972 = vcmask 57344
    %2973 = vst.msk [vmem:[#allocation7] sm:$0x1] %vm2972, %v2971
    // Predicated region
    $region18: #{tpu_custom_call.1} parent=1 // pred_check
      _
    $region19: #{tpu_custom_call.1} parent=1 // pred_check_branch
      %2975 = sbr.rel (0) target = $region21
    $region20: #{tpu_custom_call.1} parent=1 // pred_region
      %s2977 = ssub.s32 16, 16
      %2978 = vsyncadd [#allocation4], %s2977
      %s2980 = sshll.u32 [#allocation7], 4
      %s2981 = int_to_ptr.vmem [resolvable:$true] %s2980
      %2983 = dma.vmem_to_hbm [thread:$0]  %s2981, 16, %s2, [#allocation4]
    $region21: #{tpu_custom_call.1} parent=1 // pred_fallthru
      _
    // Predicated region
    $region22: #{tpu_custom_call.1} parent=1 // pred_check
      _
    $region23: #{tpu_custom_call.1} parent=1 // pred_check_branch
      %2985 = sbr.rel (0) target = $region25
    $region24: #{tpu_custom_call.1} parent=1 // pred_region
      %2986 = dma.done [#allocation4], 16
    $region25: #{tpu_custom_call.1} parent=1 // pred_fallthru
      _
    %2987 = vsyncpa [#allocation3], 1
    %2988 = vsyncpa [#allocation4], 1
    %2989 = vsyncpa [#allocation5], 1

</llo_original>
